<compile_context>
chip_gen: v5e
topology: v5e:2x2
jax: 0.10.0
libtpu: 0.0.40
codegen_flags: <defaults>
</compile_context>

<pallas_src>
import jax
import jax.numpy as jnp
from jax import lax
from jax.experimental import pallas as pl
from jax.experimental.pallas import tpu as pltpu


def _round_up(x, m):
    return ((x + m - 1) // m) * m


def _vmem_limit_bytes():
    # ~96 MiB on v5e/v6e (128 MiB physical), ~48 MiB fallback (fits v7x's 64 MiB/TC).
    try:
        cap = pltpu.get_tpu_info().vmem_capacity_bytes
        return int(min(cap * 3 // 4, 96 * 1024 * 1024))
    except Exception:
        return 48 * 1024 * 1024


_VMEM_LIMIT = _vmem_limit_bytes()


def _clf_tv(V):
    """Vocab tile for the classifier; init-time padding uses the same value."""
    return 2048 if V > 2048 else _round_up(V, 128)


# -----------------------------------------------------------------------------
# Kernel 1: 2-layer unidirectional GRU over a padded sequence (packed semantics).
#   Batch-tiled grid (parallel). Both layers' input projections hoisted out of
#   the serial time loops (one big bf16 MXU matmul each); only the recurrent
#   whh matmul remains inside each per-layer loop.
# -----------------------------------------------------------------------------
def _gru2_kernel(x_ref, lens_ref, h0_ref,
                 wih0_ref, bih0_ref, whh0_ref, bhh0_ref,
                 wih1_ref, bih1_ref, whh1_ref, bhh1_ref,
                 hid_ref, hn_ref, gi_ref, h0seq_ref):
    T, B, D = x_ref.shape
    H = h0_ref.shape[2]

    lens = lens_ref[...]                                  # (B, 1) int32
    whh0 = whh0_ref[...]; bhh0 = bhh0_ref[...]
    whh1 = whh1_ref[...]; bhh1 = bhh1_ref[...]

    def gru_gates(gi, gh, h):
        r = jax.nn.sigmoid(gi[:, 0:H] + gh[:, 0:H])
        z = jax.nn.sigmoid(gi[:, H:2 * H] + gh[:, H:2 * H])
        n = jnp.tanh(gi[:, 2 * H:3 * H] + r * gh[:, 2 * H:3 * H])
        return (1.0 - z) * n + z * h

    # ---- hoisted layer-0 input projection: one big MXU matmul (bf16 in, f32 acc)
    x2 = x_ref[...].reshape(T * B, D)                     # already bf16
    gi0 = jnp.dot(x2, wih0_ref[...], preferred_element_type=jnp.float32) + bih0_ref[...]
    gi_ref[...] = gi0.reshape(T, B, 3 * H).astype(jnp.bfloat16)

    # ---- layer 0: only the recurrent matmul inside the serial loop
    def body0(t, h):
        mask = t < lens                                   # (B, 1) bool
        gh = jnp.dot(h.astype(jnp.bfloat16), whh0,
                     preferred_element_type=jnp.float32) + bhh0
        h_new = gru_gates(gi_ref[t].astype(jnp.float32), gh, h)
        h = jnp.where(mask, h_new, h)
        h0seq_ref[t] = h.astype(jnp.bfloat16)
        return h

    h_l0 = lax.fori_loop(0, T, body0, h0_ref[0])
    hn_ref[0] = h_l0

    # ---- hoisted layer-1 input projection (reuses gi scratch)
    gi1 = jnp.dot(h0seq_ref[...].reshape(T * B, H), wih1_ref[...],
                  preferred_element_type=jnp.float32) + bih1_ref[...]
    gi_ref[...] = gi1.reshape(T, B, 3 * H).astype(jnp.bfloat16)

    # ---- layer 1: only the recurrent matmul inside the serial loop
    def body1(t, h):
        mask = t < lens
        gh = jnp.dot(h.astype(jnp.bfloat16), whh1,
                     preferred_element_type=jnp.float32) + bhh1
        h_new = gru_gates(gi_ref[t].astype(jnp.float32), gh, h)
        h = jnp.where(mask, h_new, h)
        hid_ref[t] = jnp.where(mask, h, 0.0).astype(hid_ref.dtype)
        return h

    h_l1 = lax.fori_loop(0, T, body1, h0_ref[1])
    hn_ref[1] = h_l1


def gru2(x, lens, h0, p, b_blk):
    """x: (B, T, D) bf16, lens: (B,) int32, h0: (2, B, H) f32.  B % b_blk == 0."""
    B, T, D = x.shape
    H = h0.shape[-1]
    grid = (B // b_blk,)

    x_tm = jnp.transpose(x, (1, 0, 2))                    # time-major (T, B, D), bf16
    lens2 = lens.reshape(B, 1).astype(jnp.int32)

    def full(arr):
        nd = arr.ndim
        return pl.BlockSpec(arr.shape, lambda *_: (0,) * nd)

    hid, hn = pl.pallas_call(
        _gru2_kernel,
        grid=grid,
        out_shape=(jax.ShapeDtypeStruct((T, B, H), jnp.bfloat16),
                   jax.ShapeDtypeStruct((2, B, H), jnp.float32)),
        in_specs=[
            pl.BlockSpec((T, b_blk, D), lambda b: (0, b, 0)),
            pl.BlockSpec((b_blk, 1), lambda b: (b, 0)),
            pl.BlockSpec((2, b_blk, H), lambda b: (0, b, 0)),
            full(p['l0']['wih_t']), full(p['l0']['bih']),
            full(p['l0']['whh_t']), full(p['l0']['bhh']),
            full(p['l1']['wih_t']), full(p['l1']['bih']),
            full(p['l1']['whh_t']), full(p['l1']['bhh']),
        ],
        out_specs=(pl.BlockSpec((T, b_blk, H), lambda b: (0, b, 0)),
                   pl.BlockSpec((2, b_blk, H), lambda b: (0, b, 0))),
        scratch_shapes=[pltpu.VMEM((T, b_blk, 3 * H), jnp.bfloat16),   # gi (both layers)
                        pltpu.VMEM((T, b_blk, H), jnp.bfloat16)],      # layer-0 hidden seq
        compiler_params=pltpu.CompilerParams(
            dimension_semantics=("parallel",),
            vmem_limit_bytes=_VMEM_LIMIT),
    )(x_tm, lens2, h0,
      p['l0']['wih_t'], p['l0']['bih'], p['l0']['whh_t'], p['l0']['bhh'],
      p['l1']['wih_t'], p['l1']['bih'], p['l1']['whh_t'], p['l1']['bhh'])
    return jnp.transpose(hid, (1, 0, 2)), hn


# -----------------------------------------------------------------------------
# Kernel 2: attention  softmax(S Q^T) Q  with residual add, batch-blocked grid.
# -----------------------------------------------------------------------------
def _attn_kernel(s_ref, q_ref, o_ref):
    s = s_ref[...]                                        # (Bb, S, H) bf16
    q = q_ref[...]                                        # (Bb, Q, H) bf16
    # scores[b, s, q] = sum_h S[b,s,h] * Q[b,q,h]   (no explicit transpose)
    scores = lax.dot_general(s, q, (((2,), (2,)), ((0,), (0,))),
                             preferred_element_type=jnp.float32)      # (Bb, S, Q)
    scores = scores - jnp.max(scores, axis=-1, keepdims=True)
    e = jnp.exp(scores)
    p = e * pl.reciprocal(jnp.sum(e, axis=-1, keepdims=True), approx=True)
    attn = lax.dot_general(p.astype(jnp.bfloat16), q,
                           (((2,), (1,)), ((0,), (0,))),
                           preferred_element_type=jnp.float32)        # (Bb, S, H)
    o_ref[...] = (s.astype(jnp.float32) + attn).astype(o_ref.dtype)


def attend(s_word_h, q_word_h, b_blk):
    B, S, H = s_word_h.shape
    Q = q_word_h.shape[1]
    grid = (B // b_blk,)
    return pl.pallas_call(
        _attn_kernel,
        grid=grid,
        out_shape=jax.ShapeDtypeStruct((B, S, H), jnp.bfloat16),
        in_specs=[pl.BlockSpec((b_blk, S, H), lambda b: (b, 0, 0)),
                  pl.BlockSpec((b_blk, Q, H), lambda b: (b, 0, 0))],
        out_specs=pl.BlockSpec((b_blk, S, H), lambda b: (b, 0, 0)),
        compiler_params=pltpu.CompilerParams(
            dimension_semantics=("parallel",),
            vmem_limit_bytes=_VMEM_LIMIT),
    )(s_word_h, q_word_h)


# -----------------------------------------------------------------------------
# Kernel 3: classifier (Linear->ReLU->Linear) fused with mean cross-entropy,
#   tiled over (N tiles, V tiles) with online log-sum-exp (vocab streaming).
# -----------------------------------------------------------------------------
def _make_clf_kernel(n_valid, v_valid):
    def kernel(x_ref, tgt_ref, w1_ref, b1_ref, w2_ref, b2_ref, out_ref,
               h_ref, m_ref, l_ref, t_ref):
        i = pl.program_id(0)
        v = pl.program_id(1)
        nv = pl.num_programs(1)
        TN = x_ref.shape[0]
        TV = w2_ref.shape[1]

        @pl.when(v == 0)
        def _():
            x = x_ref[...].astype(jnp.bfloat16)
            h = jnp.dot(x, w1_ref[...], preferred_element_type=jnp.float32) + b1_ref[...]
            h_ref[...] = jnp.maximum(h, 0.0).astype(jnp.bfloat16)
            m_ref[...] = jnp.full_like(m_ref, -1e30)
            l_ref[...] = jnp.zeros_like(l_ref)
            t_ref[...] = jnp.zeros_like(t_ref)

        logits = jnp.dot(h_ref[...], w2_ref[...],
                         preferred_element_type=jnp.float32) + b2_ref[...]   # (TN, TV)
        col = lax.broadcasted_iota(jnp.int32, logits.shape, 1) + v * TV
        logits = jnp.where(col < v_valid, logits, -1e30)

        m_old = m_ref[...]
        m_new = jnp.maximum(m_old, jnp.max(logits, axis=-1, keepdims=True))
        p = jnp.exp(logits - m_new)
        l_ref[...] = l_ref[...] * jnp.exp(m_old - m_new) + jnp.sum(p, axis=-1, keepdims=True)
        m_ref[...] = m_new
        t_ref[...] += jnp.sum(jnp.where(col == tgt_ref[...], logits, 0.0),
                              axis=-1, keepdims=True)

        @pl.when(v == nv - 1)
        def _():
            row = lax.broadcasted_iota(jnp.int32, (TN, 1), 0) + i * TN
            lse = m_ref[...] + jnp.log(l_ref[...])
            per_row = jnp.where(row < n_valid, lse - t_ref[...], 0.0)
            total = jnp.sum(per_row, axis=0, keepdims=True)                  # (1, 1)
            out_ref[...] = jnp.zeros((1, 128), jnp.float32) + total
    return kernel


def classifier_ce_loss(x, targets, p, num_sparql):
    N, H = x.shape
    V = num_sparql
    TV = _clf_tv(V)
    V_pad = _round_up(V, TV)
    nV = V_pad // TV

    TN = min(_round_up(N, 16), 256)
    N_pad = _round_up(N, TN)
    nN = N_pad // TN

    x_p = jnp.zeros((N_pad, H), jnp.bfloat16).at[:N].set(x.astype(jnp.bfloat16))
    tgt_p = jnp.zeros((N_pad, 1), jnp.int32).at[:N, 0].set(targets.astype(jnp.int32))
    w2 = p['w2_t']
    b2 = p['b2']
    if w2.shape[1] != V_pad:   # fallback; init_params already stores padded weights
        w2 = jnp.zeros((w2.shape[0], V_pad), w2.dtype).at[:, :w2.shape[1]].set(w2)
        b2 = jnp.zeros((1, V_pad), b2.dtype).at[:, :b2.shape[1]].set(b2)

    out = pl.pallas_call(
        _make_clf_kernel(N, V),
        grid=(nN, nV),
        out_shape=jax.ShapeDtypeStruct((1, nN * 128), jnp.float32),
        in_specs=[
            pl.BlockSpec((TN, H), lambda i, v: (i, 0)),
            pl.BlockSpec((TN, 1), lambda i, v: (i, 0)),
            pl.BlockSpec(p['w1_t'].shape, lambda i, v: (0, 0)),
            pl.BlockSpec(p['b1'].shape, lambda i, v: (0, 0)),
            pl.BlockSpec((w2.shape[0], TV), lambda i, v: (0, v)),
            pl.BlockSpec((1, TV), lambda i, v: (0, v)),
        ],
        out_specs=pl.BlockSpec((1, 128), lambda i, v: (0, i)),
        scratch_shapes=[
            pltpu.VMEM((TN, 1024), jnp.bfloat16),   # hidden activations, reused over V tiles
            pltpu.VMEM((TN, 1), jnp.float32),       # running max
            pltpu.VMEM((TN, 1), jnp.float32),       # running sum-exp
            pltpu.VMEM((TN, 1), jnp.float32),       # target logit accumulator
        ],
        compiler_params=pltpu.CompilerParams(
            dimension_semantics=("parallel", "arbitrary"),
            vmem_limit_bytes=_VMEM_LIMIT),
    )(x_p, tgt_p, p['w1_t'], p['b1'], w2, b2)

    partial = out[0, ::128]                          # (nN,) per-N-tile loss sums
    return jnp.sum(partial) / N


# -----------------------------------------------------------------------------
# Parameter init (deterministic, shapes match the PyTorch module); MXU weights bf16.
# The classifier output weight/bias are vocab-padded ONCE here (not per step).
# -----------------------------------------------------------------------------
def init_params(key, num_words, num_sparql, dim_word, dim_hidden):
    H = dim_hidden
    keys = iter(jax.random.split(key, 32))

    def normal(shape, scale):
        return jax.random.normal(next(keys), shape, jnp.float32) * scale

    def gru_layer(din):
        s = 1.0 / (H ** 0.5)                 # ~ PyTorch GRU uniform scale
        return {'wih_t': normal((din, 3 * H), s).astype(jnp.bfloat16),
                'whh_t': normal((H, 3 * H), s).astype(jnp.bfloat16),
                'bih': normal((1, 3 * H), s),
                'bhh': normal((1, 3 * H), s)}

    V_pad = _round_up(num_sparql, _clf_tv(num_sparql))
    w2 = normal((1024, num_sparql), (2.0 / 1024) ** 0.5).astype(jnp.bfloat16)
    w2_pad = jnp.zeros((1024, V_pad), jnp.bfloat16).at[:, :num_sparql].set(w2)
    b2_pad = jnp.zeros((1, V_pad), jnp.float32)

    params = {
        'word_emb': normal((num_words, dim_word), 1.0),
        'sparql_emb': normal((num_sparql, dim_word), 1.0),
        'encoder': {'l0': gru_layer(dim_word), 'l1': gru_layer(H)},
        'decoder': {'l0': gru_layer(dim_word), 'l1': gru_layer(H)},
        'classifier': {
            'w1_t': normal((H, 1024), (2.0 / H) ** 0.5).astype(jnp.bfloat16),
            'b1': jnp.zeros((1, 1024), jnp.float32),
            'w2_t': w2_pad,
            'b2': b2_pad,
        },
        # att_lin exists in __init__ but is never used in forward(); kept for shape fidelity.
        'att_lin': {'w_t': normal((H, H), (2.0 / H) ** 0.5),
                    'b': jnp.zeros((1, H), jnp.float32)},
    }
    return params


# -----------------------------------------------------------------------------
# Forward (training path -> scalar loss), mirrors SPARQLParser.forward/train_phase
# -----------------------------------------------------------------------------
def sparql_parser_loss(params, questions, sparqls, dim_hidden):
    bsz, max_q = questions.shape
    _, max_s = sparqls.shape
    H = dim_hidden
    num_sparql = params['sparql_emb'].shape[0]

    # batch tile: multiple of 16 (bf16 sublane packing), capped at 64 so it fits
    # v7x VMEM; >=2 blocks on large batches lets megacore shard the grid.
    B_blk = min(_round_up(bsz, 16), 64)
    B_pad = _round_up(bsz, B_blk)
    q_pad = jnp.zeros((B_pad, max_q), questions.dtype).at[:bsz].set(questions)
    s_pad = jnp.zeros((B_pad, max_s), sparqls.dtype).at[:bsz].set(sparqls)

    q_lens = max_q - jnp.sum((q_pad == 0).astype(jnp.int32), axis=1)
    # Dropout(0.3) is identity in eval; gather + bf16 cast halves GRU input traffic.
    q_word_emb = params['word_emb'][q_pad].astype(jnp.bfloat16)
    h0 = jnp.zeros((2, B_pad, H), jnp.float32)
    q_word_h, q_hn = gru2(q_word_emb, q_lens, h0, params['encoder'], B_blk)
    # q_embeddings = q_hn[-1]  (unused in the training path)

    s_lens = max_s - jnp.sum((s_pad == 0).astype(jnp.int32), axis=1)
    s_word_emb = params['sparql_emb'][s_pad].astype(jnp.bfloat16)
    s_word_h, _ = gru2(s_word_emb, s_lens, q_hn, params['decoder'], B_blk)

    s_word_h = attend(s_word_h, q_word_h, B_blk)     # s + softmax(s q^T) q

    x = s_word_h[:bsz, :-1, :].reshape(bsz * (max_s - 1), H)
    tgt = sparqls[:, 1:].reshape(bsz * (max_s - 1))
    return classifier_ce_loss(x, tgt, params['classifier'], num_sparql)


if __name__ == "__main__":
    num_words, num_sparql = 50, 40          # vocab sizes (PAD=0, <START>=1, <END>=2)
    dim_word, dim_hidden, max_dec_len = 32, 32, 8
    bsz, max_q, max_s = 2, 8, 8

    key = jax.random.PRNGKey(0)
    k_param, k_q, k_s = jax.random.split(key, 3)
    params = init_params(k_param, num_words, num_sparql, dim_word, dim_hidden)

    # deterministic token inputs with trailing PAD=0
    q_body = jax.random.randint(k_q, (bsz, max_q), 3, num_words, dtype=jnp.int32)
    q_mask = jnp.array([[1, 1, 1, 1, 1, 1, 1, 1],
                        [1, 1, 1, 1, 1, 0, 0, 0]], dtype=jnp.int32)
    questions = q_body * q_mask

    s_body = jax.random.randint(k_s, (bsz, max_s), 3, num_sparql, dtype=jnp.int32)
    s_mask = jnp.array([[1, 1, 1, 1, 1, 1, 0, 0],
                        [1, 1, 1, 1, 1, 1, 1, 1]], dtype=jnp.int32)
    sparqls = s_body * s_mask
    sparqls = sparqls.at[:, 0].set(1)                          # <START>
    sparqls = sparqls.at[0, 5].set(2).at[1, 7].set(2)          # <END>

    loss_fn = jax.jit(sparql_parser_loss, static_argnames=("dim_hidden",))
    loss = loss_fn(params, questions, sparqls, dim_hidden=dim_hidden)
    loss = jax.block_until_ready(loss)
    assert loss.shape == () and jnp.isfinite(loss)
    print("KERNEL_OK")
</pallas_src>

<mosaic_0001>
module attributes {stable_mosaic.version = 11 : i64} {
  func.func @_attn_kernel(%arg0: i32, %arg1: memref<16x8x32xbf16, #tpu.memory_space<vmem>>, %arg2: memref<16x8x32xbf16, #tpu.memory_space<vmem>>, %arg3: memref<16x8x32xbf16, #tpu.memory_space<vmem>>) attributes {dimension_semantics = [#tpu.dimension_semantics<parallel>], iteration_bounds = array<i64: 1>, scalar_prefetch = 0 : i64, scratch_operands = 0 : i64, tpu.core_type = #tpu.core_type<tc>, window_params = [{transform_indices = @transform_0, window_bounds = array<i64: 16, 8, 32>}, {transform_indices = @transform_1, window_bounds = array<i64: 16, 8, 32>}, {transform_indices = @transform_2, window_bounds = array<i64: 16, 8, 32>}]} {
    %c0 = arith.constant 0 : index
    %c0_0 = arith.constant 0 : index
    %c0_1 = arith.constant 0 : index
    %0 = vector.load %arg1[%c0, %c0_0, %c0_1] : memref<16x8x32xbf16, #tpu.memory_space<vmem>>, vector<16x8x32xbf16>
    %c0_2 = arith.constant 0 : index
    %c0_3 = arith.constant 0 : index
    %c0_4 = arith.constant 0 : index
    %1 = vector.load %arg2[%c0_2, %c0_3, %c0_4] : memref<16x8x32xbf16, #tpu.memory_space<vmem>>, vector<16x8x32xbf16>
    %cst = arith.constant dense<0.000000e+00> : vector<16x8x8xf32>
    %2 = tpu.matmul %0, %1, %cst {dimension_numbers = #tpu.dot_dimension_numbers<[2], [2], [1], [1], [0, 0, 0, 1, 1, 1], [0], [0]>} : vector<16x8x32xbf16>, vector<16x8x32xbf16>, vector<16x8x8xf32> -> vector<16x8x8xf32>
    %cst_5 = arith.constant dense<0xFF800000> : vector<16x8xf32>
    %3 = vector.multi_reduction <maximumf>, %2, %cst_5 [2] : vector<16x8x8xf32> to vector<16x8xf32>
    %4 = vector.shape_cast %3 : vector<16x8xf32> to vector<16x8x1xf32>
    %5 = vector.broadcast %4 : vector<16x8x1xf32> to vector<16x8x8xf32>
    %6 = arith.subf %2, %5 : vector<16x8x8xf32>
    %7 = math.exp %6 : vector<16x8x8xf32>
    %cst_6 = arith.constant dense<0.000000e+00> : vector<16x8xf32>
    %8 = vector.multi_reduction <add>, %7, %cst_6 [2] : vector<16x8x8xf32> to vector<16x8xf32>
    %9 = vector.shape_cast %8 : vector<16x8xf32> to vector<16x8x1xf32>
    %10 = tpu.reciprocal %9 {approx = true} : vector<16x8x1xf32> -> vector<16x8x1xf32>
    %11 = vector.broadcast %10 : vector<16x8x1xf32> to vector<16x8x8xf32>
    %12 = arith.mulf %7, %11 : vector<16x8x8xf32>
    %13 = arith.truncf %12 : vector<16x8x8xf32> to vector<16x8x8xbf16>
    %cst_7 = arith.constant dense<0.000000e+00> : vector<16x8x32xf32>
    %14 = tpu.matmul %13, %1, %cst_7 {dimension_numbers = #tpu.dot_dimension_numbers<[2], [1], [1], [2], [0, 0, 0, 1, 1, 2], [0], [0]>} : vector<16x8x8xbf16>, vector<16x8x32xbf16>, vector<16x8x32xf32> -> vector<16x8x32xf32>
    %15 = arith.extf %0 : vector<16x8x32xbf16> to vector<16x8x32xf32>
    %16 = arith.addf %15, %14 : vector<16x8x32xf32>
    %17 = arith.truncf %16 : vector<16x8x32xf32> to vector<16x8x32xbf16>
    %c0_8 = arith.constant 0 : index
    %c0_9 = arith.constant 0 : index
    %c0_10 = arith.constant 0 : index
    %18 = vector.load %arg3[%c0_8, %c0_9, %c0_10] : memref<16x8x32xbf16, #tpu.memory_space<vmem>>, vector<16x8x32xbf16>
    tpu.vector_store %arg3[%c0_8, %c0_9, %c0_10], %17 {strides = array<i32>} : memref<16x8x32xbf16, #tpu.memory_space<vmem>>, vector<16x8x32xbf16>,
    return
  }
  func.func @transform_0(%arg0: i32) -> (i32, i32, i32) {
    %c0_i32 = arith.constant 0 : i32
    %c0_i32_0 = arith.constant 0 : i32
    %c0_i32_1 = arith.constant 0 : i32
    return %arg0, %c0_i32, %c0_i32_0 : i32, i32, i32
  }
  func.func @transform_1(%arg0: i32) -> (i32, i32, i32) {
    %c0_i32 = arith.constant 0 : i32
    %c0_i32_0 = arith.constant 0 : i32
    %c0_i32_1 = arith.constant 0 : i32
    return %arg0, %c0_i32, %c0_i32_0 : i32, i32, i32
  }
  func.func @transform_2(%arg0: i32) -> (i32, i32, i32) {
    %c0_i32 = arith.constant 0 : i32
    %c0_i32_0 = arith.constant 0 : i32
    %c0_i32_1 = arith.constant 0 : i32
    return %arg0, %c0_i32, %c0_i32_0 : i32, i32, i32
  }
}

module attributes {stable_mosaic.version = 11 : i64} {
  func.func @_gru2_kernel(%arg0: i32, %arg1: memref<8x16x32xbf16, #tpu.memory_space<vmem>>, %arg2: memref<16x1xi32, #tpu.memory_space<vmem>>, %arg3: memref<2x16x32xf32, #tpu.memory_space<vmem>>, %arg4: memref<32x96xbf16, #tpu.memory_space<vmem>>, %arg5: memref<1x96xf32, #tpu.memory_space<vmem>>, %arg6: memref<32x96xbf16, #tpu.memory_space<vmem>>, %arg7: memref<1x96xf32, #tpu.memory_space<vmem>>, %arg8: memref<32x96xbf16, #tpu.memory_space<vmem>>, %arg9: memref<1x96xf32, #tpu.memory_space<vmem>>, %arg10: memref<32x96xbf16, #tpu.memory_space<vmem>>, %arg11: memref<1x96xf32, #tpu.memory_space<vmem>>, %arg12: memref<8x16x32xbf16, #tpu.memory_space<vmem>>, %arg13: memref<2x16x32xf32, #tpu.memory_space<vmem>>, %arg14: memref<8x16x96xbf16, #tpu.memory_space<vmem>>, %arg15: memref<8x16x32xbf16, #tpu.memory_space<vmem>>) attributes {dimension_semantics = [#tpu.dimension_semantics<parallel>], iteration_bounds = array<i64: 1>, scalar_prefetch = 0 : i64, scratch_operands = 2 : i64, tpu.core_type = #tpu.core_type<tc>, window_params = [{transform_indices = @transform_0, window_bounds = array<i64: 8, 16, 32>}, {transform_indices = @transform_1, window_bounds = array<i64: 16, 1>}, {transform_indices = @transform_2, window_bounds = array<i64: 2, 16, 32>}, {pipeline_mode = #tpu.pipeline_mode<synchronous>, transform_indices = @transform_3, window_bounds = array<i64: 32, 96>}, {pipeline_mode = #tpu.pipeline_mode<synchronous>, transform_indices = @transform_4, window_bounds = array<i64: 1, 96>}, {pipeline_mode = #tpu.pipeline_mode<synchronous>, transform_indices = @transform_5, window_bounds = array<i64: 32, 96>}, {pipeline_mode = #tpu.pipeline_mode<synchronous>, transform_indices = @transform_6, window_bounds = array<i64: 1, 96>}, {pipeline_mode = #tpu.pipeline_mode<synchronous>, transform_indices = @transform_7, window_bounds = array<i64: 32, 96>}, {pipeline_mode = #tpu.pipeline_mode<synchronous>, transform_indices = @transform_8, window_bounds = array<i64: 1, 96>}, {pipeline_mode = #tpu.pipeline_mode<synchronous>, transform_indices = @transform_9, window_bounds = array<i64: 32, 96>}, {pipeline_mode = #tpu.pipeline_mode<synchronous>, transform_indices = @transform_10, window_bounds = array<i64: 1, 96>}, {transform_indices = @transform_11, window_bounds = array<i64: 8, 16, 32>}, {transform_indices = @transform_12, window_bounds = array<i64: 2, 16, 32>}]} {
    %c0 = arith.constant 0 : index
    %c0_0 = arith.constant 0 : index
    %0 = vector.load %arg2[%c0, %c0_0] : memref<16x1xi32, #tpu.memory_space<vmem>>, vector<16x1xi32>
    %c0_1 = arith.constant 0 : index
    %c0_2 = arith.constant 0 : index
    %1 = vector.load %arg6[%c0_1, %c0_2] : memref<32x96xbf16, #tpu.memory_space<vmem>>, vector<32x96xbf16>
    %c0_3 = arith.constant 0 : index
    %c0_4 = arith.constant 0 : index
    %2 = vector.load %arg7[%c0_3, %c0_4] : memref<1x96xf32, #tpu.memory_space<vmem>>, vector<1x96xf32>
    %c0_5 = arith.constant 0 : index
    %c0_6 = arith.constant 0 : index
    %3 = vector.load %arg10[%c0_5, %c0_6] : memref<32x96xbf16, #tpu.memory_space<vmem>>, vector<32x96xbf16>
    %c0_7 = arith.constant 0 : index
    %c0_8 = arith.constant 0 : index
    %4 = vector.load %arg11[%c0_7, %c0_8] : memref<1x96xf32, #tpu.memory_space<vmem>>, vector<1x96xf32>
    %c0_9 = arith.constant 0 : index
    %c0_10 = arith.constant 0 : index
    %c0_11 = arith.constant 0 : index
    %5 = vector.load %arg1[%c0_9, %c0_10, %c0_11] : memref<8x16x32xbf16, #tpu.memory_space<vmem>>, vector<8x16x32xbf16>
    %6 = vector.shape_cast %5 : vector<8x16x32xbf16> to vector<128x32xbf16>
    %c0_12 = arith.constant 0 : index
    %c0_13 = arith.constant 0 : index
    %7 = vector.load %arg4[%c0_12, %c0_13] : memref<32x96xbf16, #tpu.memory_space<vmem>>, vector<32x96xbf16>
    %cst = arith.constant dense<0.000000e+00> : vector<128x96xf32>
    %8 = tpu.matmul %6, %7, %cst {dimension_numbers = #tpu.dot_dimension_numbers<[1], [0], [0], [1], [0, 0, 1, 1], [], []>} : vector<128x32xbf16>, vector<32x96xbf16>, vector<128x96xf32> -> vector<128x96xf32>
    %c0_14 = arith.constant 0 : index
    %c0_15 = arith.constant 0 : index
    %9 = vector.load %arg5[%c0_14, %c0_15] : memref<1x96xf32, #tpu.memory_space<vmem>>, vector<1x96xf32>
    %10 = vector.broadcast %9 : vector<1x96xf32> to vector<128x96xf32>
    %11 = arith.addf %8, %10 : vector<128x96xf32>
    %12 = vector.shape_cast %11 : vector<128x96xf32> to vector<8x16x96xf32>
    %13 = arith.truncf %12 : vector<8x16x96xf32> to vector<8x16x96xbf16>
    %c0_16 = arith.constant 0 : index
    %c0_17 = arith.constant 0 : index
    %c0_18 = arith.constant 0 : index
    %14 = vector.load %arg14[%c0_16, %c0_17, %c0_18] : memref<8x16x96xbf16, #tpu.memory_space<vmem>>, vector<8x16x96xbf16>
    tpu.vector_store %arg14[%c0_16, %c0_17, %c0_18], %13 {strides = array<i32>} : memref<8x16x96xbf16, #tpu.memory_space<vmem>>, vector<8x16x96xbf16>,
    %c0_19 = arith.constant 0 : index
    %c0_20 = arith.constant 0 : index
    %c0_21 = arith.constant 0 : index
    %15 = vector.load %arg3[%c0_19, %c0_20, %c0_21] : memref<2x16x32xf32, #tpu.memory_space<vmem>>, vector<1x16x32xf32>
    %16 = vector.shape_cast %15 : vector<1x16x32xf32> to vector<16x32xf32>
    %c0_i32 = arith.constant 0 : i32
    %c8_i32 = arith.constant 8 : i32
    %17 = arith.addi %c0_i32, %c8_i32 : i32
    %c1_i32 = arith.constant 1 : i32
    %18 = scf.for %arg16 = %c0_i32 to %17 step %c1_i32 iter_args(%arg17 = %16) -> (vector<16x32xf32>)  : i32 {
      %39 = vector.broadcast %arg16 : i32 to vector<16x1xi32>
      %40 = arith.cmpi slt, %39, %0 : vector<16x1xi32>
      %41 = arith.truncf %arg17 : vector<16x32xf32> to vector<16x32xbf16>
      %cst_46 = arith.constant dense<0.000000e+00> : vector<16x96xf32>
      %42 = tpu.matmul %41, %1, %cst_46 {dimension_numbers = #tpu.dot_dimension_numbers<[1], [0], [0], [1], [0, 0, 1, 1], [], []>} : vector<16x32xbf16>, vector<32x96xbf16>, vector<16x96xf32> -> vector<16x96xf32>
      %43 = vector.broadcast %2 : vector<1x96xf32> to vector<16x96xf32>
      %44 = arith.addf %42, %43 : vector<16x96xf32>
      %45 = arith.index_cast %arg16 : i32 to index
      %c0_47 = arith.constant 0 : index
      %c0_48 = arith.constant 0 : index
      %46 = vector.load %arg14[%45, %c0_47, %c0_48] : memref<8x16x96xbf16, #tpu.memory_space<vmem>>, vector<1x16x96xbf16>
      %47 = vector.shape_cast %46 : vector<1x16x96xbf16> to vector<16x96xbf16>
      %48 = arith.extf %47 : vector<16x96xbf16> to vector<16x96xf32>
      %49 = vector.extract_strided_slice %48 {offsets = [0, 0], sizes = [16, 32], strides = [1, 1]} : vector<16x96xf32> to vector<16x32xf32>
      %50 = vector.extract_strided_slice %44 {offsets = [0, 0], sizes = [16, 32], strides = [1, 1]} : vector<16x96xf32> to vector<16x32xf32>
      %51 = arith.addf %49, %50 : vector<16x32xf32>
      %52 = arith.negf %51 : vector<16x32xf32>
      %53 = math.exp %52 : vector<16x32xf32>
      %cst_49 = arith.constant 1.000000e+00 : f32
      %54 = vector.broadcast %cst_49 : f32 to vector<16x32xf32>
      %55 = arith.addf %54, %53 : vector<16x32xf32>
      %56 = arith.divf %54, %55 : vector<16x32xf32>
      %57 = vector.extract_strided_slice %48 {offsets = [0, 32], sizes = [16, 32], strides = [1, 1]} : vector<16x96xf32> to vector<16x32xf32>
      %58 = vector.extract_strided_slice %44 {offsets = [0, 32], sizes = [16, 32], strides = [1, 1]} : vector<16x96xf32> to vector<16x32xf32>
      %59 = arith.addf %57, %58 : vector<16x32xf32>
      %60 = arith.negf %59 : vector<16x32xf32>
      %61 = math.exp %60 : vector<16x32xf32>
      %cst_50 = arith.constant 1.000000e+00 : f32
      %62 = vector.broadcast %cst_50 : f32 to vector<16x32xf32>
      %63 = arith.addf %62, %61 : vector<16x32xf32>
      %64 = arith.divf %62, %63 : vector<16x32xf32>
      %65 = vector.extract_strided_slice %48 {offsets = [0, 64], sizes = [16, 32], strides = [1, 1]} : vector<16x96xf32> to vector<16x32xf32>
      %66 = vector.extract_strided_slice %44 {offsets = [0, 64], sizes = [16, 32], strides = [1, 1]} : vector<16x96xf32> to vector<16x32xf32>
      %67 = arith.mulf %56, %66 : vector<16x32xf32>
      %68 = arith.addf %65, %67 : vector<16x32xf32>
      %69 = math.tanh %68 : vector<16x32xf32>
      %cst_51 = arith.constant 1.000000e+00 : f32
      %70 = vector.broadcast %cst_51 : f32 to vector<16x32xf32>
      %71 = arith.subf %70, %64 : vector<16x32xf32>
      %72 = arith.mulf %71, %69 : vector<16x32xf32>
      %73 = arith.mulf %64, %arg17 : vector<16x32xf32>
      %74 = arith.addf %72, %73 : vector<16x32xf32>
      %75 = vector.shape_cast %40 : vector<16x1xi1> to vector<16x1xi1>
      %76 = vector.broadcast %75 : vector<16x1xi1> to vector<16x32xi1>
      %77 = arith.select %76, %74, %arg17 : vector<16x32xi1>, vector<16x32xf32>
      %78 = arith.truncf %77 : vector<16x32xf32> to vector<16x32xbf16>
      %79 = arith.index_cast %arg16 : i32 to index
      %c0_52 = arith.constant 0 : index
      %c0_53 = arith.constant 0 : index
      %80 = vector.load %arg15[%79, %c0_52, %c0_53] : memref<8x16x32xbf16, #tpu.memory_space<vmem>>, vector<1x16x32xbf16>
      %81 = vector.shape_cast %80 : vector<1x16x32xbf16> to vector<16x32xbf16>
      %82 = vector.shape_cast %78 : vector<16x32xbf16> to vector<1x16x32xbf16>
      tpu.vector_store %arg15[%79, %c0_52, %c0_53], %82 {strides = array<i32>} : memref<8x16x32xbf16, #tpu.memory_space<vmem>>, vector<1x16x32xbf16>,
      scf.yield %77 : vector<16x32xf32>
    }
    %c8_i32_22 = arith.constant 8 : i32
    %c0_23 = arith.constant 0 : index
    %c0_24 = arith.constant 0 : index
    %c0_25 = arith.constant 0 : index
    %19 = vector.load %arg13[%c0_23, %c0_24, %c0_25] : memref<2x16x32xf32, #tpu.memory_space<vmem>>, vector<1x16x32xf32>
    %20 = vector.shape_cast %19 : vector<1x16x32xf32> to vector<16x32xf32>
    %21 = vector.shape_cast %18 : vector<16x32xf32> to vector<1x16x32xf32>
    tpu.vector_store %arg13[%c0_23, %c0_24, %c0_25], %21 {strides = array<i32>} : memref<2x16x32xf32, #tpu.memory_space<vmem>>, vector<1x16x32xf32>,
    %c0_26 = arith.constant 0 : index
    %c0_27 = arith.constant 0 : index
    %c0_28 = arith.constant 0 : index
    %22 = vector.load %arg15[%c0_26, %c0_27, %c0_28] : memref<8x16x32xbf16, #tpu.memory_space<vmem>>, vector<8x16x32xbf16>
    %23 = vector.shape_cast %22 : vector<8x16x32xbf16> to vector<128x32xbf16>
    %c0_29 = arith.constant 0 : index
    %c0_30 = arith.constant 0 : index
    %24 = vector.load %arg8[%c0_29, %c0_30] : memref<32x96xbf16, #tpu.memory_space<vmem>>, vector<32x96xbf16>
    %cst_31 = arith.constant dense<0.000000e+00> : vector<128x96xf32>
    %25 = tpu.matmul %23, %24, %cst_31 {dimension_numbers = #tpu.dot_dimension_numbers<[1], [0], [0], [1], [0, 0, 1, 1], [], []>} : vector<128x32xbf16>, vector<32x96xbf16>, vector<128x96xf32> -> vector<128x96xf32>
    %c0_32 = arith.constant 0 : index
    %c0_33 = arith.constant 0 : index
    %26 = vector.load %arg9[%c0_32, %c0_33] : memref<1x96xf32, #tpu.memory_space<vmem>>, vector<1x96xf32>
    %27 = vector.broadcast %26 : vector<1x96xf32> to vector<128x96xf32>
    %28 = arith.addf %25, %27 : vector<128x96xf32>
    %29 = vector.shape_cast %28 : vector<128x96xf32> to vector<8x16x96xf32>
    %30 = arith.truncf %29 : vector<8x16x96xf32> to vector<8x16x96xbf16>
    %c0_34 = arith.constant 0 : index
    %c0_35 = arith.constant 0 : index
    %c0_36 = arith.constant 0 : index
    %31 = vector.load %arg14[%c0_34, %c0_35, %c0_36] : memref<8x16x96xbf16, #tpu.memory_space<vmem>>, vector<8x16x96xbf16>
    tpu.vector_store %arg14[%c0_34, %c0_35, %c0_36], %30 {strides = array<i32>} : memref<8x16x96xbf16, #tpu.memory_space<vmem>>, vector<8x16x96xbf16>,
    %c1 = arith.constant 1 : index
    %c0_37 = arith.constant 0 : index
    %c0_38 = arith.constant 0 : index
    %32 = vector.load %arg3[%c1, %c0_37, %c0_38] : memref<2x16x32xf32, #tpu.memory_space<vmem>>, vector<1x16x32xf32>
    %33 = vector.shape_cast %32 : vector<1x16x32xf32> to vector<16x32xf32>
    %c0_i32_39 = arith.constant 0 : i32
    %c8_i32_40 = arith.constant 8 : i32
    %34 = arith.addi %c0_i32_39, %c8_i32_40 : i32
    %c1_i32_41 = arith.constant 1 : i32
    %35 = scf.for %arg16 = %c0_i32_39 to %34 step %c1_i32_41 iter_args(%arg17 = %33) -> (vector<16x32xf32>)  : i32 {
      %39 = vector.broadcast %arg16 : i32 to vector<16x1xi32>
      %40 = arith.cmpi slt, %39, %0 : vector<16x1xi32>
      %41 = arith.truncf %arg17 : vector<16x32xf32> to vector<16x32xbf16>
      %cst_46 = arith.constant dense<0.000000e+00> : vector<16x96xf32>
      %42 = tpu.matmul %41, %3, %cst_46 {dimension_numbers = #tpu.dot_dimension_numbers<[1], [0], [0], [1], [0, 0, 1, 1], [], []>} : vector<16x32xbf16>, vector<32x96xbf16>, vector<16x96xf32> -> vector<16x96xf32>
      %43 = vector.broadcast %4 : vector<1x96xf32> to vector<16x96xf32>
      %44 = arith.addf %42, %43 : vector<16x96xf32>
      %45 = arith.index_cast %arg16 : i32 to index
      %c0_47 = arith.constant 0 : index
      %c0_48 = arith.constant 0 : index
      %46 = vector.load %arg14[%45, %c0_47, %c0_48] : memref<8x16x96xbf16, #tpu.memory_space<vmem>>, vector<1x16x96xbf16>
      %47 = vector.shape_cast %46 : vector<1x16x96xbf16> to vector<16x96xbf16>
      %48 = arith.extf %47 : vector<16x96xbf16> to vector<16x96xf32>
      %49 = vector.extract_strided_slice %48 {offsets = [0, 0], sizes = [16, 32], strides = [1, 1]} : vector<16x96xf32> to vector<16x32xf32>
      %50 = vector.extract_strided_slice %44 {offsets = [0, 0], sizes = [16, 32], strides = [1, 1]} : vector<16x96xf32> to vector<16x32xf32>
      %51 = arith.addf %49, %50 : vector<16x32xf32>
      %52 = arith.negf %51 : vector<16x32xf32>
      %53 = math.exp %52 : vector<16x32xf32>
      %cst_49 = arith.constant 1.000000e+00 : f32
      %54 = vector.broadcast %cst_49 : f32 to vector<16x32xf32>
      %55 = arith.addf %54, %53 : vector<16x32xf32>
      %56 = arith.divf %54, %55 : vector<16x32xf32>
      %57 = vector.extract_strided_slice %48 {offsets = [0, 32], sizes = [16, 32], strides = [1, 1]} : vector<16x96xf32> to vector<16x32xf32>
      %58 = vector.extract_strided_slice %44 {offsets = [0, 32], sizes = [16, 32], strides = [1, 1]} : vector<16x96xf32> to vector<16x32xf32>
      %59 = arith.addf %57, %58 : vector<16x32xf32>
      %60 = arith.negf %59 : vector<16x32xf32>
      %61 = math.exp %60 : vector<16x32xf32>
      %cst_50 = arith.constant 1.000000e+00 : f32
      %62 = vector.broadcast %cst_50 : f32 to vector<16x32xf32>
      %63 = arith.addf %62, %61 : vector<16x32xf32>
      %64 = arith.divf %62, %63 : vector<16x32xf32>
      %65 = vector.extract_strided_slice %48 {offsets = [0, 64], sizes = [16, 32], strides = [1, 1]} : vector<16x96xf32> to vector<16x32xf32>
      %66 = vector.extract_strided_slice %44 {offsets = [0, 64], sizes = [16, 32], strides = [1, 1]} : vector<16x96xf32> to vector<16x32xf32>
      %67 = arith.mulf %56, %66 : vector<16x32xf32>
      %68 = arith.addf %65, %67 : vector<16x32xf32>
      %69 = math.tanh %68 : vector<16x32xf32>
      %cst_51 = arith.constant 1.000000e+00 : f32
      %70 = vector.broadcast %cst_51 : f32 to vector<16x32xf32>
      %71 = arith.subf %70, %64 : vector<16x32xf32>
      %72 = arith.mulf %71, %69 : vector<16x32xf32>
      %73 = arith.mulf %64, %arg17 : vector<16x32xf32>
      %74 = arith.addf %72, %73 : vector<16x32xf32>
      %75 = vector.shape_cast %40 : vector<16x1xi1> to vector<16x1xi1>
      %76 = vector.broadcast %75 : vector<16x1xi1> to vector<16x32xi1>
      %77 = arith.select %76, %74, %arg17 : vector<16x32xi1>, vector<16x32xf32>
      %cst_52 = arith.constant 0.000000e+00 : f32
      %78 = vector.shape_cast %40 : vector<16x1xi1> to vector<16x1xi1>
      %79 = vector.broadcast %78 : vector<16x1xi1> to vector<16x32xi1>
      %80 = vector.broadcast %cst_52 : f32 to vector<16x32xf32>
      %81 = arith.select %79, %77, %80 : vector<16x32xi1>, vector<16x32xf32>
      %82 = arith.truncf %81 : vector<16x32xf32> to vector<16x32xbf16>
      %83 = arith.index_cast %arg16 : i32 to index
      %c0_53 = arith.constant 0 : index
      %c0_54 = arith.constant 0 : index
      %84 = vector.load %arg12[%83, %c0_53, %c0_54] : memref<8x16x32xbf16, #tpu.memory_space<vmem>>, vector<1x16x32xbf16>
      %85 = vector.shape_cast %84 : vector<1x16x32xbf16> to vector<16x32xbf16>
      %86 = vector.shape_cast %82 : vector<16x32xbf16> to vector<1x16x32xbf16>
      tpu.vector_store %arg12[%83, %c0_53, %c0_54], %86 {strides = array<i32>} : memref<8x16x32xbf16, #tpu.memory_space<vmem>>, vector<1x16x32xbf16>,
      scf.yield %77 : vector<16x32xf32>
    }
    %c8_i32_42 = arith.constant 8 : i32
    %c1_43 = arith.constant 1 : index
    %c0_44 = arith.constant 0 : index
    %c0_45 = arith.constant 0 : index
    %36 = vector.load %arg13[%c1_43, %c0_44, %c0_45] : memref<2x16x32xf32, #tpu.memory_space<vmem>>, vector<1x16x32xf32>
    %37 = vector.shape_cast %36 : vector<1x16x32xf32> to vector<16x32xf32>
    %38 = vector.shape_cast %35 : vector<16x32xf32> to vector<1x16x32xf32>
    tpu.vector_store %arg13[%c1_43, %c0_44, %c0_45], %38 {strides = array<i32>} : memref<2x16x32xf32, #tpu.memory_space<vmem>>, vector<1x16x32xf32>,
    return
  }
  func.func @transform_0(%arg0: i32) -> (i32, i32, i32) {
    %c0_i32 = arith.constant 0 : i32
    %c0_i32_0 = arith.constant 0 : i32
    %c0_i32_1 = arith.constant 0 : i32
    return %c0_i32, %arg0, %c0_i32_0 : i32, i32, i32
  }
  func.func @transform_1(%arg0: i32) -> (i32, i32) {
    %c0_i32 = arith.constant 0 : i32
    %c0_i32_0 = arith.constant 0 : i32
    return %arg0, %c0_i32 : i32, i32
  }
  func.func @transform_2(%arg0: i32) -> (i32, i32, i32) {
    %c0_i32 = arith.constant 0 : i32
    %c0_i32_0 = arith.constant 0 : i32
    %c0_i32_1 = arith.constant 0 : i32
    return %c0_i32, %arg0, %c0_i32_0 : i32, i32, i32
  }
  func.func @transform_3(%arg0: i32) -> (i32, i32) {
    %c0_i32 = arith.constant 0 : i32
    %c0_i32_0 = arith.constant 0 : i32
    %c0_i32_1 = arith.constant 0 : i32
    return %c0_i32, %c0_i32_0 : i32, i32
  }
  func.func @transform_4(%arg0: i32) -> (i32, i32) {
    %c0_i32 = arith.constant 0 : i32
    %c0_i32_0 = arith.constant 0 : i32
    %c0_i32_1 = arith.constant 0 : i32
    return %c0_i32, %c0_i32_0 : i32, i32
  }
  func.func @transform_5(%arg0: i32) -> (i32, i32) {
    %c0_i32 = arith.constant 0 : i32
    %c0_i32_0 = arith.constant 0 : i32
    %c0_i32_1 = arith.constant 0 : i32
    return %c0_i32, %c0_i32_0 : i32, i32
  }
  func.func @transform_6(%arg0: i32) -> (i32, i32) {
    %c0_i32 = arith.constant 0 : i32
    %c0_i32_0 = arith.constant 0 : i32
    %c0_i32_1 = arith.constant 0 : i32
    return %c0_i32, %c0_i32_0 : i32, i32
  }
  func.func @transform_7(%arg0: i32) -> (i32, i32) {
    %c0_i32 = arith.constant 0 : i32
    %c0_i32_0 = arith.constant 0 : i32
    %c0_i32_1 = arith.constant 0 : i32
    return %c0_i32, %c0_i32_0 : i32, i32
  }
  func.func @transform_8(%arg0: i32) -> (i32, i32) {
    %c0_i32 = arith.constant 0 : i32
    %c0_i32_0 = arith.constant 0 : i32
    %c0_i32_1 = arith.constant 0 : i32
    return %c0_i32, %c0_i32_0 : i32, i32
  }
  func.func @transform_9(%arg0: i32) -> (i32, i32) {
    %c0_i32 = arith.constant 0 : i32
    %c0_i32_0 = arith.constant 0 : i32
    %c0_i32_1 = arith.constant 0 : i32
    return %c0_i32, %c0_i32_0 : i32, i32
  }
  func.func @transform_10(%arg0: i32) -> (i32, i32) {
    %c0_i32 = arith.constant 0 : i32
    %c0_i32_0 = arith.constant 0 : i32
    %c0_i32_1 = arith.constant 0 : i32
    return %c0_i32, %c0_i32_0 : i32, i32
  }
  func.func @transform_11(%arg0: i32) -> (i32, i32, i32) {
    %c0_i32 = arith.constant 0 : i32
    %c0_i32_0 = arith.constant 0 : i32
    %c0_i32_1 = arith.constant 0 : i32
    return %c0_i32, %arg0, %c0_i32_0 : i32, i32, i32
  }
  func.func @transform_12(%arg0: i32) -> (i32, i32, i32) {
    %c0_i32 = arith.constant 0 : i32
    %c0_i32_0 = arith.constant 0 : i32
    %c0_i32_1 = arith.constant 0 : i32
    return %c0_i32, %arg0, %c0_i32_0 : i32, i32, i32
  }
}

module attributes {stable_mosaic.version = 11 : i64} {
  func.func @_gru2_kernel(%arg0: i32, %arg1: memref<8x16x32xbf16, #tpu.memory_space<vmem>>, %arg2: memref<16x1xi32, #tpu.memory_space<vmem>>, %arg3: memref<2x16x32xf32, #tpu.memory_space<vmem>>, %arg4: memref<32x96xbf16, #tpu.memory_space<vmem>>, %arg5: memref<1x96xf32, #tpu.memory_space<vmem>>, %arg6: memref<32x96xbf16, #tpu.memory_space<vmem>>, %arg7: memref<1x96xf32, #tpu.memory_space<vmem>>, %arg8: memref<32x96xbf16, #tpu.memory_space<vmem>>, %arg9: memref<1x96xf32, #tpu.memory_space<vmem>>, %arg10: memref<32x96xbf16, #tpu.memory_space<vmem>>, %arg11: memref<1x96xf32, #tpu.memory_space<vmem>>, %arg12: memref<8x16x32xbf16, #tpu.memory_space<vmem>>, %arg13: memref<2x16x32xf32, #tpu.memory_space<vmem>>, %arg14: memref<8x16x96xbf16, #tpu.memory_space<vmem>>, %arg15: memref<8x16x32xbf16, #tpu.memory_space<vmem>>) attributes {dimension_semantics = [#tpu.dimension_semantics<parallel>], iteration_bounds = array<i64: 1>, scalar_prefetch = 0 : i64, scratch_operands = 2 : i64, tpu.core_type = #tpu.core_type<tc>, window_params = [{transform_indices = @transform_0, window_bounds = array<i64: 8, 16, 32>}, {transform_indices = @transform_1, window_bounds = array<i64: 16, 1>}, {transform_indices = @transform_2, window_bounds = array<i64: 2, 16, 32>}, {pipeline_mode = #tpu.pipeline_mode<synchronous>, transform_indices = @transform_3, window_bounds = array<i64: 32, 96>}, {pipeline_mode = #tpu.pipeline_mode<synchronous>, transform_indices = @transform_4, window_bounds = array<i64: 1, 96>}, {pipeline_mode = #tpu.pipeline_mode<synchronous>, transform_indices = @transform_5, window_bounds = array<i64: 32, 96>}, {pipeline_mode = #tpu.pipeline_mode<synchronous>, transform_indices = @transform_6, window_bounds = array<i64: 1, 96>}, {pipeline_mode = #tpu.pipeline_mode<synchronous>, transform_indices = @transform_7, window_bounds = array<i64: 32, 96>}, {pipeline_mode = #tpu.pipeline_mode<synchronous>, transform_indices = @transform_8, window_bounds = array<i64: 1, 96>}, {pipeline_mode = #tpu.pipeline_mode<synchronous>, transform_indices = @transform_9, window_bounds = array<i64: 32, 96>}, {pipeline_mode = #tpu.pipeline_mode<synchronous>, transform_indices = @transform_10, window_bounds = array<i64: 1, 96>}, {transform_indices = @transform_11, window_bounds = array<i64: 8, 16, 32>}, {transform_indices = @transform_12, window_bounds = array<i64: 2, 16, 32>}]} {
    %c0 = arith.constant 0 : index
    %c0_0 = arith.constant 0 : index
    %0 = vector.load %arg2[%c0, %c0_0] : memref<16x1xi32, #tpu.memory_space<vmem>>, vector<16x1xi32>
    %c0_1 = arith.constant 0 : index
    %c0_2 = arith.constant 0 : index
    %1 = vector.load %arg6[%c0_1, %c0_2] : memref<32x96xbf16, #tpu.memory_space<vmem>>, vector<32x96xbf16>
    %c0_3 = arith.constant 0 : index
    %c0_4 = arith.constant 0 : index
    %2 = vector.load %arg7[%c0_3, %c0_4] : memref<1x96xf32, #tpu.memory_space<vmem>>, vector<1x96xf32>
    %c0_5 = arith.constant 0 : index
    %c0_6 = arith.constant 0 : index
    %3 = vector.load %arg10[%c0_5, %c0_6] : memref<32x96xbf16, #tpu.memory_space<vmem>>, vector<32x96xbf16>
    %c0_7 = arith.constant 0 : index
    %c0_8 = arith.constant 0 : index
    %4 = vector.load %arg11[%c0_7, %c0_8] : memref<1x96xf32, #tpu.memory_space<vmem>>, vector<1x96xf32>
    %c0_9 = arith.constant 0 : index
    %c0_10 = arith.constant 0 : index
    %c0_11 = arith.constant 0 : index
    %5 = vector.load %arg1[%c0_9, %c0_10, %c0_11] : memref<8x16x32xbf16, #tpu.memory_space<vmem>>, vector<8x16x32xbf16>
    %6 = vector.shape_cast %5 : vector<8x16x32xbf16> to vector<128x32xbf16>
    %c0_12 = arith.constant 0 : index
    %c0_13 = arith.constant 0 : index
    %7 = vector.load %arg4[%c0_12, %c0_13] : memref<32x96xbf16, #tpu.memory_space<vmem>>, vector<32x96xbf16>
    %cst = arith.constant dense<0.000000e+00> : vector<128x96xf32>
    %8 = tpu.matmul %6, %7, %cst {dimension_numbers = #tpu.dot_dimension_numbers<[1], [0], [0], [1], [0, 0, 1, 1], [], []>} : vector<128x32xbf16>, vector<32x96xbf16>, vector<128x96xf32> -> vector<128x96xf32>
    %c0_14 = arith.constant 0 : index
    %c0_15 = arith.constant 0 : index
    %9 = vector.load %arg5[%c0_14, %c0_15] : memref<1x96xf32, #tpu.memory_space<vmem>>, vector<1x96xf32>
    %10 = vector.broadcast %9 : vector<1x96xf32> to vector<128x96xf32>
    %11 = arith.addf %8, %10 : vector<128x96xf32>
    %12 = vector.shape_cast %11 : vector<128x96xf32> to vector<8x16x96xf32>
    %13 = arith.truncf %12 : vector<8x16x96xf32> to vector<8x16x96xbf16>
    %c0_16 = arith.constant 0 : index
    %c0_17 = arith.constant 0 : index
    %c0_18 = arith.constant 0 : index
    %14 = vector.load %arg14[%c0_16, %c0_17, %c0_18] : memref<8x16x96xbf16, #tpu.memory_space<vmem>>, vector<8x16x96xbf16>
    tpu.vector_store %arg14[%c0_16, %c0_17, %c0_18], %13 {strides = array<i32>} : memref<8x16x96xbf16, #tpu.memory_space<vmem>>, vector<8x16x96xbf16>,
    %c0_19 = arith.constant 0 : index
    %c0_20 = arith.constant 0 : index
    %c0_21 = arith.constant 0 : index
    %15 = vector.load %arg3[%c0_19, %c0_20, %c0_21] : memref<2x16x32xf32, #tpu.memory_space<vmem>>, vector<1x16x32xf32>
    %16 = vector.shape_cast %15 : vector<1x16x32xf32> to vector<16x32xf32>
    %c0_i32 = arith.constant 0 : i32
    %c8_i32 = arith.constant 8 : i32
    %17 = arith.addi %c0_i32, %c8_i32 : i32
    %c1_i32 = arith.constant 1 : i32
    %18 = scf.for %arg16 = %c0_i32 to %17 step %c1_i32 iter_args(%arg17 = %16) -> (vector<16x32xf32>)  : i32 {
      %39 = vector.broadcast %arg16 : i32 to vector<16x1xi32>
      %40 = arith.cmpi slt, %39, %0 : vector<16x1xi32>
      %41 = arith.truncf %arg17 : vector<16x32xf32> to vector<16x32xbf16>
      %cst_46 = arith.constant dense<0.000000e+00> : vector<16x96xf32>
      %42 = tpu.matmul %41, %1, %cst_46 {dimension_numbers = #tpu.dot_dimension_numbers<[1], [0], [0], [1], [0, 0, 1, 1], [], []>} : vector<16x32xbf16>, vector<32x96xbf16>, vector<16x96xf32> -> vector<16x96xf32>
      %43 = vector.broadcast %2 : vector<1x96xf32> to vector<16x96xf32>
      %44 = arith.addf %42, %43 : vector<16x96xf32>
      %45 = arith.index_cast %arg16 : i32 to index
      %c0_47 = arith.constant 0 : index
      %c0_48 = arith.constant 0 : index
      %46 = vector.load %arg14[%45, %c0_47, %c0_48] : memref<8x16x96xbf16, #tpu.memory_space<vmem>>, vector<1x16x96xbf16>
      %47 = vector.shape_cast %46 : vector<1x16x96xbf16> to vector<16x96xbf16>
      %48 = arith.extf %47 : vector<16x96xbf16> to vector<16x96xf32>
      %49 = vector.extract_strided_slice %48 {offsets = [0, 0], sizes = [16, 32], strides = [1, 1]} : vector<16x96xf32> to vector<16x32xf32>
      %50 = vector.extract_strided_slice %44 {offsets = [0, 0], sizes = [16, 32], strides = [1, 1]} : vector<16x96xf32> to vector<16x32xf32>
      %51 = arith.addf %49, %50 : vector<16x32xf32>
      %52 = arith.negf %51 : vector<16x32xf32>
      %53 = math.exp %52 : vector<16x32xf32>
      %cst_49 = arith.constant 1.000000e+00 : f32
      %54 = vector.broadcast %cst_49 : f32 to vector<16x32xf32>
      %55 = arith.addf %54, %53 : vector<16x32xf32>
      %56 = arith.divf %54, %55 : vector<16x32xf32>
      %57 = vector.extract_strided_slice %48 {offsets = [0, 32], sizes = [16, 32], strides = [1, 1]} : vector<16x96xf32> to vector<16x32xf32>
      %58 = vector.extract_strided_slice %44 {offsets = [0, 32], sizes = [16, 32], strides = [1, 1]} : vector<16x96xf32> to vector<16x32xf32>
      %59 = arith.addf %57, %58 : vector<16x32xf32>
      %60 = arith.negf %59 : vector<16x32xf32>
      %61 = math.exp %60 : vector<16x32xf32>
      %cst_50 = arith.constant 1.000000e+00 : f32
      %62 = vector.broadcast %cst_50 : f32 to vector<16x32xf32>
      %63 = arith.addf %62, %61 : vector<16x32xf32>
      %64 = arith.divf %62, %63 : vector<16x32xf32>
      %65 = vector.extract_strided_slice %48 {offsets = [0, 64], sizes = [16, 32], strides = [1, 1]} : vector<16x96xf32> to vector<16x32xf32>
      %66 = vector.extract_strided_slice %44 {offsets = [0, 64], sizes = [16, 32], strides = [1, 1]} : vector<16x96xf32> to vector<16x32xf32>
      %67 = arith.mulf %56, %66 : vector<16x32xf32>
      %68 = arith.addf %65, %67 : vector<16x32xf32>
      %69 = math.tanh %68 : vector<16x32xf32>
      %cst_51 = arith.constant 1.000000e+00 : f32
      %70 = vector.broadcast %cst_51 : f32 to vector<16x32xf32>
      %71 = arith.subf %70, %64 : vector<16x32xf32>
      %72 = arith.mulf %71, %69 : vector<16x32xf32>
      %73 = arith.mulf %64, %arg17 : vector<16x32xf32>
      %74 = arith.addf %72, %73 : vector<16x32xf32>
      %75 = vector.shape_cast %40 : vector<16x1xi1> to vector<16x1xi1>
      %76 = vector.broadcast %75 : vector<16x1xi1> to vector<16x32xi1>
      %77 = arith.select %76, %74, %arg17 : vector<16x32xi1>, vector<16x32xf32>
      %78 = arith.truncf %77 : vector<16x32xf32> to vector<16x32xbf16>
      %79 = arith.index_cast %arg16 : i32 to index
      %c0_52 = arith.constant 0 : index
      %c0_53 = arith.constant 0 : index
      %80 = vector.load %arg15[%79, %c0_52, %c0_53] : memref<8x16x32xbf16, #tpu.memory_space<vmem>>, vector<1x16x32xbf16>
      %81 = vector.shape_cast %80 : vector<1x16x32xbf16> to vector<16x32xbf16>
      %82 = vector.shape_cast %78 : vector<16x32xbf16> to vector<1x16x32xbf16>
      tpu.vector_store %arg15[%79, %c0_52, %c0_53], %82 {strides = array<i32>} : memref<8x16x32xbf16, #tpu.memory_space<vmem>>, vector<1x16x32xbf16>,
      scf.yield %77 : vector<16x32xf32>
    }
    %c8_i32_22 = arith.constant 8 : i32
    %c0_23 = arith.constant 0 : index
    %c0_24 = arith.constant 0 : index
    %c0_25 = arith.constant 0 : index
    %19 = vector.load %arg13[%c0_23, %c0_24, %c0_25] : memref<2x16x32xf32, #tpu.memory_space<vmem>>, vector<1x16x32xf32>
    %20 = vector.shape_cast %19 : vector<1x16x32xf32> to vector<16x32xf32>
    %21 = vector.shape_cast %18 : vector<16x32xf32> to vector<1x16x32xf32>
    tpu.vector_store %arg13[%c0_23, %c0_24, %c0_25], %21 {strides = array<i32>} : memref<2x16x32xf32, #tpu.memory_space<vmem>>, vector<1x16x32xf32>,
    %c0_26 = arith.constant 0 : index
    %c0_27 = arith.constant 0 : index
    %c0_28 = arith.constant 0 : index
    %22 = vector.load %arg15[%c0_26, %c0_27, %c0_28] : memref<8x16x32xbf16, #tpu.memory_space<vmem>>, vector<8x16x32xbf16>
    %23 = vector.shape_cast %22 : vector<8x16x32xbf16> to vector<128x32xbf16>
    %c0_29 = arith.constant 0 : index
    %c0_30 = arith.constant 0 : index
    %24 = vector.load %arg8[%c0_29, %c0_30] : memref<32x96xbf16, #tpu.memory_space<vmem>>, vector<32x96xbf16>
    %cst_31 = arith.constant dense<0.000000e+00> : vector<128x96xf32>
    %25 = tpu.matmul %23, %24, %cst_31 {dimension_numbers = #tpu.dot_dimension_numbers<[1], [0], [0], [1], [0, 0, 1, 1], [], []>} : vector<128x32xbf16>, vector<32x96xbf16>, vector<128x96xf32> -> vector<128x96xf32>
    %c0_32 = arith.constant 0 : index
    %c0_33 = arith.constant 0 : index
    %26 = vector.load %arg9[%c0_32, %c0_33] : memref<1x96xf32, #tpu.memory_space<vmem>>, vector<1x96xf32>
    %27 = vector.broadcast %26 : vector<1x96xf32> to vector<128x96xf32>
    %28 = arith.addf %25, %27 : vector<128x96xf32>
    %29 = vector.shape_cast %28 : vector<128x96xf32> to vector<8x16x96xf32>
    %30 = arith.truncf %29 : vector<8x16x96xf32> to vector<8x16x96xbf16>
    %c0_34 = arith.constant 0 : index
    %c0_35 = arith.constant 0 : index
    %c0_36 = arith.constant 0 : index
    %31 = vector.load %arg14[%c0_34, %c0_35, %c0_36] : memref<8x16x96xbf16, #tpu.memory_space<vmem>>, vector<8x16x96xbf16>
    tpu.vector_store %arg14[%c0_34, %c0_35, %c0_36], %30 {strides = array<i32>} : memref<8x16x96xbf16, #tpu.memory_space<vmem>>, vector<8x16x96xbf16>,
    %c1 = arith.constant 1 : index
    %c0_37 = arith.constant 0 : index
    %c0_38 = arith.constant 0 : index
    %32 = vector.load %arg3[%c1, %c0_37, %c0_38] : memref<2x16x32xf32, #tpu.memory_space<vmem>>, vector<1x16x32xf32>
    %33 = vector.shape_cast %32 : vector<1x16x32xf32> to vector<16x32xf32>
    %c0_i32_39 = arith.constant 0 : i32
    %c8_i32_40 = arith.constant 8 : i32
    %34 = arith.addi %c0_i32_39, %c8_i32_40 : i32
    %c1_i32_41 = arith.constant 1 : i32
    %35 = scf.for %arg16 = %c0_i32_39 to %34 step %c1_i32_41 iter_args(%arg17 = %33) -> (vector<16x32xf32>)  : i32 {
      %39 = vector.broadcast %arg16 : i32 to vector<16x1xi32>
      %40 = arith.cmpi slt, %39, %0 : vector<16x1xi32>
      %41 = arith.truncf %arg17 : vector<16x32xf32> to vector<16x32xbf16>
      %cst_46 = arith.constant dense<0.000000e+00> : vector<16x96xf32>
      %42 = tpu.matmul %41, %3, %cst_46 {dimension_numbers = #tpu.dot_dimension_numbers<[1], [0], [0], [1], [0, 0, 1, 1], [], []>} : vector<16x32xbf16>, vector<32x96xbf16>, vector<16x96xf32> -> vector<16x96xf32>
      %43 = vector.broadcast %4 : vector<1x96xf32> to vector<16x96xf32>
      %44 = arith.addf %42, %43 : vector<16x96xf32>
      %45 = arith.index_cast %arg16 : i32 to index
      %c0_47 = arith.constant 0 : index
      %c0_48 = arith.constant 0 : index
      %46 = vector.load %arg14[%45, %c0_47, %c0_48] : memref<8x16x96xbf16, #tpu.memory_space<vmem>>, vector<1x16x96xbf16>
      %47 = vector.shape_cast %46 : vector<1x16x96xbf16> to vector<16x96xbf16>
      %48 = arith.extf %47 : vector<16x96xbf16> to vector<16x96xf32>
      %49 = vector.extract_strided_slice %48 {offsets = [0, 0], sizes = [16, 32], strides = [1, 1]} : vector<16x96xf32> to vector<16x32xf32>
      %50 = vector.extract_strided_slice %44 {offsets = [0, 0], sizes = [16, 32], strides = [1, 1]} : vector<16x96xf32> to vector<16x32xf32>
      %51 = arith.addf %49, %50 : vector<16x32xf32>
      %52 = arith.negf %51 : vector<16x32xf32>
      %53 = math.exp %52 : vector<16x32xf32>
      %cst_49 = arith.constant 1.000000e+00 : f32
      %54 = vector.broadcast %cst_49 : f32 to vector<16x32xf32>
      %55 = arith.addf %54, %53 : vector<16x32xf32>
      %56 = arith.divf %54, %55 : vector<16x32xf32>
      %57 = vector.extract_strided_slice %48 {offsets = [0, 32], sizes = [16, 32], strides = [1, 1]} : vector<16x96xf32> to vector<16x32xf32>
      %58 = vector.extract_strided_slice %44 {offsets = [0, 32], sizes = [16, 32], strides = [1, 1]} : vector<16x96xf32> to vector<16x32xf32>
      %59 = arith.addf %57, %58 : vector<16x32xf32>
      %60 = arith.negf %59 : vector<16x32xf32>
      %61 = math.exp %60 : vector<16x32xf32>
      %cst_50 = arith.constant 1.000000e+00 : f32
      %62 = vector.broadcast %cst_50 : f32 to vector<16x32xf32>
      %63 = arith.addf %62, %61 : vector<16x32xf32>
      %64 = arith.divf %62, %63 : vector<16x32xf32>
      %65 = vector.extract_strided_slice %48 {offsets = [0, 64], sizes = [16, 32], strides = [1, 1]} : vector<16x96xf32> to vector<16x32xf32>
      %66 = vector.extract_strided_slice %44 {offsets = [0, 64], sizes = [16, 32], strides = [1, 1]} : vector<16x96xf32> to vector<16x32xf32>
      %67 = arith.mulf %56, %66 : vector<16x32xf32>
      %68 = arith.addf %65, %67 : vector<16x32xf32>
      %69 = math.tanh %68 : vector<16x32xf32>
      %cst_51 = arith.constant 1.000000e+00 : f32
      %70 = vector.broadcast %cst_51 : f32 to vector<16x32xf32>
      %71 = arith.subf %70, %64 : vector<16x32xf32>
      %72 = arith.mulf %71, %69 : vector<16x32xf32>
      %73 = arith.mulf %64, %arg17 : vector<16x32xf32>
      %74 = arith.addf %72, %73 : vector<16x32xf32>
      %75 = vector.shape_cast %40 : vector<16x1xi1> to vector<16x1xi1>
      %76 = vector.broadcast %75 : vector<16x1xi1> to vector<16x32xi1>
      %77 = arith.select %76, %74, %arg17 : vector<16x32xi1>, vector<16x32xf32>
      %cst_52 = arith.constant 0.000000e+00 : f32
      %78 = vector.shape_cast %40 : vector<16x1xi1> to vector<16x1xi1>
      %79 = vector.broadcast %78 : vector<16x1xi1> to vector<16x32xi1>
      %80 = vector.broadcast %cst_52 : f32 to vector<16x32xf32>
      %81 = arith.select %79, %77, %80 : vector<16x32xi1>, vector<16x32xf32>
      %82 = arith.truncf %81 : vector<16x32xf32> to vector<16x32xbf16>
      %83 = arith.index_cast %arg16 : i32 to index
      %c0_53 = arith.constant 0 : index
      %c0_54 = arith.constant 0 : index
      %84 = vector.load %arg12[%83, %c0_53, %c0_54] : memref<8x16x32xbf16, #tpu.memory_space<vmem>>, vector<1x16x32xbf16>
      %85 = vector.shape_cast %84 : vector<1x16x32xbf16> to vector<16x32xbf16>
      %86 = vector.shape_cast %82 : vector<16x32xbf16> to vector<1x16x32xbf16>
      tpu.vector_store %arg12[%83, %c0_53, %c0_54], %86 {strides = array<i32>} : memref<8x16x32xbf16, #tpu.memory_space<vmem>>, vector<1x16x32xbf16>,
      scf.yield %77 : vector<16x32xf32>
    }
    %c8_i32_42 = arith.constant 8 : i32
    %c1_43 = arith.constant 1 : index
    %c0_44 = arith.constant 0 : index
    %c0_45 = arith.constant 0 : index
    %36 = vector.load %arg13[%c1_43, %c0_44, %c0_45] : memref<2x16x32xf32, #tpu.memory_space<vmem>>, vector<1x16x32xf32>
    %37 = vector.shape_cast %36 : vector<1x16x32xf32> to vector<16x32xf32>
    %38 = vector.shape_cast %35 : vector<16x32xf32> to vector<1x16x32xf32>
    tpu.vector_store %arg13[%c1_43, %c0_44, %c0_45], %38 {strides = array<i32>} : memref<2x16x32xf32, #tpu.memory_space<vmem>>, vector<1x16x32xf32>,
    return
  }
  func.func @transform_0(%arg0: i32) -> (i32, i32, i32) {
    %c0_i32 = arith.constant 0 : i32
    %c0_i32_0 = arith.constant 0 : i32
    %c0_i32_1 = arith.constant 0 : i32
    return %c0_i32, %arg0, %c0_i32_0 : i32, i32, i32
  }
  func.func @transform_1(%arg0: i32) -> (i32, i32) {
    %c0_i32 = arith.constant 0 : i32
    %c0_i32_0 = arith.constant 0 : i32
    return %arg0, %c0_i32 : i32, i32
  }
  func.func @transform_2(%arg0: i32) -> (i32, i32, i32) {
    %c0_i32 = arith.constant 0 : i32
    %c0_i32_0 = arith.constant 0 : i32
    %c0_i32_1 = arith.constant 0 : i32
    return %c0_i32, %arg0, %c0_i32_0 : i32, i32, i32
  }
  func.func @transform_3(%arg0: i32) -> (i32, i32) {
    %c0_i32 = arith.constant 0 : i32
    %c0_i32_0 = arith.constant 0 : i32
    %c0_i32_1 = arith.constant 0 : i32
    return %c0_i32, %c0_i32_0 : i32, i32
  }
  func.func @transform_4(%arg0: i32) -> (i32, i32) {
    %c0_i32 = arith.constant 0 : i32
    %c0_i32_0 = arith.constant 0 : i32
    %c0_i32_1 = arith.constant 0 : i32
    return %c0_i32, %c0_i32_0 : i32, i32
  }
  func.func @transform_5(%arg0: i32) -> (i32, i32) {
    %c0_i32 = arith.constant 0 : i32
    %c0_i32_0 = arith.constant 0 : i32
    %c0_i32_1 = arith.constant 0 : i32
    return %c0_i32, %c0_i32_0 : i32, i32
  }
  func.func @transform_6(%arg0: i32) -> (i32, i32) {
    %c0_i32 = arith.constant 0 : i32
    %c0_i32_0 = arith.constant 0 : i32
    %c0_i32_1 = arith.constant 0 : i32
    return %c0_i32, %c0_i32_0 : i32, i32
  }
  func.func @transform_7(%arg0: i32) -> (i32, i32) {
    %c0_i32 = arith.constant 0 : i32
    %c0_i32_0 = arith.constant 0 : i32
    %c0_i32_1 = arith.constant 0 : i32
    return %c0_i32, %c0_i32_0 : i32, i32
  }
  func.func @transform_8(%arg0: i32) -> (i32, i32) {
    %c0_i32 = arith.constant 0 : i32
    %c0_i32_0 = arith.constant 0 : i32
    %c0_i32_1 = arith.constant 0 : i32
    return %c0_i32, %c0_i32_0 : i32, i32
  }
  func.func @transform_9(%arg0: i32) -> (i32, i32) {
    %c0_i32 = arith.constant 0 : i32
    %c0_i32_0 = arith.constant 0 : i32
    %c0_i32_1 = arith.constant 0 : i32
    return %c0_i32, %c0_i32_0 : i32, i32
  }
  func.func @transform_10(%arg0: i32) -> (i32, i32) {
    %c0_i32 = arith.constant 0 : i32
    %c0_i32_0 = arith.constant 0 : i32
    %c0_i32_1 = arith.constant 0 : i32
    return %c0_i32, %c0_i32_0 : i32, i32
  }
  func.func @transform_11(%arg0: i32) -> (i32, i32, i32) {
    %c0_i32 = arith.constant 0 : i32
    %c0_i32_0 = arith.constant 0 : i32
    %c0_i32_1 = arith.constant 0 : i32
    return %c0_i32, %arg0, %c0_i32_0 : i32, i32, i32
  }
  func.func @transform_12(%arg0: i32) -> (i32, i32, i32) {
    %c0_i32 = arith.constant 0 : i32
    %c0_i32_0 = arith.constant 0 : i32
    %c0_i32_1 = arith.constant 0 : i32
    return %c0_i32, %arg0, %c0_i32_0 : i32, i32, i32
  }
}

module attributes {stable_mosaic.version = 11 : i64} {
  func.func @kernel(%arg0: i32, %arg1: i32, %arg2: memref<16x32xbf16, #tpu.memory_space<vmem>>, %arg3: memref<16x1xi32, #tpu.memory_space<vmem>>, %arg4: memref<32x1024xbf16, #tpu.memory_space<vmem>>, %arg5: memref<1x1024xf32, #tpu.memory_space<vmem>>, %arg6: memref<1024x128xbf16, #tpu.memory_space<vmem>>, %arg7: memref<1x128xf32, #tpu.memory_space<vmem>>, %arg8: memref<1x128xf32, #tpu.memory_space<vmem>>, %arg9: memref<16x1024xbf16, #tpu.memory_space<vmem>>, %arg10: memref<16x1xf32, #tpu.memory_space<vmem>>, %arg11: memref<16x1xf32, #tpu.memory_space<vmem>>, %arg12: memref<16x1xf32, #tpu.memory_space<vmem>>) attributes {dimension_semantics = [#tpu.dimension_semantics<parallel>, #tpu.dimension_semantics<arbitrary>], iteration_bounds = array<i64: 1, 1>, scalar_prefetch = 0 : i64, scratch_operands = 4 : i64, tpu.core_type = #tpu.core_type<tc>, window_params = [{transform_indices = @transform_0, window_bounds = array<i64: 16, 32>}, {transform_indices = @transform_1, window_bounds = array<i64: 16, 1>}, {pipeline_mode = #tpu.pipeline_mode<synchronous>, transform_indices = @transform_2, window_bounds = array<i64: 32, 1024>}, {pipeline_mode = #tpu.pipeline_mode<synchronous>, transform_indices = @transform_3, window_bounds = array<i64: 1, 1024>}, {transform_indices = @transform_4, window_bounds = array<i64: 1024, 128>}, {transform_indices = @transform_5, window_bounds = array<i64: 1, 128>}, {transform_indices = @transform_6, window_bounds = array<i64: 1, 128>}]} {
    %c0_i32 = arith.constant 0 : i32
    %0 = arith.cmpi eq, %arg1, %c0_i32 : i32
    %1 = arith.extui %0 : i1 to i32
    %c0_i32_0 = arith.constant 0 : i32
    %2 = arith.cmpi ne, %1, %c0_i32_0 : i32
    scf.if %2 {
      %c0_27 = arith.constant 0 : index
      %c0_28 = arith.constant 0 : index
      %46 = vector.load %arg2[%c0_27, %c0_28] : memref<16x32xbf16, #tpu.memory_space<vmem>>, vector<16x32xbf16>
      %c0_29 = arith.constant 0 : index
      %c0_30 = arith.constant 0 : index
      %47 = vector.load %arg4[%c0_29, %c0_30] : memref<32x1024xbf16, #tpu.memory_space<vmem>>, vector<32x1024xbf16>
      %cst_31 = arith.constant dense<0.000000e+00> : vector<16x1024xf32>
      %48 = tpu.matmul %46, %47, %cst_31 {dimension_numbers = #tpu.dot_dimension_numbers<[1], [0], [0], [1], [0, 0, 1, 1], [], []>} : vector<16x32xbf16>, vector<32x1024xbf16>, vector<16x1024xf32> -> vector<16x1024xf32>
      %c0_32 = arith.constant 0 : index
      %c0_33 = arith.constant 0 : index
      %49 = vector.load %arg5[%c0_32, %c0_33] : memref<1x1024xf32, #tpu.memory_space<vmem>>, vector<1x1024xf32>
      %50 = vector.broadcast %49 : vector<1x1024xf32> to vector<16x1024xf32>
      %51 = arith.addf %48, %50 : vector<16x1024xf32>
      %cst_34 = arith.constant 0.000000e+00 : f32
      %52 = vector.broadcast %cst_34 : f32 to vector<16x1024xf32>
      %53 = arith.maximumf %51, %52 : vector<16x1024xf32>
      %54 = arith.truncf %53 : vector<16x1024xf32> to vector<16x1024xbf16>
      %c0_35 = arith.constant 0 : index
      %c0_36 = arith.constant 0 : index
      %55 = vector.load %arg9[%c0_35, %c0_36] : memref<16x1024xbf16, #tpu.memory_space<vmem>>, vector<16x1024xbf16>
      tpu.vector_store %arg9[%c0_35, %c0_36], %54 {strides = array<i32>} : memref<16x1024xbf16, #tpu.memory_space<vmem>>, vector<16x1024xbf16>,
      %cst_37 = arith.constant -1.000000e+30 : f32
      %56 = vector.broadcast %cst_37 : f32 to vector<16x1xf32>
      %c0_38 = arith.constant 0 : index
      %c0_39 = arith.constant 0 : index
      %57 = vector.load %arg10[%c0_38, %c0_39] : memref<16x1xf32, #tpu.memory_space<vmem>>, vector<16x1xf32>
      tpu.vector_store %arg10[%c0_38, %c0_39], %56 {strides = array<i32>} : memref<16x1xf32, #tpu.memory_space<vmem>>, vector<16x1xf32>,
      %cst_40 = arith.constant 0.000000e+00 : f32
      %58 = vector.broadcast %cst_40 : f32 to vector<16x1xf32>
      %c0_41 = arith.constant 0 : index
      %c0_42 = arith.constant 0 : index
      %59 = vector.load %arg11[%c0_41, %c0_42] : memref<16x1xf32, #tpu.memory_space<vmem>>, vector<16x1xf32>
      tpu.vector_store %arg11[%c0_41, %c0_42], %58 {strides = array<i32>} : memref<16x1xf32, #tpu.memory_space<vmem>>, vector<16x1xf32>,
      %cst_43 = arith.constant 0.000000e+00 : f32
      %60 = vector.broadcast %cst_43 : f32 to vector<16x1xf32>
      %c0_44 = arith.constant 0 : index
      %c0_45 = arith.constant 0 : index
      %61 = vector.load %arg12[%c0_44, %c0_45] : memref<16x1xf32, #tpu.memory_space<vmem>>, vector<16x1xf32>
      tpu.vector_store %arg12[%c0_44, %c0_45], %60 {strides = array<i32>} : memref<16x1xf32, #tpu.memory_space<vmem>>, vector<16x1xf32>,
    } else {
    }
    %c0 = arith.constant 0 : index
    %c0_1 = arith.constant 0 : index
    %3 = vector.load %arg9[%c0, %c0_1] : memref<16x1024xbf16, #tpu.memory_space<vmem>>, vector<16x1024xbf16>
    %c0_2 = arith.constant 0 : index
    %c0_3 = arith.constant 0 : index
    %4 = vector.load %arg6[%c0_2, %c0_3] : memref<1024x128xbf16, #tpu.memory_space<vmem>>, vector<1024x128xbf16>
    %cst = arith.constant dense<0.000000e+00> : vector<16x128xf32>
    %5 = tpu.matmul %3, %4, %cst {dimension_numbers = #tpu.dot_dimension_numbers<[1], [0], [0], [1], [0, 0, 1, 1], [], []>} : vector<16x1024xbf16>, vector<1024x128xbf16>, vector<16x128xf32> -> vector<16x128xf32>
    %c0_4 = arith.constant 0 : index
    %c0_5 = arith.constant 0 : index
    %6 = vector.load %arg7[%c0_4, %c0_5] : memref<1x128xf32, #tpu.memory_space<vmem>>, vector<1x128xf32>
    %7 = vector.broadcast %6 : vector<1x128xf32> to vector<16x128xf32>
    %8 = arith.addf %5, %7 : vector<16x128xf32>
    %9 = tpu.iota {dimensions = array<i32: 1>} : vector<16x128xi32>
    %c128_i32 = arith.constant 128 : i32
    %10 = arith.muli %arg1, %c128_i32 : i32
    %11 = vector.broadcast %10 : i32 to vector<16x128xi32>
    %12 = arith.addi %9, %11 : vector<16x128xi32>
    %c40_i32 = arith.constant 40 : i32
    %13 = vector.broadcast %c40_i32 : i32 to vector<16x128xi32>
    %14 = arith.cmpi slt, %12, %13 : vector<16x128xi32>
    %cst_6 = arith.constant -1.000000e+30 : f32
    %15 = vector.broadcast %cst_6 : f32 to vector<16x128xf32>
    %16 = arith.select %14, %8, %15 : vector<16x128xi1>, vector<16x128xf32>
    %c0_7 = arith.constant 0 : index
    %c0_8 = arith.constant 0 : index
    %17 = vector.load %arg10[%c0_7, %c0_8] : memref<16x1xf32, #tpu.memory_space<vmem>>, vector<16x1xf32>
    %cst_9 = arith.constant dense<0xFF800000> : vector<16xf32>
    %18 = vector.multi_reduction <maximumf>, %16, %cst_9 [1] : vector<16x128xf32> to vector<16xf32>
    %19 = vector.shape_cast %18 : vector<16xf32> to vector<16x1xf32>
    %20 = arith.maximumf %17, %19 : vector<16x1xf32>
    %21 = vector.broadcast %20 : vector<16x1xf32> to vector<16x128xf32>
    %22 = arith.subf %16, %21 : vector<16x128xf32>
    %23 = math.exp %22 : vector<16x128xf32>
    %c0_10 = arith.constant 0 : index
    %c0_11 = arith.constant 0 : index
    %24 = vector.load %arg11[%c0_10, %c0_11] : memref<16x1xf32, #tpu.memory_space<vmem>>, vector<16x1xf32>
    %25 = arith.subf %17, %20 : vector<16x1xf32>
    %26 = math.exp %25 : vector<16x1xf32>
    %27 = arith.mulf %24, %26 : vector<16x1xf32>
    %cst_12 = arith.constant dense<0.000000e+00> : vector<16xf32>
    %28 = vector.multi_reduction <add>, %23, %cst_12 [1] : vector<16x128xf32> to vector<16xf32>
    %29 = vector.shape_cast %28 : vector<16xf32> to vector<16x1xf32>
    %30 = arith.addf %27, %29 : vector<16x1xf32>
    %c0_13 = arith.constant 0 : index
    %c0_14 = arith.constant 0 : index
    %31 = vector.load %arg11[%c0_13, %c0_14] : memref<16x1xf32, #tpu.memory_space<vmem>>, vector<16x1xf32>
    tpu.vector_store %arg11[%c0_13, %c0_14], %30 {strides = array<i32>} : memref<16x1xf32, #tpu.memory_space<vmem>>, vector<16x1xf32>,
    %c0_15 = arith.constant 0 : index
    %c0_16 = arith.constant 0 : index
    %32 = vector.load %arg10[%c0_15, %c0_16] : memref<16x1xf32, #tpu.memory_space<vmem>>, vector<16x1xf32>
    tpu.vector_store %arg10[%c0_15, %c0_16], %20 {strides = array<i32>} : memref<16x1xf32, #tpu.memory_space<vmem>>, vector<16x1xf32>,
    %c0_17 = arith.constant 0 : index
    %c0_18 = arith.constant 0 : index
    %33 = vector.load %arg12[%c0_17, %c0_18] : memref<16x1xf32, #tpu.memory_space<vmem>>, vector<16x1xf32>
    %c0_19 = arith.constant 0 : index
    %c0_20 = arith.constant 0 : index
    %34 = vector.load %arg3[%c0_19, %c0_20] : memref<16x1xi32, #tpu.memory_space<vmem>>, vector<16x1xi32>
    %35 = vector.broadcast %34 : vector<16x1xi32> to vector<16x128xi32>
    %36 = arith.cmpi eq, %12, %35 : vector<16x128xi32>
    %cst_21 = arith.constant 0.000000e+00 : f32
    %37 = vector.broadcast %cst_21 : f32 to vector<16x128xf32>
    %38 = arith.select %36, %16, %37 : vector<16x128xi1>, vector<16x128xf32>
    %cst_22 = arith.constant dense<0.000000e+00> : vector<16xf32>
    %39 = vector.multi_reduction <add>, %38, %cst_22 [1] : vector<16x128xf32> to vector<16xf32>
    %40 = vector.shape_cast %39 : vector<16xf32> to vector<16x1xf32>
    %41 = arith.addf %33, %40 : vector<16x1xf32>
    %c0_23 = arith.constant 0 : index
    %c0_24 = arith.constant 0 : index
    %42 = vector.load %arg12[%c0_23, %c0_24] : memref<16x1xf32, #tpu.memory_space<vmem>>, vector<16x1xf32>
    tpu.vector_store %arg12[%c0_23, %c0_24], %41 {strides = array<i32>} : memref<16x1xf32, #tpu.memory_space<vmem>>, vector<16x1xf32>,
    %c0_i32_25 = arith.constant 0 : i32
    %43 = arith.cmpi eq, %arg1, %c0_i32_25 : i32
    %44 = arith.extui %43 : i1 to i32
    %c0_i32_26 = arith.constant 0 : i32
    %45 = arith.cmpi ne, %44, %c0_i32_26 : i32
    scf.if %45 {
      %46 = tpu.iota {dimensions = array<i32: 0>} : vector<16x1xi32>
      %c16_i32 = arith.constant 16 : i32
      %47 = arith.muli %arg0, %c16_i32 : i32
      %48 = vector.broadcast %47 : i32 to vector<16x1xi32>
      %49 = arith.addi %46, %48 : vector<16x1xi32>
      %c0_27 = arith.constant 0 : index
      %c0_28 = arith.constant 0 : index
      %50 = vector.load %arg10[%c0_27, %c0_28] : memref<16x1xf32, #tpu.memory_space<vmem>>, vector<16x1xf32>
      %c0_29 = arith.constant 0 : index
      %c0_30 = arith.constant 0 : index
      %51 = vector.load %arg11[%c0_29, %c0_30] : memref<16x1xf32, #tpu.memory_space<vmem>>, vector<16x1xf32>
      %52 = math.log %51 : vector<16x1xf32>
      %53 = arith.addf %50, %52 : vector<16x1xf32>
      %c14_i32 = arith.constant 14 : i32
      %54 = vector.broadcast %c14_i32 : i32 to vector<16x1xi32>
      %55 = arith.cmpi slt, %49, %54 : vector<16x1xi32>
      %c0_31 = arith.constant 0 : index
      %c0_32 = arith.constant 0 : index
      %56 = vector.load %arg12[%c0_31, %c0_32] : memref<16x1xf32, #tpu.memory_space<vmem>>, vector<16x1xf32>
      %57 = arith.subf %53, %56 : vector<16x1xf32>
      %cst_33 = arith.constant 0.000000e+00 : f32
      %58 = vector.broadcast %cst_33 : f32 to vector<16x1xf32>
      %59 = arith.select %55, %57, %58 : vector<16x1xi1>, vector<16x1xf32>
      %cst_34 = arith.constant dense<0.000000e+00> : vector<1xf32>
      %60 = vector.multi_reduction <add>, %59, %cst_34 [0] : vector<16x1xf32> to vector<1xf32>
      %61 = vector.shape_cast %60 : vector<1xf32> to vector<1x1xf32>
      %cst_35 = arith.constant 0.000000e+00 : f32
      %62 = vector.broadcast %cst_35 : f32 to vector<1x128xf32>
      %63 = vector.broadcast %61 : vector<1x1xf32> to vector<1x128xf32>
      %64 = arith.addf %62, %63 : vector<1x128xf32>
      %c0_36 = arith.constant 0 : index
      %c0_37 = arith.constant 0 : index
      %65 = vector.load %arg8[%c0_36, %c0_37] : memref<1x128xf32, #tpu.memory_space<vmem>>, vector<1x128xf32>
      tpu.vector_store %arg8[%c0_36, %c0_37], %64 {strides = array<i32>} : memref<1x128xf32, #tpu.memory_space<vmem>>, vector<1x128xf32>,
    } else {
    }
    return
  }
  func.func @transform_0(%arg0: i32, %arg1: i32) -> (i32, i32) {
    %c0_i32 = arith.constant 0 : i32
    %c0_i32_0 = arith.constant 0 : i32
    return %arg0, %c0_i32 : i32, i32
  }
  func.func @transform_1(%arg0: i32, %arg1: i32) -> (i32, i32) {
    %c0_i32 = arith.constant 0 : i32
    %c0_i32_0 = arith.constant 0 : i32
    return %arg0, %c0_i32 : i32, i32
  }
  func.func @transform_2(%arg0: i32, %arg1: i32) -> (i32, i32) {
    %c0_i32 = arith.constant 0 : i32
    %c0_i32_0 = arith.constant 0 : i32
    %c0_i32_1 = arith.constant 0 : i32
    return %c0_i32, %c0_i32_0 : i32, i32
  }
  func.func @transform_3(%arg0: i32, %arg1: i32) -> (i32, i32) {
    %c0_i32 = arith.constant 0 : i32
    %c0_i32_0 = arith.constant 0 : i32
    %c0_i32_1 = arith.constant 0 : i32
    return %c0_i32, %c0_i32_0 : i32, i32
  }
  func.func @transform_4(%arg0: i32, %arg1: i32) -> (i32, i32) {
    %c0_i32 = arith.constant 0 : i32
    %c0_i32_0 = arith.constant 0 : i32
    return %c0_i32, %arg1 : i32, i32
  }
  func.func @transform_5(%arg0: i32, %arg1: i32) -> (i32, i32) {
    %c0_i32 = arith.constant 0 : i32
    %c0_i32_0 = arith.constant 0 : i32
    return %c0_i32, %arg1 : i32, i32
  }
  func.func @transform_6(%arg0: i32, %arg1: i32) -> (i32, i32) {
    %c0_i32 = arith.constant 0 : i32
    %c0_i32_0 = arith.constant 0 : i32
    return %c0_i32, %arg0 : i32, i32
  }
}

</mosaic_0001>

<llo_original>
// kernel: sparql_parser_loss.6
$region0: #{sparql_parser_loss.6}
  #allocation0 [shape = 'u32[]', space=smem, size = 0x4, offset = 0x4, fixed_abs, tag = 'smem constant byte address 0x4 - core index']
  #allocation1 [shape = 'u32[72,128]{1,0:T(1,128)}', space=vmem, size = 0x9000, scoped, tag = 'internal scratch']
  %s0 = inlined_call_operand.vmem [shape: bf16[16,8,32], index: 0, kind: input, shape index: {}]
  %s1 = inlined_call_operand.vmem [shape: bf16[16,8,32], index: 1, kind: input, shape index: {}]
  %s2 = inlined_call_operand.vmem [shape: bf16[16,8,32], index: 2, kind: output, shape index: {}]
  %s3 = sld [smem:[#allocation0]]
  $region18: #{sparql_parser_loss.6} parent=0
    _
  %s5 = ssub.s32 1, %s3
  %s6 = scalar_select 0, %s5, %s3
  // Predicated region
  $region2: #{sparql_parser_loss.6} parent=0 // pred_check
    _
  $region3: #{sparql_parser_loss.6} parent=0 // pred_check_branch
    %8 = sbr.rel (0) target = $region5
  $region4: #{sparql_parser_loss.6} parent=0 // pred_region
    _
  $region5: #{sparql_parser_loss.6} parent=0 // pred_fallthru
    _
  // Predicated region
  $region6: #{sparql_parser_loss.6} parent=0 // pred_check
    _
  $region7: #{sparql_parser_loss.6} parent=0 // pred_check_branch
    %10 = sbr.rel (0) target = $region9
  $region8: #{sparql_parser_loss.6} parent=0 // pred_region
    _
  $region9: #{sparql_parser_loss.6} parent=0 // pred_fallthru
    _
  %v12 = vld [vmem:[%s0] sm:$0xf]
  %v13 = vld [vmem:[%s0 + $0x4] sm:$0xf]
  %v14 = vld [vmem:[%s0 + $0x8] sm:$0xf]
  %v15 = vld [vmem:[%s0 + $0xc] sm:$0xf]
  %v16 = vld [vmem:[%s0 + $0x10] sm:$0xf]
  %v17 = vld [vmem:[%s0 + $0x14] sm:$0xf]
  %v18 = vld [vmem:[%s0 + $0x18] sm:$0xf]
  %v19 = vld [vmem:[%s0 + $0x1c] sm:$0xf]
  %v20 = vld [vmem:[%s0 + $0x20] sm:$0xf]
  %v21 = vld [vmem:[%s0 + $0x24] sm:$0xf]
  %v22 = vld [vmem:[%s0 + $0x28] sm:$0xf]
  %v23 = vld [vmem:[%s0 + $0x2c] sm:$0xf]
  %v24 = vld [vmem:[%s0 + $0x30] sm:$0xf]
  %v25 = vld [vmem:[%s0 + $0x34] sm:$0xf]
  %v26 = vld [vmem:[%s0 + $0x38] sm:$0xf]
  %v27 = vld [vmem:[%s0 + $0x3c] sm:$0xf]
  %v28 = vld [vmem:[%s1] sm:$0xf]
  %v29 = vld [vmem:[%s1 + $0x4] sm:$0xf]
  %v30 = vld [vmem:[%s1 + $0x8] sm:$0xf]
  %v31 = vld [vmem:[%s1 + $0xc] sm:$0xf]
  %v32 = vld [vmem:[%s1 + $0x10] sm:$0xf]
  %v33 = vld [vmem:[%s1 + $0x14] sm:$0xf]
  %v34 = vld [vmem:[%s1 + $0x18] sm:$0xf]
  %v35 = vld [vmem:[%s1 + $0x1c] sm:$0xf]
  %v36 = vld [vmem:[%s1 + $0x20] sm:$0xf]
  %v37 = vld [vmem:[%s1 + $0x24] sm:$0xf]
  %v38 = vld [vmem:[%s1 + $0x28] sm:$0xf]
  %v39 = vld [vmem:[%s1 + $0x2c] sm:$0xf]
  %v40 = vld [vmem:[%s1 + $0x30] sm:$0xf]
  %v41 = vld [vmem:[%s1 + $0x34] sm:$0xf]
  %v42 = vld [vmem:[%s1 + $0x38] sm:$0xf]
  %v43 = vld [vmem:[%s1 + $0x3c] sm:$0xf]
  %vm44 = vcmask 261120
  %v46 = vsel %vm44, %v12, 0
  %v49 = vsel %vm44, %v28, 0
  %51 = vmatpush.bf16.xpose.msra.mxu0 0
  %52 = vmatpush.bf16.xpose.msra.mxu0 0
  %53 = vmatpush.bf16.xpose.msra.mxu0 0
  %54 = vmatpush.bf16.xpose.msra.mxu0 0
  %55 = vmatpush.bf16.xpose.msra.mxu0 0
  %56 = vmatpush.bf16.xpose.msra.mxu0 0
  %57 = vmatpush.bf16.xpose.msra.mxu0 0
  %58 = vmatpush.bf16.xpose.msra.mxu0 %v49
  %59 = vmatmul.bf16.gmra.mxu0 %v46
  %v60 = vpop.f32.mrf.mxu0
  %v61 = vadd.f32 0.0, %v60
  %v62 = vpop.f32.mrf.mxu0
  %63 = vdwg.mxu0
  %v65 = vsel %vm44, %v13, 0
  %v68 = vsel %vm44, %v29, 0
  %70 = vmatpush.bf16.xpose.msra.mxu0 0
  %71 = vmatpush.bf16.xpose.msra.mxu0 0
  %72 = vmatpush.bf16.xpose.msra.mxu0 0
  %73 = vmatpush.bf16.xpose.msra.mxu0 0
  %74 = vmatpush.bf16.xpose.msra.mxu0 0
  %75 = vmatpush.bf16.xpose.msra.mxu0 0
  %76 = vmatpush.bf16.xpose.msra.mxu0 0
  %77 = vmatpush.bf16.xpose.msra.mxu0 %v68
  %78 = vmatmul.bf16.gmra.mxu0 %v65
  %v79 = vpop.f32.mrf.mxu0
  %v80 = vadd.f32 0.0, %v79
  %v81 = vpop.f32.mrf.mxu0
  %82 = vdwg.mxu0
  %v84 = vsel %vm44, %v14, 0
  %v87 = vsel %vm44, %v30, 0
  %89 = vmatpush.bf16.xpose.msra.mxu0 0
  %90 = vmatpush.bf16.xpose.msra.mxu0 0
  %91 = vmatpush.bf16.xpose.msra.mxu0 0
  %92 = vmatpush.bf16.xpose.msra.mxu0 0
  %93 = vmatpush.bf16.xpose.msra.mxu0 0
  %94 = vmatpush.bf16.xpose.msra.mxu0 0
  %95 = vmatpush.bf16.xpose.msra.mxu0 0
  %96 = vmatpush.bf16.xpose.msra.mxu0 %v87
  %97 = vmatmul.bf16.gmra.mxu0 %v84
  %v98 = vpop.f32.mrf.mxu0
  %v99 = vadd.f32 0.0, %v98
  %v100 = vpop.f32.mrf.mxu0
  %101 = vdwg.mxu0
  %v103 = vsel %vm44, %v15, 0
  %v106 = vsel %vm44, %v31, 0
  %108 = vmatpush.bf16.xpose.msra.mxu0 0
  %109 = vmatpush.bf16.xpose.msra.mxu0 0
  %110 = vmatpush.bf16.xpose.msra.mxu0 0
  %111 = vmatpush.bf16.xpose.msra.mxu0 0
  %112 = vmatpush.bf16.xpose.msra.mxu0 0
  %113 = vmatpush.bf16.xpose.msra.mxu0 0
  %114 = vmatpush.bf16.xpose.msra.mxu0 0
  %115 = vmatpush.bf16.xpose.msra.mxu0 %v106
  %116 = vmatmul.bf16.gmra.mxu0 %v103
  %v117 = vpop.f32.mrf.mxu0
  %v118 = vadd.f32 0.0, %v117
  %v119 = vpop.f32.mrf.mxu0
  %120 = vdwg.mxu0
  %v122 = vsel %vm44, %v16, 0
  %v125 = vsel %vm44, %v32, 0
  %127 = vmatpush.bf16.xpose.msra.mxu0 0
  %128 = vmatpush.bf16.xpose.msra.mxu0 0
  %129 = vmatpush.bf16.xpose.msra.mxu0 0
  %130 = vmatpush.bf16.xpose.msra.mxu0 0
  %131 = vmatpush.bf16.xpose.msra.mxu0 0
  %132 = vmatpush.bf16.xpose.msra.mxu0 0
  %133 = vmatpush.bf16.xpose.msra.mxu0 0
  %134 = vmatpush.bf16.xpose.msra.mxu0 %v125
  %135 = vmatmul.bf16.gmra.mxu0 %v122
  %v136 = vpop.f32.mrf.mxu0
  %v137 = vadd.f32 0.0, %v136
  %v138 = vpop.f32.mrf.mxu0
  %139 = vdwg.mxu0
  %v141 = vsel %vm44, %v17, 0
  %v144 = vsel %vm44, %v33, 0
  %146 = vmatpush.bf16.xpose.msra.mxu0 0
  %147 = vmatpush.bf16.xpose.msra.mxu0 0
  %148 = vmatpush.bf16.xpose.msra.mxu0 0
  %149 = vmatpush.bf16.xpose.msra.mxu0 0
  %150 = vmatpush.bf16.xpose.msra.mxu0 0
  %151 = vmatpush.bf16.xpose.msra.mxu0 0
  %152 = vmatpush.bf16.xpose.msra.mxu0 0
  %153 = vmatpush.bf16.xpose.msra.mxu0 %v144
  %154 = vmatmul.bf16.gmra.mxu0 %v141
  %v155 = vpop.f32.mrf.mxu0
  %v156 = vadd.f32 0.0, %v155
  %v157 = vpop.f32.mrf.mxu0
  %158 = vdwg.mxu0
  %v160 = vsel %vm44, %v18, 0
  %v163 = vsel %vm44, %v34, 0
  %165 = vmatpush.bf16.xpose.msra.mxu0 0
  %166 = vmatpush.bf16.xpose.msra.mxu0 0
  %167 = vmatpush.bf16.xpose.msra.mxu0 0
  %168 = vmatpush.bf16.xpose.msra.mxu0 0
  %169 = vmatpush.bf16.xpose.msra.mxu0 0
  %170 = vmatpush.bf16.xpose.msra.mxu0 0
  %171 = vmatpush.bf16.xpose.msra.mxu0 0
  %172 = vmatpush.bf16.xpose.msra.mxu0 %v163
  %173 = vmatmul.bf16.gmra.mxu0 %v160
  %v174 = vpop.f32.mrf.mxu0
  %v175 = vadd.f32 0.0, %v174
  %v176 = vpop.f32.mrf.mxu0
  %177 = vdwg.mxu0
  %v179 = vsel %vm44, %v19, 0
  %v182 = vsel %vm44, %v35, 0
  %184 = vmatpush.bf16.xpose.msra.mxu0 0
  %185 = vmatpush.bf16.xpose.msra.mxu0 0
  %186 = vmatpush.bf16.xpose.msra.mxu0 0
  %187 = vmatpush.bf16.xpose.msra.mxu0 0
  %188 = vmatpush.bf16.xpose.msra.mxu0 0
  %189 = vmatpush.bf16.xpose.msra.mxu0 0
  %190 = vmatpush.bf16.xpose.msra.mxu0 0
  %191 = vmatpush.bf16.xpose.msra.mxu0 %v182
  %192 = vmatmul.bf16.gmra.mxu0 %v179
  %v193 = vpop.f32.mrf.mxu0
  %v194 = vadd.f32 0.0, %v193
  %v195 = vpop.f32.mrf.mxu0
  %196 = vdwg.mxu0
  %v198 = vsel %vm44, %v20, 0
  %v201 = vsel %vm44, %v36, 0
  %203 = vmatpush.bf16.xpose.msra.mxu0 0
  %204 = vmatpush.bf16.xpose.msra.mxu0 0
  %205 = vmatpush.bf16.xpose.msra.mxu0 0
  %206 = vmatpush.bf16.xpose.msra.mxu0 0
  %207 = vmatpush.bf16.xpose.msra.mxu0 0
  %208 = vmatpush.bf16.xpose.msra.mxu0 0
  %209 = vmatpush.bf16.xpose.msra.mxu0 0
  %210 = vmatpush.bf16.xpose.msra.mxu0 %v201
  %211 = vmatmul.bf16.gmra.mxu0 %v198
  %v212 = vpop.f32.mrf.mxu0
  %v213 = vadd.f32 0.0, %v212
  %v214 = vpop.f32.mrf.mxu0
  %215 = vdwg.mxu0
  %v217 = vsel %vm44, %v21, 0
  %v220 = vsel %vm44, %v37, 0
  %222 = vmatpush.bf16.xpose.msra.mxu0 0
  %223 = vmatpush.bf16.xpose.msra.mxu0 0
  %224 = vmatpush.bf16.xpose.msra.mxu0 0
  %225 = vmatpush.bf16.xpose.msra.mxu0 0
  %226 = vmatpush.bf16.xpose.msra.mxu0 0
  %227 = vmatpush.bf16.xpose.msra.mxu0 0
  %228 = vmatpush.bf16.xpose.msra.mxu0 0
  %229 = vmatpush.bf16.xpose.msra.mxu0 %v220
  %230 = vmatmul.bf16.gmra.mxu0 %v217
  %v231 = vpop.f32.mrf.mxu0
  %v232 = vadd.f32 0.0, %v231
  %v233 = vpop.f32.mrf.mxu0
  %234 = vdwg.mxu0
  %v236 = vsel %vm44, %v22, 0
  %v239 = vsel %vm44, %v38, 0
  %241 = vmatpush.bf16.xpose.msra.mxu0 0
  %242 = vmatpush.bf16.xpose.msra.mxu0 0
  %243 = vmatpush.bf16.xpose.msra.mxu0 0
  %244 = vmatpush.bf16.xpose.msra.mxu0 0
  %245 = vmatpush.bf16.xpose.msra.mxu0 0
  %246 = vmatpush.bf16.xpose.msra.mxu0 0
  %247 = vmatpush.bf16.xpose.msra.mxu0 0
  %248 = vmatpush.bf16.xpose.msra.mxu0 %v239
  %249 = vmatmul.bf16.gmra.mxu0 %v236
  %v250 = vpop.f32.mrf.mxu0
  %v251 = vadd.f32 0.0, %v250
  %v252 = vpop.f32.mrf.mxu0
  %253 = vdwg.mxu0
  %v255 = vsel %vm44, %v23, 0
  %v258 = vsel %vm44, %v39, 0
  %260 = vmatpush.bf16.xpose.msra.mxu0 0
  %261 = vmatpush.bf16.xpose.msra.mxu0 0
  %262 = vmatpush.bf16.xpose.msra.mxu0 0
  %263 = vmatpush.bf16.xpose.msra.mxu0 0
  %264 = vmatpush.bf16.xpose.msra.mxu0 0
  %265 = vmatpush.bf16.xpose.msra.mxu0 0
  %266 = vmatpush.bf16.xpose.msra.mxu0 0
  %267 = vmatpush.bf16.xpose.msra.mxu0 %v258
  %268 = vmatmul.bf16.gmra.mxu0 %v255
  %v269 = vpop.f32.mrf.mxu0
  %v270 = vadd.f32 0.0, %v269
  %v271 = vpop.f32.mrf.mxu0
  %272 = vdwg.mxu0
  %v274 = vsel %vm44, %v24, 0
  %v277 = vsel %vm44, %v40, 0
  %279 = vmatpush.bf16.xpose.msra.mxu0 0
  %280 = vmatpush.bf16.xpose.msra.mxu0 0
  %281 = vmatpush.bf16.xpose.msra.mxu0 0
  %282 = vmatpush.bf16.xpose.msra.mxu0 0
  %283 = vmatpush.bf16.xpose.msra.mxu0 0
  %284 = vmatpush.bf16.xpose.msra.mxu0 0
  %285 = vmatpush.bf16.xpose.msra.mxu0 0
  %286 = vmatpush.bf16.xpose.msra.mxu0 %v277
  %287 = vmatmul.bf16.gmra.mxu0 %v274
  %v288 = vpop.f32.mrf.mxu0
  %v289 = vadd.f32 0.0, %v288
  %v290 = vpop.f32.mrf.mxu0
  %291 = vdwg.mxu0
  %v293 = vsel %vm44, %v25, 0
  %v296 = vsel %vm44, %v41, 0
  %298 = vmatpush.bf16.xpose.msra.mxu0 0
  %299 = vmatpush.bf16.xpose.msra.mxu0 0
  %300 = vmatpush.bf16.xpose.msra.mxu0 0
  %301 = vmatpush.bf16.xpose.msra.mxu0 0
  %302 = vmatpush.bf16.xpose.msra.mxu0 0
  %303 = vmatpush.bf16.xpose.msra.mxu0 0
  %304 = vmatpush.bf16.xpose.msra.mxu0 0
  %305 = vmatpush.bf16.xpose.msra.mxu0 %v296
  %306 = vmatmul.bf16.gmra.mxu0 %v293
  %v307 = vpop.f32.mrf.mxu0
  %v308 = vadd.f32 0.0, %v307
  %v309 = vpop.f32.mrf.mxu0
  %310 = vdwg.mxu0
  %v312 = vsel %vm44, %v26, 0
  %v315 = vsel %vm44, %v42, 0
  %317 = vmatpush.bf16.xpose.msra.mxu0 0
  %318 = vmatpush.bf16.xpose.msra.mxu0 0
  %319 = vmatpush.bf16.xpose.msra.mxu0 0
  %320 = vmatpush.bf16.xpose.msra.mxu0 0
  %321 = vmatpush.bf16.xpose.msra.mxu0 0
  %322 = vmatpush.bf16.xpose.msra.mxu0 0
  %323 = vmatpush.bf16.xpose.msra.mxu0 0
  %324 = vmatpush.bf16.xpose.msra.mxu0 %v315
  %325 = vmatmul.bf16.gmra.mxu0 %v312
  %v326 = vpop.f32.mrf.mxu0
  %v327 = vadd.f32 0.0, %v326
  %v328 = vpop.f32.mrf.mxu0
  %329 = vdwg.mxu0
  %v331 = vsel %vm44, %v27, 0
  %v334 = vsel %vm44, %v43, 0
  %336 = vmatpush.bf16.xpose.msra.mxu0 0
  %337 = vmatpush.bf16.xpose.msra.mxu0 0
  %338 = vmatpush.bf16.xpose.msra.mxu0 0
  %339 = vmatpush.bf16.xpose.msra.mxu0 0
  %340 = vmatpush.bf16.xpose.msra.mxu0 0
  %341 = vmatpush.bf16.xpose.msra.mxu0 0
  %342 = vmatpush.bf16.xpose.msra.mxu0 0
  %343 = vmatpush.bf16.xpose.msra.mxu0 %v334
  %344 = vmatmul.bf16.gmra.mxu0 %v331
  %v345 = vpop.f32.mrf.mxu0
  %v346 = vadd.f32 0.0, %v345
  %v347 = vpop.f32.mrf.mxu0
  %348 = vdwg.mxu0
  %vm349 = vcmask 64512
  %v350 = vsel %vm349, %v61, -inf
  %351 = vmax.xlane.f32.xlu0 %v350
  %v352 = vpop.xlane.xlu0 %351
  %v353 = vsel %vm349, %v80, -inf
  %354 = vmax.xlane.f32.xlu0 %v353
  %v355 = vpop.xlane.xlu0 %354
  %v356 = vsel %vm349, %v99, -inf
  %357 = vmax.xlane.f32.xlu0 %v356
  %v358 = vpop.xlane.xlu0 %357
  %v359 = vsel %vm349, %v118, -inf
  %360 = vmax.xlane.f32.xlu0 %v359
  %v361 = vpop.xlane.xlu0 %360
  %v362 = vsel %vm349, %v137, -inf
  %363 = vmax.xlane.f32.xlu0 %v362
  %v364 = vpop.xlane.xlu0 %363
  %v365 = vsel %vm349, %v156, -inf
  %366 = vmax.xlane.f32.xlu0 %v365
  %v367 = vpop.xlane.xlu0 %366
  %v368 = vsel %vm349, %v175, -inf
  %369 = vmax.xlane.f32.xlu0 %v368
  %v370 = vpop.xlane.xlu0 %369
  %v371 = vsel %vm349, %v194, -inf
  %372 = vmax.xlane.f32.xlu0 %v371
  %v373 = vpop.xlane.xlu0 %372
  %v374 = vsel %vm349, %v213, -inf
  %375 = vmax.xlane.f32.xlu0 %v374
  %v376 = vpop.xlane.xlu0 %375
  %v377 = vsel %vm349, %v232, -inf
  %378 = vmax.xlane.f32.xlu0 %v377
  %v379 = vpop.xlane.xlu0 %378
  %v380 = vsel %vm349, %v251, -inf
  %381 = vmax.xlane.f32.xlu0 %v380
  %v382 = vpop.xlane.xlu0 %381
  %v383 = vsel %vm349, %v270, -inf
  %384 = vmax.xlane.f32.xlu0 %v383
  %v385 = vpop.xlane.xlu0 %384
  %v386 = vsel %vm349, %v289, -inf
  %387 = vmax.xlane.f32.xlu0 %v386
  %v388 = vpop.xlane.xlu0 %387
  %v389 = vsel %vm349, %v308, -inf
  %390 = vmax.xlane.f32.xlu0 %v389
  %v391 = vpop.xlane.xlu0 %390
  %v392 = vsel %vm349, %v327, -inf
  %393 = vmax.xlane.f32.xlu0 %v392
  %v394 = vpop.xlane.xlu0 %393
  %v395 = vsel %vm349, %v346, -inf
  %396 = vmax.xlane.f32.xlu0 %v395
  %v397 = vpop.xlane.xlu0 %396
  %v398 = vsub.f32 %v61, %v352
  %v399 = vsub.f32 %v80, %v355
  %v400 = vsub.f32 %v99, %v358
  %v401 = vsub.f32 %v118, %v361
  %v402 = vsub.f32 %v137, %v364
  %v403 = vsub.f32 %v156, %v367
  %v404 = vsub.f32 %v175, %v370
  %v405 = vsub.f32 %v194, %v373
  %v406 = vsub.f32 %v213, %v376
  %v407 = vsub.f32 %v232, %v379
  %v408 = vsub.f32 %v251, %v382
  %v409 = vsub.f32 %v270, %v385
  %v410 = vsub.f32 %v289, %v388
  %v411 = vsub.f32 %v308, %v391
  %v412 = vsub.f32 %v327, %v394
  %v413 = vsub.f32 %v346, %v397
  %v414 = vmul.f32 %v398, 1.442695
  %v415 = vpow.pop %v414
  %v416 = vmul.f32 %v399, 1.442695
  %v417 = vpow.pop %v416
  %v418 = vmul.f32 %v400, 1.442695
  %v419 = vpow.pop %v418
  %v420 = vmul.f32 %v401, 1.442695
  %v421 = vpow.pop %v420
  %v422 = vmul.f32 %v402, 1.442695
  %v423 = vpow.pop %v422
  %v424 = vmul.f32 %v403, 1.442695
  %v425 = vpow.pop %v424
  %v426 = vmul.f32 %v404, 1.442695
  %v427 = vpow.pop %v426
  %v428 = vmul.f32 %v405, 1.442695
  %v429 = vpow.pop %v428
  %v430 = vmul.f32 %v406, 1.442695
  %v431 = vpow.pop %v430
  %v432 = vmul.f32 %v407, 1.442695
  %v433 = vpow.pop %v432
  %v434 = vmul.f32 %v408, 1.442695
  %v435 = vpow.pop %v434
  %v436 = vmul.f32 %v409, 1.442695
  %v437 = vpow.pop %v436
  %v438 = vmul.f32 %v410, 1.442695
  %v439 = vpow.pop %v438
  %v440 = vmul.f32 %v411, 1.442695
  %v441 = vpow.pop %v440
  %v442 = vmul.f32 %v412, 1.442695
  %v443 = vpow.pop %v442
  %v444 = vmul.f32 %v413, 1.442695
  %v445 = vpow.pop %v444
  %v446 = vsel %vm349, %v415, 0.0
  %447 = vadd.xlane.f32.xlu0 %v446
  %v448 = vpop.xlane.xlu0 %447
  %v449 = vsel %vm349, %v417, 0.0
  %450 = vadd.xlane.f32.xlu0 %v449
  %v451 = vpop.xlane.xlu0 %450
  %v452 = vsel %vm349, %v419, 0.0
  %453 = vadd.xlane.f32.xlu0 %v452
  %v454 = vpop.xlane.xlu0 %453
  %v455 = vsel %vm349, %v421, 0.0
  %456 = vadd.xlane.f32.xlu0 %v455
  %v457 = vpop.xlane.xlu0 %456
  %v458 = vsel %vm349, %v423, 0.0
  %459 = vadd.xlane.f32.xlu0 %v458
  %v460 = vpop.xlane.xlu0 %459
  %v461 = vsel %vm349, %v425, 0.0
  %462 = vadd.xlane.f32.xlu0 %v461
  %v463 = vpop.xlane.xlu0 %462
  %v464 = vsel %vm349, %v427, 0.0
  %465 = vadd.xlane.f32.xlu0 %v464
  %v466 = vpop.xlane.xlu0 %465
  %v467 = vsel %vm349, %v429, 0.0
  %468 = vadd.xlane.f32.xlu0 %v467
  %v469 = vpop.xlane.xlu0 %468
  %v470 = vsel %vm349, %v431, 0.0
  %471 = vadd.xlane.f32.xlu0 %v470
  %v472 = vpop.xlane.xlu0 %471
  %v473 = vsel %vm349, %v433, 0.0
  %474 = vadd.xlane.f32.xlu0 %v473
  %v475 = vpop.xlane.xlu0 %474
  %v476 = vsel %vm349, %v435, 0.0
  %477 = vadd.xlane.f32.xlu0 %v476
  %v478 = vpop.xlane.xlu0 %477
  %v479 = vsel %vm349, %v437, 0.0
  %480 = vadd.xlane.f32.xlu0 %v479
  %v481 = vpop.xlane.xlu0 %480
  %v482 = vsel %vm349, %v439, 0.0
  %483 = vadd.xlane.f32.xlu0 %v482
  %v484 = vpop.xlane.xlu0 %483
  %v485 = vsel %vm349, %v441, 0.0
  %486 = vadd.xlane.f32.xlu0 %v485
  %v487 = vpop.xlane.xlu0 %486
  %v488 = vsel %vm349, %v443, 0.0
  %489 = vadd.xlane.f32.xlu0 %v488
  %v490 = vpop.xlane.xlu0 %489
  %v491 = vsel %vm349, %v445, 0.0
  %492 = vadd.xlane.f32.xlu0 %v491
  %v493 = vpop.xlane.xlu0 %492
  %v494 = vrcp.pop %v448
  %v495 = vrcp.pop %v451
  %v496 = vrcp.pop %v454
  %v497 = vrcp.pop %v457
  %v498 = vrcp.pop %v460
  %v499 = vrcp.pop %v463
  %v500 = vrcp.pop %v466
  %v501 = vrcp.pop %v469
  %v502 = vrcp.pop %v472
  %v503 = vrcp.pop %v475
  %v504 = vrcp.pop %v478
  %v505 = vrcp.pop %v481
  %v506 = vrcp.pop %v484
  %v507 = vrcp.pop %v487
  %v508 = vrcp.pop %v490
  %v509 = vrcp.pop %v493
  %v510 = vmul.f32 %v415, %v494
  %v511 = vmul.f32 %v417, %v495
  %v512 = vmul.f32 %v419, %v496
  %v513 = vmul.f32 %v421, %v497
  %v514 = vmul.f32 %v423, %v498
  %v515 = vmul.f32 %v425, %v499
  %v516 = vmul.f32 %v427, %v500
  %v517 = vmul.f32 %v429, %v501
  %v518 = vmul.f32 %v431, %v502
  %v519 = vmul.f32 %v433, %v503
  %v520 = vmul.f32 %v435, %v504
  %v521 = vmul.f32 %v437, %v505
  %v522 = vmul.f32 %v439, %v506
  %v523 = vmul.f32 %v441, %v507
  %v524 = vmul.f32 %v443, %v508
  %v525 = vmul.f32 %v445, %v509
  %v526 = vpack.c.bf16 %v510, %v510
  %v527 = vpack.c.bf16 %v511, %v511
  %v528 = vpack.c.bf16 %v512, %v512
  %v529 = vpack.c.bf16 %v513, %v513
  %v530 = vpack.c.bf16 %v514, %v514
  %v531 = vpack.c.bf16 %v515, %v515
  %v532 = vpack.c.bf16 %v516, %v516
  %v533 = vpack.c.bf16 %v517, %v517
  %v534 = vpack.c.bf16 %v518, %v518
  %v535 = vpack.c.bf16 %v519, %v519
  %v536 = vpack.c.bf16 %v520, %v520
  %v537 = vpack.c.bf16 %v521, %v521
  %v538 = vpack.c.bf16 %v522, %v522
  %v539 = vpack.c.bf16 %v523, %v523
  %v540 = vpack.c.bf16 %v524, %v524
  %v541 = vpack.c.bf16 %v525, %v525
  %v543 = vsel %vm349, %v526, 0
  %vm545 = vcmask 1043456
  %v546 = vsel %vm545, %v28, 0
  %548 = vmatpush.bf16.msra.mxu0 0
  %549 = vmatpush.bf16.msra.mxu0 0
  %550 = vmatpush.bf16.msra.mxu0 0
  %551 = vmatpush.bf16.msra.mxu0 0
  %552 = vmatpush.bf16.msra.mxu0 0
  %553 = vmatpush.bf16.msra.mxu0 0
  %554 = vmatpush.bf16.msra.mxu0 0
  %555 = vmatpush.bf16.msra.mxu0 %v546
  %556 = vmatmul.bf16.gmra.mxu0 %v543
  %v557 = vpop.f32.mrf.mxu0
  %v558 = vadd.f32 0.0, %v557
  %v559 = vpop.f32.mrf.mxu0
  %560 = vdwg.mxu0
  %v562 = vsel %vm349, %v527, 0
  %v564 = vsel %vm545, %v29, 0
  %566 = vmatpush.bf16.msra.mxu0 0
  %567 = vmatpush.bf16.msra.mxu0 0
  %568 = vmatpush.bf16.msra.mxu0 0
  %569 = vmatpush.bf16.msra.mxu0 0
  %570 = vmatpush.bf16.msra.mxu0 0
  %571 = vmatpush.bf16.msra.mxu0 0
  %572 = vmatpush.bf16.msra.mxu0 0
  %573 = vmatpush.bf16.msra.mxu0 %v564
  %574 = vmatmul.bf16.gmra.mxu0 %v562
  %v575 = vpop.f32.mrf.mxu0
  %v576 = vadd.f32 0.0, %v575
  %v577 = vpop.f32.mrf.mxu0
  %578 = vdwg.mxu0
  %v580 = vsel %vm349, %v528, 0
  %v582 = vsel %vm545, %v30, 0
  %584 = vmatpush.bf16.msra.mxu0 0
  %585 = vmatpush.bf16.msra.mxu0 0
  %586 = vmatpush.bf16.msra.mxu0 0
  %587 = vmatpush.bf16.msra.mxu0 0
  %588 = vmatpush.bf16.msra.mxu0 0
  %589 = vmatpush.bf16.msra.mxu0 0
  %590 = vmatpush.bf16.msra.mxu0 0
  %591 = vmatpush.bf16.msra.mxu0 %v582
  %592 = vmatmul.bf16.gmra.mxu0 %v580
  %v593 = vpop.f32.mrf.mxu0
  %v594 = vadd.f32 0.0, %v593
  %v595 = vpop.f32.mrf.mxu0
  %596 = vdwg.mxu0
  %v598 = vsel %vm349, %v529, 0
  %v600 = vsel %vm545, %v31, 0
  %602 = vmatpush.bf16.msra.mxu0 0
  %603 = vmatpush.bf16.msra.mxu0 0
  %604 = vmatpush.bf16.msra.mxu0 0
  %605 = vmatpush.bf16.msra.mxu0 0
  %606 = vmatpush.bf16.msra.mxu0 0
  %607 = vmatpush.bf16.msra.mxu0 0
  %608 = vmatpush.bf16.msra.mxu0 0
  %609 = vmatpush.bf16.msra.mxu0 %v600
  %610 = vmatmul.bf16.gmra.mxu0 %v598
  %v611 = vpop.f32.mrf.mxu0
  %v612 = vadd.f32 0.0, %v611
  %v613 = vpop.f32.mrf.mxu0
  %614 = vdwg.mxu0
  %v616 = vsel %vm349, %v530, 0
  %v618 = vsel %vm545, %v32, 0
  %620 = vmatpush.bf16.msra.mxu0 0
  %621 = vmatpush.bf16.msra.mxu0 0
  %622 = vmatpush.bf16.msra.mxu0 0
  %623 = vmatpush.bf16.msra.mxu0 0
  %624 = vmatpush.bf16.msra.mxu0 0
  %625 = vmatpush.bf16.msra.mxu0 0
  %626 = vmatpush.bf16.msra.mxu0 0
  %627 = vmatpush.bf16.msra.mxu0 %v618
  %628 = vmatmul.bf16.gmra.mxu0 %v616
  %v629 = vpop.f32.mrf.mxu0
  %v630 = vadd.f32 0.0, %v629
  %v631 = vpop.f32.mrf.mxu0
  %632 = vdwg.mxu0
  %v634 = vsel %vm349, %v531, 0
  %v636 = vsel %vm545, %v33, 0
  %638 = vmatpush.bf16.msra.mxu0 0
  %639 = vmatpush.bf16.msra.mxu0 0
  %640 = vmatpush.bf16.msra.mxu0 0
  %641 = vmatpush.bf16.msra.mxu0 0
  %642 = vmatpush.bf16.msra.mxu0 0
  %643 = vmatpush.bf16.msra.mxu0 0
  %644 = vmatpush.bf16.msra.mxu0 0
  %645 = vmatpush.bf16.msra.mxu0 %v636
  %646 = vmatmul.bf16.gmra.mxu0 %v634
  %v647 = vpop.f32.mrf.mxu0
  %v648 = vadd.f32 0.0, %v647
  %v649 = vpop.f32.mrf.mxu0
  %650 = vdwg.mxu0
  %v652 = vsel %vm349, %v532, 0
  %v654 = vsel %vm545, %v34, 0
  %656 = vmatpush.bf16.msra.mxu0 0
  %657 = vmatpush.bf16.msra.mxu0 0
  %658 = vmatpush.bf16.msra.mxu0 0
  %659 = vmatpush.bf16.msra.mxu0 0
  %660 = vmatpush.bf16.msra.mxu0 0
  %661 = vmatpush.bf16.msra.mxu0 0
  %662 = vmatpush.bf16.msra.mxu0 0
  %663 = vmatpush.bf16.msra.mxu0 %v654
  %664 = vmatmul.bf16.gmra.mxu0 %v652
  %v665 = vpop.f32.mrf.mxu0
  %v666 = vadd.f32 0.0, %v665
  %v667 = vpop.f32.mrf.mxu0
  %668 = vdwg.mxu0
  %v670 = vsel %vm349, %v533, 0
  %v672 = vsel %vm545, %v35, 0
  %674 = vmatpush.bf16.msra.mxu0 0
  %675 = vmatpush.bf16.msra.mxu0 0
  %676 = vmatpush.bf16.msra.mxu0 0
  %677 = vmatpush.bf16.msra.mxu0 0
  %678 = vmatpush.bf16.msra.mxu0 0
  %679 = vmatpush.bf16.msra.mxu0 0
  %680 = vmatpush.bf16.msra.mxu0 0
  %681 = vmatpush.bf16.msra.mxu0 %v672
  %682 = vmatmul.bf16.gmra.mxu0 %v670
  %v683 = vpop.f32.mrf.mxu0
  %v684 = vadd.f32 0.0, %v683
  %v685 = vpop.f32.mrf.mxu0
  %686 = vdwg.mxu0
  %v688 = vsel %vm349, %v534, 0
  %v690 = vsel %vm545, %v36, 0
  %692 = vmatpush.bf16.msra.mxu0 0
  %693 = vmatpush.bf16.msra.mxu0 0
  %694 = vmatpush.bf16.msra.mxu0 0
  %695 = vmatpush.bf16.msra.mxu0 0
  %696 = vmatpush.bf16.msra.mxu0 0
  %697 = vmatpush.bf16.msra.mxu0 0
  %698 = vmatpush.bf16.msra.mxu0 0
  %699 = vmatpush.bf16.msra.mxu0 %v690
  %700 = vmatmul.bf16.gmra.mxu0 %v688
  %v701 = vpop.f32.mrf.mxu0
  %v702 = vadd.f32 0.0, %v701
  %v703 = vpop.f32.mrf.mxu0
  %704 = vdwg.mxu0
  %v706 = vsel %vm349, %v535, 0
  %v708 = vsel %vm545, %v37, 0
  %710 = vmatpush.bf16.msra.mxu0 0
  %711 = vmatpush.bf16.msra.mxu0 0
  %712 = vmatpush.bf16.msra.mxu0 0
  %713 = vmatpush.bf16.msra.mxu0 0
  %714 = vmatpush.bf16.msra.mxu0 0
  %715 = vmatpush.bf16.msra.mxu0 0
  %716 = vmatpush.bf16.msra.mxu0 0
  %717 = vmatpush.bf16.msra.mxu0 %v708
  %718 = vmatmul.bf16.gmra.mxu0 %v706
  %v719 = vpop.f32.mrf.mxu0
  %v720 = vadd.f32 0.0, %v719
  %v721 = vpop.f32.mrf.mxu0
  %722 = vdwg.mxu0
  %v724 = vsel %vm349, %v536, 0
  %v726 = vsel %vm545, %v38, 0
  %728 = vmatpush.bf16.msra.mxu0 0
  %729 = vmatpush.bf16.msra.mxu0 0
  %730 = vmatpush.bf16.msra.mxu0 0
  %731 = vmatpush.bf16.msra.mxu0 0
  %732 = vmatpush.bf16.msra.mxu0 0
  %733 = vmatpush.bf16.msra.mxu0 0
  %734 = vmatpush.bf16.msra.mxu0 0
  %735 = vmatpush.bf16.msra.mxu0 %v726
  %736 = vmatmul.bf16.gmra.mxu0 %v724
  %v737 = vpop.f32.mrf.mxu0
  %v738 = vadd.f32 0.0, %v737
  %v739 = vpop.f32.mrf.mxu0
  %740 = vdwg.mxu0
  %v742 = vsel %vm349, %v537, 0
  %v744 = vsel %vm545, %v39, 0
  %746 = vmatpush.bf16.msra.mxu0 0
  %747 = vmatpush.bf16.msra.mxu0 0
  %748 = vmatpush.bf16.msra.mxu0 0
  %749 = vmatpush.bf16.msra.mxu0 0
  %750 = vmatpush.bf16.msra.mxu0 0
  %751 = vmatpush.bf16.msra.mxu0 0
  %752 = vmatpush.bf16.msra.mxu0 0
  %753 = vmatpush.bf16.msra.mxu0 %v744
  %754 = vmatmul.bf16.gmra.mxu0 %v742
  %v755 = vpop.f32.mrf.mxu0
  %v756 = vadd.f32 0.0, %v755
  %v757 = vpop.f32.mrf.mxu0
  %758 = vdwg.mxu0
  %v760 = vsel %vm349, %v538, 0
  %v762 = vsel %vm545, %v40, 0
  %764 = vmatpush.bf16.msra.mxu0 0
  %765 = vmatpush.bf16.msra.mxu0 0
  %766 = vmatpush.bf16.msra.mxu0 0
  %767 = vmatpush.bf16.msra.mxu0 0
  %768 = vmatpush.bf16.msra.mxu0 0
  %769 = vmatpush.bf16.msra.mxu0 0
  %770 = vmatpush.bf16.msra.mxu0 0
  %771 = vmatpush.bf16.msra.mxu0 %v762
  %772 = vmatmul.bf16.gmra.mxu0 %v760
  %v773 = vpop.f32.mrf.mxu0
  %v774 = vadd.f32 0.0, %v773
  %v775 = vpop.f32.mrf.mxu0
  %776 = vdwg.mxu0
  %v778 = vsel %vm349, %v539, 0
  %v780 = vsel %vm545, %v41, 0
  %782 = vmatpush.bf16.msra.mxu0 0
  %783 = vmatpush.bf16.msra.mxu0 0
  %784 = vmatpush.bf16.msra.mxu0 0
  %785 = vmatpush.bf16.msra.mxu0 0
  %786 = vmatpush.bf16.msra.mxu0 0
  %787 = vmatpush.bf16.msra.mxu0 0
  %788 = vmatpush.bf16.msra.mxu0 0
  %789 = vmatpush.bf16.msra.mxu0 %v780
  %790 = vmatmul.bf16.gmra.mxu0 %v778
  %v791 = vpop.f32.mrf.mxu0
  %v792 = vadd.f32 0.0, %v791
  %v793 = vpop.f32.mrf.mxu0
  %794 = vdwg.mxu0
  %v796 = vsel %vm349, %v540, 0
  %v798 = vsel %vm545, %v42, 0
  %800 = vmatpush.bf16.msra.mxu0 0
  %801 = vmatpush.bf16.msra.mxu0 0
  %802 = vmatpush.bf16.msra.mxu0 0
  %803 = vmatpush.bf16.msra.mxu0 0
  %804 = vmatpush.bf16.msra.mxu0 0
  %805 = vmatpush.bf16.msra.mxu0 0
  %806 = vmatpush.bf16.msra.mxu0 0
  %807 = vmatpush.bf16.msra.mxu0 %v798
  %808 = vmatmul.bf16.gmra.mxu0 %v796
  %v809 = vpop.f32.mrf.mxu0
  %v810 = vadd.f32 0.0, %v809
  %v811 = vpop.f32.mrf.mxu0
  %812 = vdwg.mxu0
  %v814 = vsel %vm349, %v541, 0
  %v816 = vsel %vm545, %v43, 0
  %818 = vmatpush.bf16.msra.mxu0 0
  %819 = vmatpush.bf16.msra.mxu0 0
  %820 = vmatpush.bf16.msra.mxu0 0
  %821 = vmatpush.bf16.msra.mxu0 0
  %822 = vmatpush.bf16.msra.mxu0 0
  %823 = vmatpush.bf16.msra.mxu0 0
  %824 = vmatpush.bf16.msra.mxu0 0
  %825 = vmatpush.bf16.msra.mxu0 %v816
  %826 = vmatmul.bf16.gmra.mxu0 %v814
  %v827 = vpop.f32.mrf.mxu0
  %v828 = vadd.f32 0.0, %v827
  %v829 = vpop.f32.mrf.mxu0
  %830 = vdwg.mxu0
  %v831 = vunpack.c.l.bf16 %v12
  %v832 = vunpack.c.l.bf16 %v13
  %v833 = vunpack.c.l.bf16 %v14
  %v834 = vunpack.c.l.bf16 %v15
  %v835 = vunpack.c.l.bf16 %v16
  %v836 = vunpack.c.l.bf16 %v17
  %v837 = vunpack.c.l.bf16 %v18
  %v838 = vunpack.c.l.bf16 %v19
  %v839 = vunpack.c.l.bf16 %v20
  %v840 = vunpack.c.l.bf16 %v21
  %v841 = vunpack.c.l.bf16 %v22
  %v842 = vunpack.c.l.bf16 %v23
  %v843 = vunpack.c.l.bf16 %v24
  %v844 = vunpack.c.l.bf16 %v25
  %v845 = vunpack.c.l.bf16 %v26
  %v846 = vunpack.c.l.bf16 %v27
  %v847 = vadd.f32 %v831, %v558
  %v848 = vadd.f32 %v832, %v576
  %v849 = vadd.f32 %v833, %v594
  %v850 = vadd.f32 %v834, %v612
  %v851 = vadd.f32 %v835, %v630
  %v852 = vadd.f32 %v836, %v648
  %v853 = vadd.f32 %v837, %v666
  %v854 = vadd.f32 %v838, %v684
  %v855 = vadd.f32 %v839, %v702
  %v856 = vadd.f32 %v840, %v720
  %v857 = vadd.f32 %v841, %v738
  %v858 = vadd.f32 %v842, %v756
  %v859 = vadd.f32 %v843, %v774
  %v860 = vadd.f32 %v844, %v792
  %v861 = vadd.f32 %v845, %v810
  %v862 = vadd.f32 %v846, %v828
  %v863 = vpack.c.bf16 %v847, %v847
  %v864 = vpack.c.bf16 %v848, %v848
  %v865 = vpack.c.bf16 %v849, %v849
  %v866 = vpack.c.bf16 %v850, %v850
  %v867 = vpack.c.bf16 %v851, %v851
  %v868 = vpack.c.bf16 %v852, %v852
  %v869 = vpack.c.bf16 %v853, %v853
  %v870 = vpack.c.bf16 %v854, %v854
  %v871 = vpack.c.bf16 %v855, %v855
  %v872 = vpack.c.bf16 %v856, %v856
  %v873 = vpack.c.bf16 %v857, %v857
  %v874 = vpack.c.bf16 %v858, %v858
  %v875 = vpack.c.bf16 %v859, %v859
  %v876 = vpack.c.bf16 %v860, %v860
  %v877 = vpack.c.bf16 %v861, %v861
  %v878 = vpack.c.bf16 %v862, %v862
  %vm879 = vcmask 257024
  %880 = vst.msk [vmem:[%s2] sm:$0xf] %vm879, %v863
  %881 = vst.msk [vmem:[%s2 + $0x4] sm:$0xf] %vm879, %v864
  %882 = vst.msk [vmem:[%s2 + $0x8] sm:$0xf] %vm879, %v865
  %883 = vst.msk [vmem:[%s2 + $0xc] sm:$0xf] %vm879, %v866
  %884 = vst.msk [vmem:[%s2 + $0x10] sm:$0xf] %vm879, %v867
  %885 = vst.msk [vmem:[%s2 + $0x14] sm:$0xf] %vm879, %v868
  %886 = vst.msk [vmem:[%s2 + $0x18] sm:$0xf] %vm879, %v869
  %887 = vst.msk [vmem:[%s2 + $0x1c] sm:$0xf] %vm879, %v870
  %888 = vst.msk [vmem:[%s2 + $0x20] sm:$0xf] %vm879, %v871
  %889 = vst.msk [vmem:[%s2 + $0x24] sm:$0xf] %vm879, %v872
  %890 = vst.msk [vmem:[%s2 + $0x28] sm:$0xf] %vm879, %v873
  %891 = vst.msk [vmem:[%s2 + $0x2c] sm:$0xf] %vm879, %v874
  %892 = vst.msk [vmem:[%s2 + $0x30] sm:$0xf] %vm879, %v875
  %893 = vst.msk [vmem:[%s2 + $0x34] sm:$0xf] %vm879, %v876
  %894 = vst.msk [vmem:[%s2 + $0x38] sm:$0xf] %vm879, %v877
  %895 = vst.msk [vmem:[%s2 + $0x3c] sm:$0xf] %vm879, %v878
  // Predicated region
  $region10: #{sparql_parser_loss.6} parent=0 // pred_check
    _
  $region11: #{sparql_parser_loss.6} parent=0 // pred_check_branch
    %897 = sbr.rel (0) target = $region13
  $region12: #{sparql_parser_loss.6} parent=0 // pred_region
    _
  $region13: #{sparql_parser_loss.6} parent=0 // pred_fallthru
    _
  // Predicated region
  $region14: #{sparql_parser_loss.6} parent=0 // pred_check
    _
  $region15: #{sparql_parser_loss.6} parent=0 // pred_check_branch
    %899 = sbr.rel (0) target = $region17
  $region16: #{sparql_parser_loss.6} parent=0 // pred_region
    _
  $region17: #{sparql_parser_loss.6} parent=0 // pred_fallthru
    _

// kernel: sparql_parser_loss.4
$region0: #{sparql_parser_loss.4}
  #allocation0 [shape = 'u32[]', space=smem, size = 0x4, offset = 0x4, fixed_abs, tag = 'smem constant byte address 0x4 - core index']
  #allocation1 [shape = 'u32[72,128]{1,0:T(1,128)}', space=vmem, size = 0x9000, scoped, tag = 'internal scratch']
  #allocation2 [shape = 'bf16[8,16,96]{2,1,0:T(8,128)(2,1)}', space=vmem, size = 0x8000, scoped, tag = 'scratch operand']
  #allocation3 [shape = 'bf16[8,16,32]{2,1,0:T(8,128)(2,1)}', space=vmem, size = 0x8000, scoped, tag = 'scratch operand']
  %s0 = inlined_call_operand.vmem [shape: bf16[8,16,32], index: 0, kind: input, shape index: {}]
  %s1 = inlined_call_operand.vmem [shape: s32[16,1], index: 1, kind: input, shape index: {}]
  %s2 = inlined_call_operand.vmem [shape: f32[2,16,32], index: 2, kind: input, shape index: {}]
  %s3 = inlined_call_operand.vmem [shape: bf16[32,96], index: 3, kind: input, shape index: {}]
  %s4 = inlined_call_operand.vmem [shape: f32[1,96], index: 4, kind: input, shape index: {}]
  %s5 = inlined_call_operand.vmem [shape: bf16[32,96], index: 5, kind: input, shape index: {}]
  %s6 = inlined_call_operand.vmem [shape: f32[1,96], index: 6, kind: input, shape index: {}]
  %s7 = inlined_call_operand.vmem [shape: bf16[32,96], index: 7, kind: input, shape index: {}]
  %s8 = inlined_call_operand.vmem [shape: f32[1,96], index: 8, kind: input, shape index: {}]
  %s9 = inlined_call_operand.vmem [shape: bf16[32,96], index: 9, kind: input, shape index: {}]
  %s10 = inlined_call_operand.vmem [shape: f32[1,96], index: 10, kind: input, shape index: {}]
  %s11 = inlined_call_operand.vmem [shape: bf16[8,16,32], index: 11, kind: output, shape index: {0}]
  %s12 = inlined_call_operand.vmem [shape: f32[2,16,32], index: 12, kind: output, shape index: {1}]
  %13 = xla_tuple %s11, %s12
  %s14 = sld [smem:[#allocation0]]
  $region76: #{sparql_parser_loss.4} parent=0
    _
  %s16 = ssub.s32 1, %s14
  %s17 = scalar_select 0, %s16, %s14
  // Predicated region
  $region2: #{sparql_parser_loss.4} parent=0 // pred_check
    _
  $region3: #{sparql_parser_loss.4} parent=0 // pred_check_branch
    %19 = sbr.rel (0) target = $region5
  $region4: #{sparql_parser_loss.4} parent=0 // pred_region
    _
  $region5: #{sparql_parser_loss.4} parent=0 // pred_fallthru
    _
  // Predicated region
  $region6: #{sparql_parser_loss.4} parent=0 // pred_check
    _
  $region7: #{sparql_parser_loss.4} parent=0 // pred_check_branch
    %21 = sbr.rel (0) target = $region9
  $region8: #{sparql_parser_loss.4} parent=0 // pred_region
    _
  $region9: #{sparql_parser_loss.4} parent=0 // pred_fallthru
    _
  // Predicated region
  $region10: #{sparql_parser_loss.4} parent=0 // pred_check
    _
  $region11: #{sparql_parser_loss.4} parent=0 // pred_check_branch
    %23 = sbr.rel (0) target = $region13
  $region12: #{sparql_parser_loss.4} parent=0 // pred_region
    _
  $region13: #{sparql_parser_loss.4} parent=0 // pred_fallthru
    _
  // Predicated region
  $region14: #{sparql_parser_loss.4} parent=0 // pred_check
    _
  $region15: #{sparql_parser_loss.4} parent=0 // pred_check_branch
    %25 = sbr.rel (0) target = $region17
  $region16: #{sparql_parser_loss.4} parent=0 // pred_region
    _
  $region17: #{sparql_parser_loss.4} parent=0 // pred_fallthru
    _
  // Predicated region
  $region18: #{sparql_parser_loss.4} parent=0 // pred_check
    _
  $region19: #{sparql_parser_loss.4} parent=0 // pred_check_branch
    %27 = sbr.rel (0) target = $region21
  $region20: #{sparql_parser_loss.4} parent=0 // pred_region
    _
  $region21: #{sparql_parser_loss.4} parent=0 // pred_fallthru
    _
  // Predicated region
  $region22: #{sparql_parser_loss.4} parent=0 // pred_check
    _
  $region23: #{sparql_parser_loss.4} parent=0 // pred_check_branch
    %29 = sbr.rel (0) target = $region25
  $region24: #{sparql_parser_loss.4} parent=0 // pred_region
    _
  $region25: #{sparql_parser_loss.4} parent=0 // pred_fallthru
    _
  // Predicated region
  $region26: #{sparql_parser_loss.4} parent=0 // pred_check
    _
  $region27: #{sparql_parser_loss.4} parent=0 // pred_check_branch
    %31 = sbr.rel (0) target = $region29
  $region28: #{sparql_parser_loss.4} parent=0 // pred_region
    _
  $region29: #{sparql_parser_loss.4} parent=0 // pred_fallthru
    _
  // Predicated region
  $region30: #{sparql_parser_loss.4} parent=0 // pred_check
    _
  $region31: #{sparql_parser_loss.4} parent=0 // pred_check_branch
    %33 = sbr.rel (0) target = $region33
  $region32: #{sparql_parser_loss.4} parent=0 // pred_region
    _
  $region33: #{sparql_parser_loss.4} parent=0 // pred_fallthru
    _
  // Predicated region
  $region34: #{sparql_parser_loss.4} parent=0 // pred_check
    _
  $region35: #{sparql_parser_loss.4} parent=0 // pred_check_branch
    %35 = sbr.rel (0) target = $region37
  $region36: #{sparql_parser_loss.4} parent=0 // pred_region
    _
  $region37: #{sparql_parser_loss.4} parent=0 // pred_fallthru
    _
  // Predicated region
  $region38: #{sparql_parser_loss.4} parent=0 // pred_check
    _
  $region39: #{sparql_parser_loss.4} parent=0 // pred_check_branch
    %37 = sbr.rel (0) target = $region41
  $region40: #{sparql_parser_loss.4} parent=0 // pred_region
    _
  $region41: #{sparql_parser_loss.4} parent=0 // pred_fallthru
    _
  // Predicated region
  $region42: #{sparql_parser_loss.4} parent=0 // pred_check
    _
  $region43: #{sparql_parser_loss.4} parent=0 // pred_check_branch
    %39 = sbr.rel (0) target = $region45
  $region44: #{sparql_parser_loss.4} parent=0 // pred_region
    _
  $region45: #{sparql_parser_loss.4} parent=0 // pred_fallthru
    _
  %v41 = vld [vmem:[%s1] sm:$0xff]
  %v42 = vld [vmem:[%s1 + $0x8] sm:$0xff]
  %v43 = vld [vmem:[%s5] sm:$0xf]
  %v44 = vld [vmem:[%s5 + $0x4] sm:$0xf]
  %v45 = vld [vmem:[%s5 + $0x8] sm:$0xf]
  %v46 = vld [vmem:[%s5 + $0xc] sm:$0xf]
  %v47 = vld [vmem:[%s6] sm:$0x1]
  %v48 = vld [vmem:[%s9] sm:$0xf]
  %v49 = vld [vmem:[%s9 + $0x4] sm:$0xf]
  %v50 = vld [vmem:[%s9 + $0x8] sm:$0xf]
  %v51 = vld [vmem:[%s9 + $0xc] sm:$0xf]
  %v52 = vld [vmem:[%s10] sm:$0x1]
  %v53 = vld [vmem:[%s0] sm:$0xf]
  %v54 = vld [vmem:[%s0 + $0x4] sm:$0xf]
  %v55 = vld [vmem:[%s0 + $0x8] sm:$0xf]
  %v56 = vld [vmem:[%s0 + $0xc] sm:$0xf]
  %v57 = vld [vmem:[%s0 + $0x10] sm:$0xf]
  %v58 = vld [vmem:[%s0 + $0x14] sm:$0xf]
  %v59 = vld [vmem:[%s0 + $0x18] sm:$0xf]
  %v60 = vld [vmem:[%s0 + $0x1c] sm:$0xf]
  %v61 = vld [vmem:[%s0 + $0x20] sm:$0xf]
  %v62 = vld [vmem:[%s0 + $0x24] sm:$0xf]
  %v63 = vld [vmem:[%s0 + $0x28] sm:$0xf]
  %v64 = vld [vmem:[%s0 + $0x2c] sm:$0xf]
  %v65 = vld [vmem:[%s0 + $0x30] sm:$0xf]
  %v66 = vld [vmem:[%s0 + $0x34] sm:$0xf]
  %v67 = vld [vmem:[%s0 + $0x38] sm:$0xf]
  %v68 = vld [vmem:[%s0 + $0x3c] sm:$0xf]
  %v69 = vld [vmem:[%s3] sm:$0xf]
  %v70 = vld [vmem:[%s3 + $0x4] sm:$0xf]
  %v71 = vld [vmem:[%s3 + $0x8] sm:$0xf]
  %v72 = vld [vmem:[%s3 + $0xc] sm:$0xf]
  %v73 = vld [vmem:[%s4] sm:$0x1]
  %v75 = vperm.slane %v73, 0
  %v93 = vunpack.c.l.b16 %v53
  %v94 = vunpack.c.l.b16 %v54
  %v95 = vunpack.c.l.b16 %v55
  %v96 = vunpack.c.l.b16 %v56
  %v97 = vunpack.c.l.b16 %v57
  %v98 = vunpack.c.l.b16 %v58
  %v99 = vunpack.c.l.b16 %v59
  %v100 = vunpack.c.l.b16 %v60
  %v101 = vunpack.c.l.b16 %v61
  %v102 = vunpack.c.l.b16 %v62
  %v103 = vunpack.c.l.b16 %v63
  %v104 = vunpack.c.l.b16 %v64
  %v105 = vunpack.c.l.b16 %v65
  %v106 = vunpack.c.l.b16 %v66
  %v107 = vunpack.c.l.b16 %v67
  %v108 = vunpack.c.l.b16 %v68
  %v109 = vpack.c.b16 %v94, %v93
  %v110 = vpack.c.b16 %v96, %v95
  %v111 = vpack.c.b16 %v98, %v97
  %v112 = vpack.c.b16 %v100, %v99
  %v113 = vpack.c.b16 %v102, %v101
  %v114 = vpack.c.b16 %v104, %v103
  %v115 = vpack.c.b16 %v106, %v105
  %v116 = vpack.c.b16 %v108, %v107
  %v121 = vunpack.c.l.b16 %v69
  %v122 = vunpack.c.l.b16 %v70
  %v123 = vunpack.c.l.b16 %v71
  %v124 = vunpack.c.l.b16 %v72
  %v125 = vpack.c.b16 %v122, %v121
  %v126 = vpack.c.b16 %v124, %v123
  %vm129 = vcmask 261120
  %v131 = vsel %vm129, %v109, 0
  %v134 = vsel %vm129, %v110, 0
  %v137 = vsel %vm129, %v111, 0
  %v140 = vsel %vm129, %v112, 0
  %v143 = vsel %vm129, %v113, 0
  %v146 = vsel %vm129, %v114, 0
  %v149 = vsel %vm129, %v115, 0
  %v152 = vsel %vm129, %v116, 0
  %154 = vmatpush.bf16.msra.mxu0 0
  %155 = vmatpush.bf16.msra.mxu0 0
  %156 = vmatpush.bf16.msra.mxu0 0
  %157 = vmatpush.bf16.msra.mxu0 0
  %158 = vmatpush.bf16.msra.mxu0 0
  %159 = vmatpush.bf16.msra.mxu0 0
  %160 = vmatpush.bf16.msra.mxu0 %v126
  %161 = vmatpush.bf16.msra.mxu0 %v125
  %162 = vmatmul.bf16.gmra.mxu0 %v131
  %v163 = vpop.f32.mrf.mxu0
  %v164 = vadd.f32 %v75, %v163
  %v165 = vpop.f32.mrf.mxu0
  %v166 = vadd.f32 %v75, %v165
  %167 = vmatmul.bf16.gmra.mxu0 %v134
  %v168 = vpop.f32.mrf.mxu0
  %v169 = vadd.f32 %v75, %v168
  %v170 = vpop.f32.mrf.mxu0
  %v171 = vadd.f32 %v75, %v170
  %172 = vmatmul.bf16.gmra.mxu0 %v137
  %v173 = vpop.f32.mrf.mxu0
  %v174 = vadd.f32 %v75, %v173
  %v175 = vpop.f32.mrf.mxu0
  %v176 = vadd.f32 %v75, %v175
  %177 = vmatmul.bf16.gmra.mxu0 %v140
  %v178 = vpop.f32.mrf.mxu0
  %v179 = vadd.f32 %v75, %v178
  %v180 = vpop.f32.mrf.mxu0
  %v181 = vadd.f32 %v75, %v180
  %182 = vmatmul.bf16.gmra.mxu0 %v143
  %v183 = vpop.f32.mrf.mxu0
  %v184 = vadd.f32 %v75, %v183
  %v185 = vpop.f32.mrf.mxu0
  %v186 = vadd.f32 %v75, %v185
  %187 = vmatmul.bf16.gmra.mxu0 %v146
  %v188 = vpop.f32.mrf.mxu0
  %v189 = vadd.f32 %v75, %v188
  %v190 = vpop.f32.mrf.mxu0
  %v191 = vadd.f32 %v75, %v190
  %192 = vmatmul.bf16.gmra.mxu0 %v149
  %v193 = vpop.f32.mrf.mxu0
  %v194 = vadd.f32 %v75, %v193
  %v195 = vpop.f32.mrf.mxu0
  %v196 = vadd.f32 %v75, %v195
  %197 = vmatmul.bf16.gmra.mxu0 %v152
  %v198 = vpop.f32.mrf.mxu0
  %v199 = vadd.f32 %v75, %v198
  %v200 = vpop.f32.mrf.mxu0
  %v201 = vadd.f32 %v75, %v200
  %202 = vdwg.mxu0
  %v203 = vpack.c.bf16 %v164, %v164
  %v204 = vpack.c.bf16 %v166, %v166
  %v205 = vpack.c.bf16 %v169, %v169
  %v206 = vpack.c.bf16 %v171, %v171
  %v207 = vpack.c.bf16 %v174, %v174
  %v208 = vpack.c.bf16 %v176, %v176
  %v209 = vpack.c.bf16 %v179, %v179
  %v210 = vpack.c.bf16 %v181, %v181
  %v211 = vpack.c.bf16 %v184, %v184
  %v212 = vpack.c.bf16 %v186, %v186
  %v213 = vpack.c.bf16 %v189, %v189
  %v214 = vpack.c.bf16 %v191, %v191
  %v215 = vpack.c.bf16 %v194, %v194
  %v216 = vpack.c.bf16 %v196, %v196
  %v217 = vpack.c.bf16 %v199, %v199
  %v218 = vpack.c.bf16 %v201, %v201
  %vm219 = vcmask 781312
  %220 = vst.msk [vmem:[#allocation2] sm:$0xf] %vm219, %v203
  %221 = vst.msk [vmem:[#allocation2 + $0x4] sm:$0xf] %vm219, %v204
  %222 = vst.msk [vmem:[#allocation2 + $0x8] sm:$0xf] %vm219, %v205
  %223 = vst.msk [vmem:[#allocation2 + $0xc] sm:$0xf] %vm219, %v206
  %224 = vst.msk [vmem:[#allocation2 + $0x10] sm:$0xf] %vm219, %v207
  %225 = vst.msk [vmem:[#allocation2 + $0x14] sm:$0xf] %vm219, %v208
  %226 = vst.msk [vmem:[#allocation2 + $0x18] sm:$0xf] %vm219, %v209
  %227 = vst.msk [vmem:[#allocation2 + $0x1c] sm:$0xf] %vm219, %v210
  %228 = vst.msk [vmem:[#allocation2 + $0x20] sm:$0xf] %vm219, %v211
  %229 = vst.msk [vmem:[#allocation2 + $0x24] sm:$0xf] %vm219, %v212
  %230 = vst.msk [vmem:[#allocation2 + $0x28] sm:$0xf] %vm219, %v213
  %231 = vst.msk [vmem:[#allocation2 + $0x2c] sm:$0xf] %vm219, %v214
  %232 = vst.msk [vmem:[#allocation2 + $0x30] sm:$0xf] %vm219, %v215
  %233 = vst.msk [vmem:[#allocation2 + $0x34] sm:$0xf] %vm219, %v216
  %234 = vst.msk [vmem:[#allocation2 + $0x38] sm:$0xf] %vm219, %v217
  %235 = vst.msk [vmem:[#allocation2 + $0x3c] sm:$0xf] %vm219, %v218
  %v236 = vld [vmem:[%s2] sm:$0xff]
  %v237 = vld [vmem:[%s2 + $0x8] sm:$0xff]
  loop: start=0, step=1, limit=8
  $region46: #{sparql_parser_loss.4} parent=0 // loop_pre_header
    _
  $region47: #{sparql_parser_loss.4} parent=0 // loop_header
    %s239 = sphi 0, %s243
    %p240 = scmp.ge.s32.totalorder %s239, 8
    %v244 = vphi %v236, %v405
    %v245 = vphi %v237, %v407
  $region48: #{sparql_parser_loss.4} parent=0 // loop_header_branch
    %242 = sbr.rel (%p240) target = $region52
  $region49: #{sparql_parser_loss.4} parent=0 // loop_body
    %v246 = vstv %s239
    %vm247 = vcmp.lt.s32.totalorder %v246, %v41
    %vm248 = vcmp.lt.s32.totalorder %v246, %v42
    %v249 = vpack.c.bf16 %v245, %v244
    %v251 = vperm.slane %v47, 0
    %v257 = vunpack.c.l.b16 %v43
    %v258 = vunpack.c.l.b16 %v44
    %v259 = vunpack.c.l.b16 %v45
    %v260 = vunpack.c.l.b16 %v46
    %v261 = vpack.c.b16 %v258, %v257
    %v262 = vpack.c.b16 %v260, %v259
    %v266 = vsel %vm129, %v249, 0
    %268 = vmatpush.bf16.msra.mxu0 0
    %269 = vmatpush.bf16.msra.mxu0 0
    %270 = vmatpush.bf16.msra.mxu0 0
    %271 = vmatpush.bf16.msra.mxu0 0
    %272 = vmatpush.bf16.msra.mxu0 0
    %273 = vmatpush.bf16.msra.mxu0 0
    %274 = vmatpush.bf16.msra.mxu0 %v262
    %275 = vmatpush.bf16.msra.mxu0 %v261
    %276 = vmatmul.bf16.gmra.mxu0 %v266
    %v277 = vpop.f32.mrf.mxu0
    %v278 = vadd.f32 %v251, %v277
    %v279 = vpop.f32.mrf.mxu0
    %v280 = vadd.f32 %v251, %v279
    %281 = vdwg.mxu0
    %s282 = smul.u32 %s239, 2
    %s283 = smul.addr %s282, 4
    %s284 = scalar_lea.vmem [#allocation2], %s283
    %v285 = vld [vmem:[%s284] sm:$0xf]
    %v286 = vld [vmem:[%s284 + $0x4] sm:$0xf]
    %v287 = vunpack.c.l.bf16 %v285
    %v288 = vunpack.c.l.bf16 %v286
    %v289 = vadd.f32 %v287, %v278
    %v290 = vadd.f32 %v288, %v280
    %v291 = vxor.u32 %v289, 2147483648
    %v292 = vxor.u32 %v290, 2147483648
    %v293 = vmul.f32 %v291, 1.442695
    %v294 = vpow.pop %v293
    %v295 = vmul.f32 %v292, 1.442695
    %v296 = vpow.pop %v295
    %v297 = vadd.f32 %v294, 1.0
    %v298 = vadd.f32 %v296, 1.0
    %v299 = vrcp.pop %v297
    %v300 = vmul.f32 %v297, %v299
    %v301 = vsub.f32 1.0, %v300
    %v302 = vmul.f32 %v299, %v301
    %v303 = vadd.f32 %v299, %v302
    %vm304 = vweird.f32 %v297
    %vm305 = vweird.f32 %v299
    %vm306 = vmor %vm304, %vm305
    %v307 = vsel %vm306, %v299, %v303
    %v308 = vand.u32 2147483647, %v297
    %vm309 = vcmp.eq.f32.partialorder %v308, 8.507059e+37
    %v310 = vand.u32 %v297, 2147483648
    %v311 = vor.u32 1.1754944e-38, %v310
    %v312 = vsel %vm309, %v311, %v307
    %v313 = vmul.f32 1.0, %v312
    %v314 = vrcp.pop %v298
    %v315 = vmul.f32 %v298, %v314
    %v316 = vsub.f32 1.0, %v315
    %v317 = vmul.f32 %v314, %v316
    %v318 = vadd.f32 %v314, %v317
    %vm319 = vweird.f32 %v298
    %vm320 = vweird.f32 %v314
    %vm321 = vmor %vm319, %vm320
    %v322 = vsel %vm321, %v314, %v318
    %v323 = vand.u32 2147483647, %v298
    %vm324 = vcmp.eq.f32.partialorder %v323, 8.507059e+37
    %v325 = vand.u32 %v298, 2147483648
    %v326 = vor.u32 1.1754944e-38, %v325
    %v327 = vsel %vm324, %v326, %v322
    %v328 = vmul.f32 1.0, %v327
    %331 = vrot.lane.b32.xlu0 %v278, 64
    %v332 = vpop.permute.xlu0 %331
    %333 = vrot.lane.b32.xlu0 %v280, 64
    %v334 = vpop.permute.xlu0 %333
    %v337 = vmul.f32 %v313, %v332
    %v338 = vmul.f32 %v328, %v334
    %341 = vrot.lane.b32.xlu0 %v337, 64
    %v342 = vpop.permute.xlu0 %341
    %343 = vrot.lane.b32.xlu0 %v338, 64
    %v344 = vpop.permute.xlu0 %343
    %v347 = vadd.f32 %v287, %v342
    %v348 = vadd.f32 %v288, %v344
    %v349 = vtanh.pop %v347
    %v350 = vtanh.pop %v348
    %v351 = vsub.f32 1.0, %v313
    %v352 = vsub.f32 1.0, %v328
    %355 = vrot.lane.b32.xlu0 %v349, 96
    %v356 = vpop.permute.xlu0 %355
    %357 = vrot.lane.b32.xlu0 %v350, 96
    %v358 = vpop.permute.xlu0 %357
    %v361 = vmul.f32 %v351, %v356
    %v362 = vmul.f32 %v352, %v358
    %365 = vrot.lane.b32.xlu0 %v244, 32
    %v366 = vpop.permute.xlu0 %365
    %367 = vrot.lane.b32.xlu0 %v245, 32
    %v368 = vpop.permute.xlu0 %367
    %v371 = vmul.f32 %v313, %v366
    %v372 = vmul.f32 %v328, %v368
    %v373 = vadd.f32 %v361, %v371
    %v374 = vadd.f32 %v362, %v372
    %v375 = vsel %vm247, 1, 0
    %v376 = vsel %vm248, 1, 0
    %377 = vset.pattern.permute.xlu0 0
    %378 = vperm.xlu0 %377, %v375
    %v379 = vpop.permute.xlu0 %378
    %380 = vset.pattern.permute.xlu0 0
    %381 = vperm.xlu0 %380, %v376
    %v382 = vpop.permute.xlu0 %381
    %vm383 = vcmp.eq.s32.totalorder %v379, 1
    %vm384 = vcmp.eq.s32.totalorder %v382, 1
    %v385 = vsel %vm383, %v373, %v366
    %v386 = vsel %vm384, %v374, %v368
    %v387 = vpack.c.bf16 %v385, %v385
    %v388 = vpack.c.bf16 %v386, %v386
    %391 = vrot.lane.b32.xlu0 %v387, 96
    %v392 = vpop.permute.xlu0 %391
    %393 = vrot.lane.b32.xlu0 %v388, 96
    %v394 = vpop.permute.xlu0 %393
    %s397 = smul.addr %s282, 4
    %s398 = scalar_lea.vmem [#allocation3], %s397
    %vm399 = vcmask 257024
    %400 = vst.msk [vmem:[%s398] sm:$0xf] %vm399, %v392
    %401 = vst.msk [vmem:[%s398 + $0x4] sm:$0xf] %vm399, %v394
    %404 = vrot.lane.b32.xlu0 %v385, 96
    %v405 = vpop.permute.xlu0 %404
    %406 = vrot.lane.b32.xlu0 %v386, 96
    %v407 = vpop.permute.xlu0 %406
  $region50: #{sparql_parser_loss.4} parent=0 // loop_footer
    %s243 = sadd.s32 1, %s239
  $region51: #{sparql_parser_loss.4} parent=0 // loop_footer_branch
    %238 = sbr.rel target = $region47
  $region52: #{sparql_parser_loss.4} parent=0 // loop_exit
    _
  %410 = vst.msk [vmem:[%s12] sm:$0xff] %vm129, %v244
  %411 = vst.msk [vmem:[%s12 + $0x8] sm:$0xff] %vm129, %v245
  %v412 = vld [vmem:[#allocation3] sm:$0xf]
  %v413 = vld [vmem:[#allocation3 + $0x4] sm:$0xf]
  %v414 = vld [vmem:[#allocation3 + $0x8] sm:$0xf]
  %v415 = vld [vmem:[#allocation3 + $0xc] sm:$0xf]
  %v416 = vld [vmem:[#allocation3 + $0x10] sm:$0xf]
  %v417 = vld [vmem:[#allocation3 + $0x14] sm:$0xf]
  %v418 = vld [vmem:[#allocation3 + $0x18] sm:$0xf]
  %v419 = vld [vmem:[#allocation3 + $0x1c] sm:$0xf]
  %v420 = vld [vmem:[#allocation3 + $0x20] sm:$0xf]
  %v421 = vld [vmem:[#allocation3 + $0x24] sm:$0xf]
  %v422 = vld [vmem:[#allocation3 + $0x28] sm:$0xf]
  %v423 = vld [vmem:[#allocation3 + $0x2c] sm:$0xf]
  %v424 = vld [vmem:[#allocation3 + $0x30] sm:$0xf]
  %v425 = vld [vmem:[#allocation3 + $0x34] sm:$0xf]
  %v426 = vld [vmem:[#allocation3 + $0x38] sm:$0xf]
  %v427 = vld [vmem:[#allocation3 + $0x3c] sm:$0xf]
  %v428 = vld [vmem:[%s7] sm:$0xf]
  %v429 = vld [vmem:[%s7 + $0x4] sm:$0xf]
  %v430 = vld [vmem:[%s7 + $0x8] sm:$0xf]
  %v431 = vld [vmem:[%s7 + $0xc] sm:$0xf]
  %v432 = vld [vmem:[%s8] sm:$0x1]
  %v434 = vperm.slane %v432, 0
  %v452 = vunpack.c.l.b16 %v412
  %v453 = vunpack.c.l.b16 %v413
  %v454 = vunpack.c.l.b16 %v414
  %v455 = vunpack.c.l.b16 %v415
  %v456 = vunpack.c.l.b16 %v416
  %v457 = vunpack.c.l.b16 %v417
  %v458 = vunpack.c.l.b16 %v418
  %v459 = vunpack.c.l.b16 %v419
  %v460 = vunpack.c.l.b16 %v420
  %v461 = vunpack.c.l.b16 %v421
  %v462 = vunpack.c.l.b16 %v422
  %v463 = vunpack.c.l.b16 %v423
  %v464 = vunpack.c.l.b16 %v424
  %v465 = vunpack.c.l.b16 %v425
  %v466 = vunpack.c.l.b16 %v426
  %v467 = vunpack.c.l.b16 %v427
  %v468 = vpack.c.b16 %v453, %v452
  %v469 = vpack.c.b16 %v455, %v454
  %v470 = vpack.c.b16 %v457, %v456
  %v471 = vpack.c.b16 %v459, %v458
  %v472 = vpack.c.b16 %v461, %v460
  %v473 = vpack.c.b16 %v463, %v462
  %v474 = vpack.c.b16 %v465, %v464
  %v475 = vpack.c.b16 %v467, %v466
  %v480 = vunpack.c.l.b16 %v428
  %v481 = vunpack.c.l.b16 %v429
  %v482 = vunpack.c.l.b16 %v430
  %v483 = vunpack.c.l.b16 %v431
  %v484 = vpack.c.b16 %v481, %v480
  %v485 = vpack.c.b16 %v483, %v482
  %v489 = vsel %vm129, %v468, 0
  %v492 = vsel %vm129, %v469, 0
  %v495 = vsel %vm129, %v470, 0
  %v498 = vsel %vm129, %v471, 0
  %v501 = vsel %vm129, %v472, 0
  %v504 = vsel %vm129, %v473, 0
  %v507 = vsel %vm129, %v474, 0
  %v510 = vsel %vm129, %v475, 0
  %512 = vmatpush.bf16.msra.mxu0 0
  %513 = vmatpush.bf16.msra.mxu0 0
  %514 = vmatpush.bf16.msra.mxu0 0
  %515 = vmatpush.bf16.msra.mxu0 0
  %516 = vmatpush.bf16.msra.mxu0 0
  %517 = vmatpush.bf16.msra.mxu0 0
  %518 = vmatpush.bf16.msra.mxu0 %v485
  %519 = vmatpush.bf16.msra.mxu0 %v484
  %520 = vmatmul.bf16.gmra.mxu0 %v489
  %v521 = vpop.f32.mrf.mxu0
  %v522 = vadd.f32 %v434, %v521
  %v523 = vpop.f32.mrf.mxu0
  %v524 = vadd.f32 %v434, %v523
  %525 = vmatmul.bf16.gmra.mxu0 %v492
  %v526 = vpop.f32.mrf.mxu0
  %v527 = vadd.f32 %v434, %v526
  %v528 = vpop.f32.mrf.mxu0
  %v529 = vadd.f32 %v434, %v528
  %530 = vmatmul.bf16.gmra.mxu0 %v495
  %v531 = vpop.f32.mrf.mxu0
  %v532 = vadd.f32 %v434, %v531
  %v533 = vpop.f32.mrf.mxu0
  %v534 = vadd.f32 %v434, %v533
  %535 = vmatmul.bf16.gmra.mxu0 %v498
  %v536 = vpop.f32.mrf.mxu0
  %v537 = vadd.f32 %v434, %v536
  %v538 = vpop.f32.mrf.mxu0
  %v539 = vadd.f32 %v434, %v538
  %540 = vmatmul.bf16.gmra.mxu0 %v501
  %v541 = vpop.f32.mrf.mxu0
  %v542 = vadd.f32 %v434, %v541
  %v543 = vpop.f32.mrf.mxu0
  %v544 = vadd.f32 %v434, %v543
  %545 = vmatmul.bf16.gmra.mxu0 %v504
  %v546 = vpop.f32.mrf.mxu0
  %v547 = vadd.f32 %v434, %v546
  %v548 = vpop.f32.mrf.mxu0
  %v549 = vadd.f32 %v434, %v548
  %550 = vmatmul.bf16.gmra.mxu0 %v507
  %v551 = vpop.f32.mrf.mxu0
  %v552 = vadd.f32 %v434, %v551
  %v553 = vpop.f32.mrf.mxu0
  %v554 = vadd.f32 %v434, %v553
  %555 = vmatmul.bf16.gmra.mxu0 %v510
  %v556 = vpop.f32.mrf.mxu0
  %v557 = vadd.f32 %v434, %v556
  %v558 = vpop.f32.mrf.mxu0
  %v559 = vadd.f32 %v434, %v558
  %560 = vdwg.mxu0
  %v561 = vpack.c.bf16 %v522, %v522
  %v562 = vpack.c.bf16 %v524, %v524
  %v563 = vpack.c.bf16 %v527, %v527
  %v564 = vpack.c.bf16 %v529, %v529
  %v565 = vpack.c.bf16 %v532, %v532
  %v566 = vpack.c.bf16 %v534, %v534
  %v567 = vpack.c.bf16 %v537, %v537
  %v568 = vpack.c.bf16 %v539, %v539
  %v569 = vpack.c.bf16 %v542, %v542
  %v570 = vpack.c.bf16 %v544, %v544
  %v571 = vpack.c.bf16 %v547, %v547
  %v572 = vpack.c.bf16 %v549, %v549
  %v573 = vpack.c.bf16 %v552, %v552
  %v574 = vpack.c.bf16 %v554, %v554
  %v575 = vpack.c.bf16 %v557, %v557
  %v576 = vpack.c.bf16 %v559, %v559
  %577 = vst.msk [vmem:[#allocation2] sm:$0xf] %vm219, %v561
  %578 = vst.msk [vmem:[#allocation2 + $0x4] sm:$0xf] %vm219, %v562
  %579 = vst.msk [vmem:[#allocation2 + $0x8] sm:$0xf] %vm219, %v563
  %580 = vst.msk [vmem:[#allocation2 + $0xc] sm:$0xf] %vm219, %v564
  %581 = vst.msk [vmem:[#allocation2 + $0x10] sm:$0xf] %vm219, %v565
  %582 = vst.msk [vmem:[#allocation2 + $0x14] sm:$0xf] %vm219, %v566
  %583 = vst.msk [vmem:[#allocation2 + $0x18] sm:$0xf] %vm219, %v567
  %584 = vst.msk [vmem:[#allocation2 + $0x1c] sm:$0xf] %vm219, %v568
  %585 = vst.msk [vmem:[#allocation2 + $0x20] sm:$0xf] %vm219, %v569
  %586 = vst.msk [vmem:[#allocation2 + $0x24] sm:$0xf] %vm219, %v570
  %587 = vst.msk [vmem:[#allocation2 + $0x28] sm:$0xf] %vm219, %v571
  %588 = vst.msk [vmem:[#allocation2 + $0x2c] sm:$0xf] %vm219, %v572
  %589 = vst.msk [vmem:[#allocation2 + $0x30] sm:$0xf] %vm219, %v573
  %590 = vst.msk [vmem:[#allocation2 + $0x34] sm:$0xf] %vm219, %v574
  %591 = vst.msk [vmem:[#allocation2 + $0x38] sm:$0xf] %vm219, %v575
  %592 = vst.msk [vmem:[#allocation2 + $0x3c] sm:$0xf] %vm219, %v576
  %s593 = scalar_lea.vmem %s2, 16
  %v594 = vld [vmem:[%s593] sm:$0xff]
  %v595 = vld [vmem:[%s593 + $0x8] sm:$0xff]
  loop: start=0, step=1, limit=8
  $region53: #{sparql_parser_loss.4} parent=0 // loop_pre_header
    _
  $region54: #{sparql_parser_loss.4} parent=0 // loop_header
    %s597 = sphi 0, %s601
    %p598 = scmp.ge.s32.totalorder %s597, 8
    %v602 = vphi %v594, %v765
    %v603 = vphi %v595, %v767
  $region55: #{sparql_parser_loss.4} parent=0 // loop_header_branch
    %600 = sbr.rel (%p598) target = $region59
  $region56: #{sparql_parser_loss.4} parent=0 // loop_body
    %v604 = vstv %s597
    %vm605 = vcmp.lt.s32.totalorder %v604, %v41
    %vm606 = vcmp.lt.s32.totalorder %v604, %v42
    %v607 = vpack.c.bf16 %v603, %v602
    %v609 = vperm.slane %v52, 0
    %v615 = vunpack.c.l.b16 %v48
    %v616 = vunpack.c.l.b16 %v49
    %v617 = vunpack.c.l.b16 %v50
    %v618 = vunpack.c.l.b16 %v51
    %v619 = vpack.c.b16 %v616, %v615
    %v620 = vpack.c.b16 %v618, %v617
    %v624 = vsel %vm129, %v607, 0
    %626 = vmatpush.bf16.msra.mxu0 0
    %627 = vmatpush.bf16.msra.mxu0 0
    %628 = vmatpush.bf16.msra.mxu0 0
    %629 = vmatpush.bf16.msra.mxu0 0
    %630 = vmatpush.bf16.msra.mxu0 0
    %631 = vmatpush.bf16.msra.mxu0 0
    %632 = vmatpush.bf16.msra.mxu0 %v620
    %633 = vmatpush.bf16.msra.mxu0 %v619
    %634 = vmatmul.bf16.gmra.mxu0 %v624
    %v635 = vpop.f32.mrf.mxu0
    %v636 = vadd.f32 %v609, %v635
    %v637 = vpop.f32.mrf.mxu0
    %v638 = vadd.f32 %v609, %v637
    %639 = vdwg.mxu0
    %s640 = smul.u32 %s597, 2
    %s641 = smul.addr %s640, 4
    %s642 = scalar_lea.vmem [#allocation2], %s641
    %v643 = vld [vmem:[%s642] sm:$0xf]
    %v644 = vld [vmem:[%s642 + $0x4] sm:$0xf]
    %v645 = vunpack.c.l.bf16 %v643
    %v646 = vunpack.c.l.bf16 %v644
    %v647 = vadd.f32 %v645, %v636
    %v648 = vadd.f32 %v646, %v638
    %v649 = vxor.u32 %v647, 2147483648
    %v650 = vxor.u32 %v648, 2147483648
    %v651 = vmul.f32 %v649, 1.442695
    %v652 = vpow.pop %v651
    %v653 = vmul.f32 %v650, 1.442695
    %v654 = vpow.pop %v653
    %v655 = vadd.f32 %v652, 1.0
    %v656 = vadd.f32 %v654, 1.0
    %v657 = vrcp.pop %v655
    %v658 = vmul.f32 %v655, %v657
    %v659 = vsub.f32 1.0, %v658
    %v660 = vmul.f32 %v657, %v659
    %v661 = vadd.f32 %v657, %v660
    %vm662 = vweird.f32 %v655
    %vm663 = vweird.f32 %v657
    %vm664 = vmor %vm662, %vm663
    %v665 = vsel %vm664, %v657, %v661
    %v666 = vand.u32 2147483647, %v655
    %vm667 = vcmp.eq.f32.partialorder %v666, 8.507059e+37
    %v668 = vand.u32 %v655, 2147483648
    %v669 = vor.u32 1.1754944e-38, %v668
    %v670 = vsel %vm667, %v669, %v665
    %v671 = vmul.f32 1.0, %v670
    %v672 = vrcp.pop %v656
    %v673 = vmul.f32 %v656, %v672
    %v674 = vsub.f32 1.0, %v673
    %v675 = vmul.f32 %v672, %v674
    %v676 = vadd.f32 %v672, %v675
    %vm677 = vweird.f32 %v656
    %vm678 = vweird.f32 %v672
    %vm679 = vmor %vm677, %vm678
    %v680 = vsel %vm679, %v672, %v676
    %v681 = vand.u32 2147483647, %v656
    %vm682 = vcmp.eq.f32.partialorder %v681, 8.507059e+37
    %v683 = vand.u32 %v656, 2147483648
    %v684 = vor.u32 1.1754944e-38, %v683
    %v685 = vsel %vm682, %v684, %v680
    %v686 = vmul.f32 1.0, %v685
    %689 = vrot.lane.b32.xlu0 %v636, 64
    %v690 = vpop.permute.xlu0 %689
    %691 = vrot.lane.b32.xlu0 %v638, 64
    %v692 = vpop.permute.xlu0 %691
    %v695 = vmul.f32 %v671, %v690
    %v696 = vmul.f32 %v686, %v692
    %699 = vrot.lane.b32.xlu0 %v695, 64
    %v700 = vpop.permute.xlu0 %699
    %701 = vrot.lane.b32.xlu0 %v696, 64
    %v702 = vpop.permute.xlu0 %701
    %v705 = vadd.f32 %v645, %v700
    %v706 = vadd.f32 %v646, %v702
    %v707 = vtanh.pop %v705
    %v708 = vtanh.pop %v706
    %v709 = vsub.f32 1.0, %v671
    %v710 = vsub.f32 1.0, %v686
    %713 = vrot.lane.b32.xlu0 %v707, 96
    %v714 = vpop.permute.xlu0 %713
    %715 = vrot.lane.b32.xlu0 %v708, 96
    %v716 = vpop.permute.xlu0 %715
    %v719 = vmul.f32 %v709, %v714
    %v720 = vmul.f32 %v710, %v716
    %723 = vrot.lane.b32.xlu0 %v602, 32
    %v724 = vpop.permute.xlu0 %723
    %725 = vrot.lane.b32.xlu0 %v603, 32
    %v726 = vpop.permute.xlu0 %725
    %v729 = vmul.f32 %v671, %v724
    %v730 = vmul.f32 %v686, %v726
    %v731 = vadd.f32 %v719, %v729
    %v732 = vadd.f32 %v720, %v730
    %v733 = vsel %vm605, 1, 0
    %v734 = vsel %vm606, 1, 0
    %735 = vset.pattern.permute.xlu0 0
    %736 = vperm.xlu0 %735, %v733
    %v737 = vpop.permute.xlu0 %736
    %738 = vset.pattern.permute.xlu0 0
    %739 = vperm.xlu0 %738, %v734
    %v740 = vpop.permute.xlu0 %739
    %vm741 = vcmp.eq.s32.totalorder %v737, 1
    %vm742 = vcmp.eq.s32.totalorder %v740, 1
    %v743 = vsel %vm741, %v731, %v724
    %v744 = vsel %vm742, %v732, %v726
    %v745 = vsel %vm741, %v731, 0.0
    %v746 = vsel %vm742, %v732, 0.0
    %v747 = vpack.c.bf16 %v745, %v745
    %v748 = vpack.c.bf16 %v746, %v746
    %751 = vrot.lane.b32.xlu0 %v747, 96
    %v752 = vpop.permute.xlu0 %751
    %753 = vrot.lane.b32.xlu0 %v748, 96
    %v754 = vpop.permute.xlu0 %753
    %s757 = smul.addr %s640, 4
    %s758 = scalar_lea.vmem %s11, %s757
    %vm759 = vcmask 257024
    %760 = vst.msk [vmem:[%s758] sm:$0xf] %vm759, %v752
    %761 = vst.msk [vmem:[%s758 + $0x4] sm:$0xf] %vm759, %v754
    %764 = vrot.lane.b32.xlu0 %v743, 96
    %v765 = vpop.permute.xlu0 %764
    %766 = vrot.lane.b32.xlu0 %v744, 96
    %v767 = vpop.permute.xlu0 %766
  $region57: #{sparql_parser_loss.4} parent=0 // loop_footer
    %s601 = sadd.s32 1, %s597
  $region58: #{sparql_parser_loss.4} parent=0 // loop_footer_branch
    %596 = sbr.rel target = $region54
  $region59: #{sparql_parser_loss.4} parent=0 // loop_exit
    _
  %s770 = scalar_lea.vmem %s12, 16
  %771 = vst.msk [vmem:[%s770] sm:$0xff] %vm129, %v602
  %772 = vst.msk [vmem:[%s770 + $0x8] sm:$0xff] %vm129, %v603
  // Predicated region
  $region60: #{sparql_parser_loss.4} parent=0 // pred_check
    _
  $region61: #{sparql_parser_loss.4} parent=0 // pred_check_branch
    %774 = sbr.rel (0) target = $region63
  $region62: #{sparql_parser_loss.4} parent=0 // pred_region
    _
  $region63: #{sparql_parser_loss.4} parent=0 // pred_fallthru
    _
  // Predicated region
  $region64: #{sparql_parser_loss.4} parent=0 // pred_check
    _
  $region65: #{sparql_parser_loss.4} parent=0 // pred_check_branch
    %776 = sbr.rel (0) target = $region67
  $region66: #{sparql_parser_loss.4} parent=0 // pred_region
    _
  $region67: #{sparql_parser_loss.4} parent=0 // pred_fallthru
    _
  // Predicated region
  $region68: #{sparql_parser_loss.4} parent=0 // pred_check
    _
  $region69: #{sparql_parser_loss.4} parent=0 // pred_check_branch
    %778 = sbr.rel (0) target = $region71
  $region70: #{sparql_parser_loss.4} parent=0 // pred_region
    _
  $region71: #{sparql_parser_loss.4} parent=0 // pred_fallthru
    _
  // Predicated region
  $region72: #{sparql_parser_loss.4} parent=0 // pred_check
    _
  $region73: #{sparql_parser_loss.4} parent=0 // pred_check_branch
    %780 = sbr.rel (0) target = $region75
  $region74: #{sparql_parser_loss.4} parent=0 // pred_region
    _
  $region75: #{sparql_parser_loss.4} parent=0 // pred_fallthru
    _

// kernel: sparql_parser_loss.5
$region0: #{sparql_parser_loss.5}
  #allocation0 [shape = 'u32[]', space=smem, size = 0x4, offset = 0x4, fixed_abs, tag = 'smem constant byte address 0x4 - core index']
  #allocation1 [shape = 'u32[72,128]{1,0:T(1,128)}', space=vmem, size = 0x9000, scoped, tag = 'internal scratch']
  #allocation2 [shape = 'bf16[8,16,96]{2,1,0:T(8,128)(2,1)}', space=vmem, size = 0x8000, scoped, tag = 'scratch operand']
  #allocation3 [shape = 'bf16[8,16,32]{2,1,0:T(8,128)(2,1)}', space=vmem, size = 0x8000, scoped, tag = 'scratch operand']
  %s0 = inlined_call_operand.vmem [shape: bf16[8,16,32], index: 0, kind: input, shape index: {}]
  %s1 = inlined_call_operand.vmem [shape: s32[16,1], index: 1, kind: input, shape index: {}]
  %s2 = inlined_call_operand.vmem [shape: f32[2,16,32], index: 2, kind: input, shape index: {}]
  %s3 = inlined_call_operand.vmem [shape: bf16[32,96], index: 3, kind: input, shape index: {}]
  %s4 = inlined_call_operand.vmem [shape: f32[1,96], index: 4, kind: input, shape index: {}]
  %s5 = inlined_call_operand.vmem [shape: bf16[32,96], index: 5, kind: input, shape index: {}]
  %s6 = inlined_call_operand.vmem [shape: f32[1,96], index: 6, kind: input, shape index: {}]
  %s7 = inlined_call_operand.vmem [shape: bf16[32,96], index: 7, kind: input, shape index: {}]
  %s8 = inlined_call_operand.vmem [shape: f32[1,96], index: 8, kind: input, shape index: {}]
  %s9 = inlined_call_operand.vmem [shape: bf16[32,96], index: 9, kind: input, shape index: {}]
  %s10 = inlined_call_operand.vmem [shape: f32[1,96], index: 10, kind: input, shape index: {}]
  %s11 = inlined_call_operand.vmem [shape: bf16[8,16,32], index: 11, kind: output, shape index: {0}]
  %s12 = inlined_call_operand.hbm [shape: f32[2,16,32], index: 12, kind: output, shape index: {1}]
  %13 = xla_tuple %s11, %s12
  %s14 = sld [smem:[#allocation0]]
  $region76: #{sparql_parser_loss.5} parent=0
    _
  %s16 = ssub.s32 1, %s14
  %s17 = scalar_select 0, %s16, %s14
  $region1: #{sparql_parser_loss.5} parent=0
    #allocation4 [shape = 'u8[16384]{0}', space=vmem, size = 0x4000, scoped, tag = 'output window, operand 1, single buffered']
    #allocation5 [shape = 's32[1]{0}', space=sflag, size = 0x4, scoped, tag = 'scoped memory for sparql_parser_loss.5']
    %18 = vsyncpa [#allocation5], 0
    // Predicated region
    $region2: #{sparql_parser_loss.5} parent=1 // pred_check
      _
    $region3: #{sparql_parser_loss.5} parent=1 // pred_check_branch
      %20 = sbr.rel (0) target = $region5
    $region4: #{sparql_parser_loss.5} parent=1 // pred_region
      _
    $region5: #{sparql_parser_loss.5} parent=1 // pred_fallthru
      _
    // Predicated region
    $region6: #{sparql_parser_loss.5} parent=1 // pred_check
      _
    $region7: #{sparql_parser_loss.5} parent=1 // pred_check_branch
      %22 = sbr.rel (0) target = $region9
    $region8: #{sparql_parser_loss.5} parent=1 // pred_region
      _
    $region9: #{sparql_parser_loss.5} parent=1 // pred_fallthru
      _
    // Predicated region
    $region10: #{sparql_parser_loss.5} parent=1 // pred_check
      _
    $region11: #{sparql_parser_loss.5} parent=1 // pred_check_branch
      %24 = sbr.rel (0) target = $region13
    $region12: #{sparql_parser_loss.5} parent=1 // pred_region
      _
    $region13: #{sparql_parser_loss.5} parent=1 // pred_fallthru
      _
    // Predicated region
    $region14: #{sparql_parser_loss.5} parent=1 // pred_check
      _
    $region15: #{sparql_parser_loss.5} parent=1 // pred_check_branch
      %26 = sbr.rel (0) target = $region17
    $region16: #{sparql_parser_loss.5} parent=1 // pred_region
      _
    $region17: #{sparql_parser_loss.5} parent=1 // pred_fallthru
      _
    // Predicated region
    $region18: #{sparql_parser_loss.5} parent=1 // pred_check
      _
    $region19: #{sparql_parser_loss.5} parent=1 // pred_check_branch
      %28 = sbr.rel (0) target = $region21
    $region20: #{sparql_parser_loss.5} parent=1 // pred_region
      _
    $region21: #{sparql_parser_loss.5} parent=1 // pred_fallthru
      _
    // Predicated region
    $region22: #{sparql_parser_loss.5} parent=1 // pred_check
      _
    $region23: #{sparql_parser_loss.5} parent=1 // pred_check_branch
      %30 = sbr.rel (0) target = $region25
    $region24: #{sparql_parser_loss.5} parent=1 // pred_region
      _
    $region25: #{sparql_parser_loss.5} parent=1 // pred_fallthru
      _
    // Predicated region
    $region26: #{sparql_parser_loss.5} parent=1 // pred_check
      _
    $region27: #{sparql_parser_loss.5} parent=1 // pred_check_branch
      %32 = sbr.rel (0) target = $region29
    $region28: #{sparql_parser_loss.5} parent=1 // pred_region
      _
    $region29: #{sparql_parser_loss.5} parent=1 // pred_fallthru
      _
    // Predicated region
    $region30: #{sparql_parser_loss.5} parent=1 // pred_check
      _
    $region31: #{sparql_parser_loss.5} parent=1 // pred_check_branch
      %34 = sbr.rel (0) target = $region33
    $region32: #{sparql_parser_loss.5} parent=1 // pred_region
      _
    $region33: #{sparql_parser_loss.5} parent=1 // pred_fallthru
      _
    // Predicated region
    $region34: #{sparql_parser_loss.5} parent=1 // pred_check
      _
    $region35: #{sparql_parser_loss.5} parent=1 // pred_check_branch
      %36 = sbr.rel (0) target = $region37
    $region36: #{sparql_parser_loss.5} parent=1 // pred_region
      _
    $region37: #{sparql_parser_loss.5} parent=1 // pred_fallthru
      _
    // Predicated region
    $region38: #{sparql_parser_loss.5} parent=1 // pred_check
      _
    $region39: #{sparql_parser_loss.5} parent=1 // pred_check_branch
      %38 = sbr.rel (0) target = $region41
    $region40: #{sparql_parser_loss.5} parent=1 // pred_region
      _
    $region41: #{sparql_parser_loss.5} parent=1 // pred_fallthru
      _
    // Predicated region
    $region42: #{sparql_parser_loss.5} parent=1 // pred_check
      _
    $region43: #{sparql_parser_loss.5} parent=1 // pred_check_branch
      %40 = sbr.rel (0) target = $region45
    $region44: #{sparql_parser_loss.5} parent=1 // pred_region
      _
    $region45: #{sparql_parser_loss.5} parent=1 // pred_fallthru
      _
    %v42 = vld [vmem:[%s1] sm:$0xff]
    %v43 = vld [vmem:[%s1 + $0x8] sm:$0xff]
    %v44 = vld [vmem:[%s5] sm:$0xf]
    %v45 = vld [vmem:[%s5 + $0x4] sm:$0xf]
    %v46 = vld [vmem:[%s5 + $0x8] sm:$0xf]
    %v47 = vld [vmem:[%s5 + $0xc] sm:$0xf]
    %v48 = vld [vmem:[%s6] sm:$0x1]
    %v49 = vld [vmem:[%s9] sm:$0xf]
    %v50 = vld [vmem:[%s9 + $0x4] sm:$0xf]
    %v51 = vld [vmem:[%s9 + $0x8] sm:$0xf]
    %v52 = vld [vmem:[%s9 + $0xc] sm:$0xf]
    %v53 = vld [vmem:[%s10] sm:$0x1]
    %v54 = vld [vmem:[%s0] sm:$0xf]
    %v55 = vld [vmem:[%s0 + $0x4] sm:$0xf]
    %v56 = vld [vmem:[%s0 + $0x8] sm:$0xf]
    %v57 = vld [vmem:[%s0 + $0xc] sm:$0xf]
    %v58 = vld [vmem:[%s0 + $0x10] sm:$0xf]
    %v59 = vld [vmem:[%s0 + $0x14] sm:$0xf]
    %v60 = vld [vmem:[%s0 + $0x18] sm:$0xf]
    %v61 = vld [vmem:[%s0 + $0x1c] sm:$0xf]
    %v62 = vld [vmem:[%s0 + $0x20] sm:$0xf]
    %v63 = vld [vmem:[%s0 + $0x24] sm:$0xf]
    %v64 = vld [vmem:[%s0 + $0x28] sm:$0xf]
    %v65 = vld [vmem:[%s0 + $0x2c] sm:$0xf]
    %v66 = vld [vmem:[%s0 + $0x30] sm:$0xf]
    %v67 = vld [vmem:[%s0 + $0x34] sm:$0xf]
    %v68 = vld [vmem:[%s0 + $0x38] sm:$0xf]
    %v69 = vld [vmem:[%s0 + $0x3c] sm:$0xf]
    %v70 = vld [vmem:[%s3] sm:$0xf]
    %v71 = vld [vmem:[%s3 + $0x4] sm:$0xf]
    %v72 = vld [vmem:[%s3 + $0x8] sm:$0xf]
    %v73 = vld [vmem:[%s3 + $0xc] sm:$0xf]
    %v74 = vld [vmem:[%s4] sm:$0x1]
    %v76 = vperm.slane %v74, 0
    %v94 = vunpack.c.l.b16 %v54
    %v95 = vunpack.c.l.b16 %v55
    %v96 = vunpack.c.l.b16 %v56
    %v97 = vunpack.c.l.b16 %v57
    %v98 = vunpack.c.l.b16 %v58
    %v99 = vunpack.c.l.b16 %v59
    %v100 = vunpack.c.l.b16 %v60
    %v101 = vunpack.c.l.b16 %v61
    %v102 = vunpack.c.l.b16 %v62
    %v103 = vunpack.c.l.b16 %v63
    %v104 = vunpack.c.l.b16 %v64
    %v105 = vunpack.c.l.b16 %v65
    %v106 = vunpack.c.l.b16 %v66
    %v107 = vunpack.c.l.b16 %v67
    %v108 = vunpack.c.l.b16 %v68
    %v109 = vunpack.c.l.b16 %v69
    %v110 = vpack.c.b16 %v95, %v94
    %v111 = vpack.c.b16 %v97, %v96
    %v112 = vpack.c.b16 %v99, %v98
    %v113 = vpack.c.b16 %v101, %v100
    %v114 = vpack.c.b16 %v103, %v102
    %v115 = vpack.c.b16 %v105, %v104
    %v116 = vpack.c.b16 %v107, %v106
    %v117 = vpack.c.b16 %v109, %v108
    %v122 = vunpack.c.l.b16 %v70
    %v123 = vunpack.c.l.b16 %v71
    %v124 = vunpack.c.l.b16 %v72
    %v125 = vunpack.c.l.b16 %v73
    %v126 = vpack.c.b16 %v123, %v122
    %v127 = vpack.c.b16 %v125, %v124
    %vm130 = vcmask 261120
    %v132 = vsel %vm130, %v110, 0
    %v135 = vsel %vm130, %v111, 0
    %v138 = vsel %vm130, %v112, 0
    %v141 = vsel %vm130, %v113, 0
    %v144 = vsel %vm130, %v114, 0
    %v147 = vsel %vm130, %v115, 0
    %v150 = vsel %vm130, %v116, 0
    %v153 = vsel %vm130, %v117, 0
    %155 = vmatpush.bf16.msra.mxu0 0
    %156 = vmatpush.bf16.msra.mxu0 0
    %157 = vmatpush.bf16.msra.mxu0 0
    %158 = vmatpush.bf16.msra.mxu0 0
    %159 = vmatpush.bf16.msra.mxu0 0
    %160 = vmatpush.bf16.msra.mxu0 0
    %161 = vmatpush.bf16.msra.mxu0 %v127
    %162 = vmatpush.bf16.msra.mxu0 %v126
    %163 = vmatmul.bf16.gmra.mxu0 %v132
    %v164 = vpop.f32.mrf.mxu0
    %v165 = vadd.f32 %v76, %v164
    %v166 = vpop.f32.mrf.mxu0
    %v167 = vadd.f32 %v76, %v166
    %168 = vmatmul.bf16.gmra.mxu0 %v135
    %v169 = vpop.f32.mrf.mxu0
    %v170 = vadd.f32 %v76, %v169
    %v171 = vpop.f32.mrf.mxu0
    %v172 = vadd.f32 %v76, %v171
    %173 = vmatmul.bf16.gmra.mxu0 %v138
    %v174 = vpop.f32.mrf.mxu0
    %v175 = vadd.f32 %v76, %v174
    %v176 = vpop.f32.mrf.mxu0
    %v177 = vadd.f32 %v76, %v176
    %178 = vmatmul.bf16.gmra.mxu0 %v141
    %v179 = vpop.f32.mrf.mxu0
    %v180 = vadd.f32 %v76, %v179
    %v181 = vpop.f32.mrf.mxu0
    %v182 = vadd.f32 %v76, %v181
    %183 = vmatmul.bf16.gmra.mxu0 %v144
    %v184 = vpop.f32.mrf.mxu0
    %v185 = vadd.f32 %v76, %v184
    %v186 = vpop.f32.mrf.mxu0
    %v187 = vadd.f32 %v76, %v186
    %188 = vmatmul.bf16.gmra.mxu0 %v147
    %v189 = vpop.f32.mrf.mxu0
    %v190 = vadd.f32 %v76, %v189
    %v191 = vpop.f32.mrf.mxu0
    %v192 = vadd.f32 %v76, %v191
    %193 = vmatmul.bf16.gmra.mxu0 %v150
    %v194 = vpop.f32.mrf.mxu0
    %v195 = vadd.f32 %v76, %v194
    %v196 = vpop.f32.mrf.mxu0
    %v197 = vadd.f32 %v76, %v196
    %198 = vmatmul.bf16.gmra.mxu0 %v153
    %v199 = vpop.f32.mrf.mxu0
    %v200 = vadd.f32 %v76, %v199
    %v201 = vpop.f32.mrf.mxu0
    %v202 = vadd.f32 %v76, %v201
    %203 = vdwg.mxu0
    %v204 = vpack.c.bf16 %v165, %v165
    %v205 = vpack.c.bf16 %v167, %v167
    %v206 = vpack.c.bf16 %v170, %v170
    %v207 = vpack.c.bf16 %v172, %v172
    %v208 = vpack.c.bf16 %v175, %v175
    %v209 = vpack.c.bf16 %v177, %v177
    %v210 = vpack.c.bf16 %v180, %v180
    %v211 = vpack.c.bf16 %v182, %v182
    %v212 = vpack.c.bf16 %v185, %v185
    %v213 = vpack.c.bf16 %v187, %v187
    %v214 = vpack.c.bf16 %v190, %v190
    %v215 = vpack.c.bf16 %v192, %v192
    %v216 = vpack.c.bf16 %v195, %v195
    %v217 = vpack.c.bf16 %v197, %v197
    %v218 = vpack.c.bf16 %v200, %v200
    %v219 = vpack.c.bf16 %v202, %v202
    %vm220 = vcmask 781312
    %221 = vst.msk [vmem:[#allocation2] sm:$0xf] %vm220, %v204
    %222 = vst.msk [vmem:[#allocation2 + $0x4] sm:$0xf] %vm220, %v205
    %223 = vst.msk [vmem:[#allocation2 + $0x8] sm:$0xf] %vm220, %v206
    %224 = vst.msk [vmem:[#allocation2 + $0xc] sm:$0xf] %vm220, %v207
    %225 = vst.msk [vmem:[#allocation2 + $0x10] sm:$0xf] %vm220, %v208
    %226 = vst.msk [vmem:[#allocation2 + $0x14] sm:$0xf] %vm220, %v209
    %227 = vst.msk [vmem:[#allocation2 + $0x18] sm:$0xf] %vm220, %v210
    %228 = vst.msk [vmem:[#allocation2 + $0x1c] sm:$0xf] %vm220, %v211
    %229 = vst.msk [vmem:[#allocation2 + $0x20] sm:$0xf] %vm220, %v212
    %230 = vst.msk [vmem:[#allocation2 + $0x24] sm:$0xf] %vm220, %v213
    %231 = vst.msk [vmem:[#allocation2 + $0x28] sm:$0xf] %vm220, %v214
    %232 = vst.msk [vmem:[#allocation2 + $0x2c] sm:$0xf] %vm220, %v215
    %233 = vst.msk [vmem:[#allocation2 + $0x30] sm:$0xf] %vm220, %v216
    %234 = vst.msk [vmem:[#allocation2 + $0x34] sm:$0xf] %vm220, %v217
    %235 = vst.msk [vmem:[#allocation2 + $0x38] sm:$0xf] %vm220, %v218
    %236 = vst.msk [vmem:[#allocation2 + $0x3c] sm:$0xf] %vm220, %v219
    %v237 = vld [vmem:[%s2] sm:$0xff]
    %v238 = vld [vmem:[%s2 + $0x8] sm:$0xff]
    loop: start=0, step=1, limit=8
    $region46: #{sparql_parser_loss.5} parent=1 // loop_pre_header
      _
    $region47: #{sparql_parser_loss.5} parent=1 // loop_header
      %s240 = sphi 0, %s244
      %p241 = scmp.ge.s32.totalorder %s240, 8
      %v245 = vphi %v237, %v406
      %v246 = vphi %v238, %v408
    $region48: #{sparql_parser_loss.5} parent=1 // loop_header_branch
      %243 = sbr.rel (%p241) target = $region52
    $region49: #{sparql_parser_loss.5} parent=1 // loop_body
      %v247 = vstv %s240
      %vm248 = vcmp.lt.s32.totalorder %v247, %v42
      %vm249 = vcmp.lt.s32.totalorder %v247, %v43
      %v250 = vpack.c.bf16 %v246, %v245
      %v252 = vperm.slane %v48, 0
      %v258 = vunpack.c.l.b16 %v44
      %v259 = vunpack.c.l.b16 %v45
      %v260 = vunpack.c.l.b16 %v46
      %v261 = vunpack.c.l.b16 %v47
      %v262 = vpack.c.b16 %v259, %v258
      %v263 = vpack.c.b16 %v261, %v260
      %v267 = vsel %vm130, %v250, 0
      %269 = vmatpush.bf16.msra.mxu0 0
      %270 = vmatpush.bf16.msra.mxu0 0
      %271 = vmatpush.bf16.msra.mxu0 0
      %272 = vmatpush.bf16.msra.mxu0 0
      %273 = vmatpush.bf16.msra.mxu0 0
      %274 = vmatpush.bf16.msra.mxu0 0
      %275 = vmatpush.bf16.msra.mxu0 %v263
      %276 = vmatpush.bf16.msra.mxu0 %v262
      %277 = vmatmul.bf16.gmra.mxu0 %v267
      %v278 = vpop.f32.mrf.mxu0
      %v279 = vadd.f32 %v252, %v278
      %v280 = vpop.f32.mrf.mxu0
      %v281 = vadd.f32 %v252, %v280
      %282 = vdwg.mxu0
      %s283 = smul.u32 %s240, 2
      %s284 = smul.addr %s283, 4
      %s285 = scalar_lea.vmem [#allocation2], %s284
      %v286 = vld [vmem:[%s285] sm:$0xf]
      %v287 = vld [vmem:[%s285 + $0x4] sm:$0xf]
      %v288 = vunpack.c.l.bf16 %v286
      %v289 = vunpack.c.l.bf16 %v287
      %v290 = vadd.f32 %v288, %v279
      %v291 = vadd.f32 %v289, %v281
      %v292 = vxor.u32 %v290, 2147483648
      %v293 = vxor.u32 %v291, 2147483648
      %v294 = vmul.f32 %v292, 1.442695
      %v295 = vpow.pop %v294
      %v296 = vmul.f32 %v293, 1.442695
      %v297 = vpow.pop %v296
      %v298 = vadd.f32 %v295, 1.0
      %v299 = vadd.f32 %v297, 1.0
      %v300 = vrcp.pop %v298
      %v301 = vmul.f32 %v298, %v300
      %v302 = vsub.f32 1.0, %v301
      %v303 = vmul.f32 %v300, %v302
      %v304 = vadd.f32 %v300, %v303
      %vm305 = vweird.f32 %v298
      %vm306 = vweird.f32 %v300
      %vm307 = vmor %vm305, %vm306
      %v308 = vsel %vm307, %v300, %v304
      %v309 = vand.u32 2147483647, %v298
      %vm310 = vcmp.eq.f32.partialorder %v309, 8.507059e+37
      %v311 = vand.u32 %v298, 2147483648
      %v312 = vor.u32 1.1754944e-38, %v311
      %v313 = vsel %vm310, %v312, %v308
      %v314 = vmul.f32 1.0, %v313
      %v315 = vrcp.pop %v299
      %v316 = vmul.f32 %v299, %v315
      %v317 = vsub.f32 1.0, %v316
      %v318 = vmul.f32 %v315, %v317
      %v319 = vadd.f32 %v315, %v318
      %vm320 = vweird.f32 %v299
      %vm321 = vweird.f32 %v315
      %vm322 = vmor %vm320, %vm321
      %v323 = vsel %vm322, %v315, %v319
      %v324 = vand.u32 2147483647, %v299
      %vm325 = vcmp.eq.f32.partialorder %v324, 8.507059e+37
      %v326 = vand.u32 %v299, 2147483648
      %v327 = vor.u32 1.1754944e-38, %v326
      %v328 = vsel %vm325, %v327, %v323
      %v329 = vmul.f32 1.0, %v328
      %332 = vrot.lane.b32.xlu0 %v279, 64
      %v333 = vpop.permute.xlu0 %332
      %334 = vrot.lane.b32.xlu0 %v281, 64
      %v335 = vpop.permute.xlu0 %334
      %v338 = vmul.f32 %v314, %v333
      %v339 = vmul.f32 %v329, %v335
      %342 = vrot.lane.b32.xlu0 %v338, 64
      %v343 = vpop.permute.xlu0 %342
      %344 = vrot.lane.b32.xlu0 %v339, 64
      %v345 = vpop.permute.xlu0 %344
      %v348 = vadd.f32 %v288, %v343
      %v349 = vadd.f32 %v289, %v345
      %v350 = vtanh.pop %v348
      %v351 = vtanh.pop %v349
      %v352 = vsub.f32 1.0, %v314
      %v353 = vsub.f32 1.0, %v329
      %356 = vrot.lane.b32.xlu0 %v350, 96
      %v357 = vpop.permute.xlu0 %356
      %358 = vrot.lane.b32.xlu0 %v351, 96
      %v359 = vpop.permute.xlu0 %358
      %v362 = vmul.f32 %v352, %v357
      %v363 = vmul.f32 %v353, %v359
      %366 = vrot.lane.b32.xlu0 %v245, 32
      %v367 = vpop.permute.xlu0 %366
      %368 = vrot.lane.b32.xlu0 %v246, 32
      %v369 = vpop.permute.xlu0 %368
      %v372 = vmul.f32 %v314, %v367
      %v373 = vmul.f32 %v329, %v369
      %v374 = vadd.f32 %v362, %v372
      %v375 = vadd.f32 %v363, %v373
      %v376 = vsel %vm248, 1, 0
      %v377 = vsel %vm249, 1, 0
      %378 = vset.pattern.permute.xlu0 0
      %379 = vperm.xlu0 %378, %v376
      %v380 = vpop.permute.xlu0 %379
      %381 = vset.pattern.permute.xlu0 0
      %382 = vperm.xlu0 %381, %v377
      %v383 = vpop.permute.xlu0 %382
      %vm384 = vcmp.eq.s32.totalorder %v380, 1
      %vm385 = vcmp.eq.s32.totalorder %v383, 1
      %v386 = vsel %vm384, %v374, %v367
      %v387 = vsel %vm385, %v375, %v369
      %v388 = vpack.c.bf16 %v386, %v386
      %v389 = vpack.c.bf16 %v387, %v387
      %392 = vrot.lane.b32.xlu0 %v388, 96
      %v393 = vpop.permute.xlu0 %392
      %394 = vrot.lane.b32.xlu0 %v389, 96
      %v395 = vpop.permute.xlu0 %394
      %s398 = smul.addr %s283, 4
      %s399 = scalar_lea.vmem [#allocation3], %s398
      %vm400 = vcmask 257024
      %401 = vst.msk [vmem:[%s399] sm:$0xf] %vm400, %v393
      %402 = vst.msk [vmem:[%s399 + $0x4] sm:$0xf] %vm400, %v395
      %405 = vrot.lane.b32.xlu0 %v386, 96
      %v406 = vpop.permute.xlu0 %405
      %407 = vrot.lane.b32.xlu0 %v387, 96
      %v408 = vpop.permute.xlu0 %407
    $region50: #{sparql_parser_loss.5} parent=1 // loop_footer
      %s244 = sadd.s32 1, %s240
    $region51: #{sparql_parser_loss.5} parent=1 // loop_footer_branch
      %239 = sbr.rel target = $region47
    $region52: #{sparql_parser_loss.5} parent=1 // loop_exit
      _
    %411 = vst.msk [vmem:[#allocation4] sm:$0xff] %vm130, %v245
    %412 = vst.msk [vmem:[#allocation4 + $0x8] sm:$0xff] %vm130, %v246
    %v413 = vld [vmem:[#allocation3] sm:$0xf]
    %v414 = vld [vmem:[#allocation3 + $0x4] sm:$0xf]
    %v415 = vld [vmem:[#allocation3 + $0x8] sm:$0xf]
    %v416 = vld [vmem:[#allocation3 + $0xc] sm:$0xf]
    %v417 = vld [vmem:[#allocation3 + $0x10] sm:$0xf]
    %v418 = vld [vmem:[#allocation3 + $0x14] sm:$0xf]
    %v419 = vld [vmem:[#allocation3 + $0x18] sm:$0xf]
    %v420 = vld [vmem:[#allocation3 + $0x1c] sm:$0xf]
    %v421 = vld [vmem:[#allocation3 + $0x20] sm:$0xf]
    %v422 = vld [vmem:[#allocation3 + $0x24] sm:$0xf]
    %v423 = vld [vmem:[#allocation3 + $0x28] sm:$0xf]
    %v424 = vld [vmem:[#allocation3 + $0x2c] sm:$0xf]
    %v425 = vld [vmem:[#allocation3 + $0x30] sm:$0xf]
    %v426 = vld [vmem:[#allocation3 + $0x34] sm:$0xf]
    %v427 = vld [vmem:[#allocation3 + $0x38] sm:$0xf]
    %v428 = vld [vmem:[#allocation3 + $0x3c] sm:$0xf]
    %v429 = vld [vmem:[%s7] sm:$0xf]
    %v430 = vld [vmem:[%s7 + $0x4] sm:$0xf]
    %v431 = vld [vmem:[%s7 + $0x8] sm:$0xf]
    %v432 = vld [vmem:[%s7 + $0xc] sm:$0xf]
    %v433 = vld [vmem:[%s8] sm:$0x1]
    %v435 = vperm.slane %v433, 0
    %v453 = vunpack.c.l.b16 %v413
    %v454 = vunpack.c.l.b16 %v414
    %v455 = vunpack.c.l.b16 %v415
    %v456 = vunpack.c.l.b16 %v416
    %v457 = vunpack.c.l.b16 %v417
    %v458 = vunpack.c.l.b16 %v418
    %v459 = vunpack.c.l.b16 %v419
    %v460 = vunpack.c.l.b16 %v420
    %v461 = vunpack.c.l.b16 %v421
    %v462 = vunpack.c.l.b16 %v422
    %v463 = vunpack.c.l.b16 %v423
    %v464 = vunpack.c.l.b16 %v424
    %v465 = vunpack.c.l.b16 %v425
    %v466 = vunpack.c.l.b16 %v426
    %v467 = vunpack.c.l.b16 %v427
    %v468 = vunpack.c.l.b16 %v428
    %v469 = vpack.c.b16 %v454, %v453
    %v470 = vpack.c.b16 %v456, %v455
    %v471 = vpack.c.b16 %v458, %v457
    %v472 = vpack.c.b16 %v460, %v459
    %v473 = vpack.c.b16 %v462, %v461
    %v474 = vpack.c.b16 %v464, %v463
    %v475 = vpack.c.b16 %v466, %v465
    %v476 = vpack.c.b16 %v468, %v467
    %v481 = vunpack.c.l.b16 %v429
    %v482 = vunpack.c.l.b16 %v430
    %v483 = vunpack.c.l.b16 %v431
    %v484 = vunpack.c.l.b16 %v432
    %v485 = vpack.c.b16 %v482, %v481
    %v486 = vpack.c.b16 %v484, %v483
    %v490 = vsel %vm130, %v469, 0
    %v493 = vsel %vm130, %v470, 0
    %v496 = vsel %vm130, %v471, 0
    %v499 = vsel %vm130, %v472, 0
    %v502 = vsel %vm130, %v473, 0
    %v505 = vsel %vm130, %v474, 0
    %v508 = vsel %vm130, %v475, 0
    %v511 = vsel %vm130, %v476, 0
    %513 = vmatpush.bf16.msra.mxu0 0
    %514 = vmatpush.bf16.msra.mxu0 0
    %515 = vmatpush.bf16.msra.mxu0 0
    %516 = vmatpush.bf16.msra.mxu0 0
    %517 = vmatpush.bf16.msra.mxu0 0
    %518 = vmatpush.bf16.msra.mxu0 0
    %519 = vmatpush.bf16.msra.mxu0 %v486
    %520 = vmatpush.bf16.msra.mxu0 %v485
    %521 = vmatmul.bf16.gmra.mxu0 %v490
    %v522 = vpop.f32.mrf.mxu0
    %v523 = vadd.f32 %v435, %v522
    %v524 = vpop.f32.mrf.mxu0
    %v525 = vadd.f32 %v435, %v524
    %526 = vmatmul.bf16.gmra.mxu0 %v493
    %v527 = vpop.f32.mrf.mxu0
    %v528 = vadd.f32 %v435, %v527
    %v529 = vpop.f32.mrf.mxu0
    %v530 = vadd.f32 %v435, %v529
    %531 = vmatmul.bf16.gmra.mxu0 %v496
    %v532 = vpop.f32.mrf.mxu0
    %v533 = vadd.f32 %v435, %v532
    %v534 = vpop.f32.mrf.mxu0
    %v535 = vadd.f32 %v435, %v534
    %536 = vmatmul.bf16.gmra.mxu0 %v499
    %v537 = vpop.f32.mrf.mxu0
    %v538 = vadd.f32 %v435, %v537
    %v539 = vpop.f32.mrf.mxu0
    %v540 = vadd.f32 %v435, %v539
    %541 = vmatmul.bf16.gmra.mxu0 %v502
    %v542 = vpop.f32.mrf.mxu0
    %v543 = vadd.f32 %v435, %v542
    %v544 = vpop.f32.mrf.mxu0
    %v545 = vadd.f32 %v435, %v544
    %546 = vmatmul.bf16.gmra.mxu0 %v505
    %v547 = vpop.f32.mrf.mxu0
    %v548 = vadd.f32 %v435, %v547
    %v549 = vpop.f32.mrf.mxu0
    %v550 = vadd.f32 %v435, %v549
    %551 = vmatmul.bf16.gmra.mxu0 %v508
    %v552 = vpop.f32.mrf.mxu0
    %v553 = vadd.f32 %v435, %v552
    %v554 = vpop.f32.mrf.mxu0
    %v555 = vadd.f32 %v435, %v554
    %556 = vmatmul.bf16.gmra.mxu0 %v511
    %v557 = vpop.f32.mrf.mxu0
    %v558 = vadd.f32 %v435, %v557
    %v559 = vpop.f32.mrf.mxu0
    %v560 = vadd.f32 %v435, %v559
    %561 = vdwg.mxu0
    %v562 = vpack.c.bf16 %v523, %v523
    %v563 = vpack.c.bf16 %v525, %v525
    %v564 = vpack.c.bf16 %v528, %v528
    %v565 = vpack.c.bf16 %v530, %v530
    %v566 = vpack.c.bf16 %v533, %v533
    %v567 = vpack.c.bf16 %v535, %v535
    %v568 = vpack.c.bf16 %v538, %v538
    %v569 = vpack.c.bf16 %v540, %v540
    %v570 = vpack.c.bf16 %v543, %v543
    %v571 = vpack.c.bf16 %v545, %v545
    %v572 = vpack.c.bf16 %v548, %v548
    %v573 = vpack.c.bf16 %v550, %v550
    %v574 = vpack.c.bf16 %v553, %v553
    %v575 = vpack.c.bf16 %v555, %v555
    %v576 = vpack.c.bf16 %v558, %v558
    %v577 = vpack.c.bf16 %v560, %v560
    %578 = vst.msk [vmem:[#allocation2] sm:$0xf] %vm220, %v562
    %579 = vst.msk [vmem:[#allocation2 + $0x4] sm:$0xf] %vm220, %v563
    %580 = vst.msk [vmem:[#allocation2 + $0x8] sm:$0xf] %vm220, %v564
    %581 = vst.msk [vmem:[#allocation2 + $0xc] sm:$0xf] %vm220, %v565
    %582 = vst.msk [vmem:[#allocation2 + $0x10] sm:$0xf] %vm220, %v566
    %583 = vst.msk [vmem:[#allocation2 + $0x14] sm:$0xf] %vm220, %v567
    %584 = vst.msk [vmem:[#allocation2 + $0x18] sm:$0xf] %vm220, %v568
    %585 = vst.msk [vmem:[#allocation2 + $0x1c] sm:$0xf] %vm220, %v569
    %586 = vst.msk [vmem:[#allocation2 + $0x20] sm:$0xf] %vm220, %v570
    %587 = vst.msk [vmem:[#allocation2 + $0x24] sm:$0xf] %vm220, %v571
    %588 = vst.msk [vmem:[#allocation2 + $0x28] sm:$0xf] %vm220, %v572
    %589 = vst.msk [vmem:[#allocation2 + $0x2c] sm:$0xf] %vm220, %v573
    %590 = vst.msk [vmem:[#allocation2 + $0x30] sm:$0xf] %vm220, %v574
    %591 = vst.msk [vmem:[#allocation2 + $0x34] sm:$0xf] %vm220, %v575
    %592 = vst.msk [vmem:[#allocation2 + $0x38] sm:$0xf] %vm220, %v576
    %593 = vst.msk [vmem:[#allocation2 + $0x3c] sm:$0xf] %vm220, %v577
    %s594 = scalar_lea.vmem %s2, 16
    %v595 = vld [vmem:[%s594] sm:$0xff]
    %v596 = vld [vmem:[%s594 + $0x8] sm:$0xff]
    loop: start=0, step=1, limit=8
    $region53: #{sparql_parser_loss.5} parent=1 // loop_pre_header
      _
    $region54: #{sparql_parser_loss.5} parent=1 // loop_header
      %s598 = sphi 0, %s602
      %p599 = scmp.ge.s32.totalorder %s598, 8
      %v603 = vphi %v595, %v766
      %v604 = vphi %v596, %v768
    $region55: #{sparql_parser_loss.5} parent=1 // loop_header_branch
      %601 = sbr.rel (%p599) target = $region59
    $region56: #{sparql_parser_loss.5} parent=1 // loop_body
      %v605 = vstv %s598
      %vm606 = vcmp.lt.s32.totalorder %v605, %v42
      %vm607 = vcmp.lt.s32.totalorder %v605, %v43
      %v608 = vpack.c.bf16 %v604, %v603
      %v610 = vperm.slane %v53, 0
      %v616 = vunpack.c.l.b16 %v49
      %v617 = vunpack.c.l.b16 %v50
      %v618 = vunpack.c.l.b16 %v51
      %v619 = vunpack.c.l.b16 %v52
      %v620 = vpack.c.b16 %v617, %v616
      %v621 = vpack.c.b16 %v619, %v618
      %v625 = vsel %vm130, %v608, 0
      %627 = vmatpush.bf16.msra.mxu0 0
      %628 = vmatpush.bf16.msra.mxu0 0
      %629 = vmatpush.bf16.msra.mxu0 0
      %630 = vmatpush.bf16.msra.mxu0 0
      %631 = vmatpush.bf16.msra.mxu0 0
      %632 = vmatpush.bf16.msra.mxu0 0
      %633 = vmatpush.bf16.msra.mxu0 %v621
      %634 = vmatpush.bf16.msra.mxu0 %v620
      %635 = vmatmul.bf16.gmra.mxu0 %v625
      %v636 = vpop.f32.mrf.mxu0
      %v637 = vadd.f32 %v610, %v636
      %v638 = vpop.f32.mrf.mxu0
      %v639 = vadd.f32 %v610, %v638
      %640 = vdwg.mxu0
      %s641 = smul.u32 %s598, 2
      %s642 = smul.addr %s641, 4
      %s643 = scalar_lea.vmem [#allocation2], %s642
      %v644 = vld [vmem:[%s643] sm:$0xf]
      %v645 = vld [vmem:[%s643 + $0x4] sm:$0xf]
      %v646 = vunpack.c.l.bf16 %v644
      %v647 = vunpack.c.l.bf16 %v645
      %v648 = vadd.f32 %v646, %v637
      %v649 = vadd.f32 %v647, %v639
      %v650 = vxor.u32 %v648, 2147483648
      %v651 = vxor.u32 %v649, 2147483648
      %v652 = vmul.f32 %v650, 1.442695
      %v653 = vpow.pop %v652
      %v654 = vmul.f32 %v651, 1.442695
      %v655 = vpow.pop %v654
      %v656 = vadd.f32 %v653, 1.0
      %v657 = vadd.f32 %v655, 1.0
      %v658 = vrcp.pop %v656
      %v659 = vmul.f32 %v656, %v658
      %v660 = vsub.f32 1.0, %v659
      %v661 = vmul.f32 %v658, %v660
      %v662 = vadd.f32 %v658, %v661
      %vm663 = vweird.f32 %v656
      %vm664 = vweird.f32 %v658
      %vm665 = vmor %vm663, %vm664
      %v666 = vsel %vm665, %v658, %v662
      %v667 = vand.u32 2147483647, %v656
      %vm668 = vcmp.eq.f32.partialorder %v667, 8.507059e+37
      %v669 = vand.u32 %v656, 2147483648
      %v670 = vor.u32 1.1754944e-38, %v669
      %v671 = vsel %vm668, %v670, %v666
      %v672 = vmul.f32 1.0, %v671
      %v673 = vrcp.pop %v657
      %v674 = vmul.f32 %v657, %v673
      %v675 = vsub.f32 1.0, %v674
      %v676 = vmul.f32 %v673, %v675
      %v677 = vadd.f32 %v673, %v676
      %vm678 = vweird.f32 %v657
      %vm679 = vweird.f32 %v673
      %vm680 = vmor %vm678, %vm679
      %v681 = vsel %vm680, %v673, %v677
      %v682 = vand.u32 2147483647, %v657
      %vm683 = vcmp.eq.f32.partialorder %v682, 8.507059e+37
      %v684 = vand.u32 %v657, 2147483648
      %v685 = vor.u32 1.1754944e-38, %v684
      %v686 = vsel %vm683, %v685, %v681
      %v687 = vmul.f32 1.0, %v686
      %690 = vrot.lane.b32.xlu0 %v637, 64
      %v691 = vpop.permute.xlu0 %690
      %692 = vrot.lane.b32.xlu0 %v639, 64
      %v693 = vpop.permute.xlu0 %692
      %v696 = vmul.f32 %v672, %v691
      %v697 = vmul.f32 %v687, %v693
      %700 = vrot.lane.b32.xlu0 %v696, 64
      %v701 = vpop.permute.xlu0 %700
      %702 = vrot.lane.b32.xlu0 %v697, 64
      %v703 = vpop.permute.xlu0 %702
      %v706 = vadd.f32 %v646, %v701
      %v707 = vadd.f32 %v647, %v703
      %v708 = vtanh.pop %v706
      %v709 = vtanh.pop %v707
      %v710 = vsub.f32 1.0, %v672
      %v711 = vsub.f32 1.0, %v687
      %714 = vrot.lane.b32.xlu0 %v708, 96
      %v715 = vpop.permute.xlu0 %714
      %716 = vrot.lane.b32.xlu0 %v709, 96
      %v717 = vpop.permute.xlu0 %716
      %v720 = vmul.f32 %v710, %v715
      %v721 = vmul.f32 %v711, %v717
      %724 = vrot.lane.b32.xlu0 %v603, 32
      %v725 = vpop.permute.xlu0 %724
      %726 = vrot.lane.b32.xlu0 %v604, 32
      %v727 = vpop.permute.xlu0 %726
      %v730 = vmul.f32 %v672, %v725
      %v731 = vmul.f32 %v687, %v727
      %v732 = vadd.f32 %v720, %v730
      %v733 = vadd.f32 %v721, %v731
      %v734 = vsel %vm606, 1, 0
      %v735 = vsel %vm607, 1, 0
      %736 = vset.pattern.permute.xlu0 0
      %737 = vperm.xlu0 %736, %v734
      %v738 = vpop.permute.xlu0 %737
      %739 = vset.pattern.permute.xlu0 0
      %740 = vperm.xlu0 %739, %v735
      %v741 = vpop.permute.xlu0 %740
      %vm742 = vcmp.eq.s32.totalorder %v738, 1
      %vm743 = vcmp.eq.s32.totalorder %v741, 1
      %v744 = vsel %vm742, %v732, %v725
      %v745 = vsel %vm743, %v733, %v727
      %v746 = vsel %vm742, %v732, 0.0
      %v747 = vsel %vm743, %v733, 0.0
      %v748 = vpack.c.bf16 %v746, %v746
      %v749 = vpack.c.bf16 %v747, %v747
      %752 = vrot.lane.b32.xlu0 %v748, 96
      %v753 = vpop.permute.xlu0 %752
      %754 = vrot.lane.b32.xlu0 %v749, 96
      %v755 = vpop.permute.xlu0 %754
      %s758 = smul.addr %s641, 4
      %s759 = scalar_lea.vmem %s11, %s758
      %vm760 = vcmask 257024
      %761 = vst.msk [vmem:[%s759] sm:$0xf] %vm760, %v753
      %762 = vst.msk [vmem:[%s759 + $0x4] sm:$0xf] %vm760, %v755
      %765 = vrot.lane.b32.xlu0 %v744, 96
      %v766 = vpop.permute.xlu0 %765
      %767 = vrot.lane.b32.xlu0 %v745, 96
      %v768 = vpop.permute.xlu0 %767
    $region57: #{sparql_parser_loss.5} parent=1 // loop_footer
      %s602 = sadd.s32 1, %s598
    $region58: #{sparql_parser_loss.5} parent=1 // loop_footer_branch
      %597 = sbr.rel target = $region54
    $region59: #{sparql_parser_loss.5} parent=1 // loop_exit
      _
    %s771 = scalar_lea.vmem [#allocation4], 16
    %772 = vst.msk [vmem:[%s771] sm:$0xff] %vm130, %v603
    %773 = vst.msk [vmem:[%s771 + $0x8] sm:$0xff] %vm130, %v604
    // Predicated region
    $region60: #{sparql_parser_loss.5} parent=1 // pred_check
      _
    $region61: #{sparql_parser_loss.5} parent=1 // pred_check_branch
      %775 = sbr.rel (0) target = $region63
    $region62: #{sparql_parser_loss.5} parent=1 // pred_region
      _
    $region63: #{sparql_parser_loss.5} parent=1 // pred_fallthru
      _
    // Predicated region
    $region64: #{sparql_parser_loss.5} parent=1 // pred_check
      _
    $region65: #{sparql_parser_loss.5} parent=1 // pred_check_branch
      %777 = sbr.rel (0) target = $region67
    $region66: #{sparql_parser_loss.5} parent=1 // pred_region
      %779 = vsyncadd [#allocation5], 0
      %s780 = sshll.u32 [#allocation4], 4
      %s781 = int_to_ptr.vmem [resolvable:$true] %s780
      %s782 = sshll.u32 %s12, 4
      %s783 = int_to_ptr.hbm [resolvable:$true] %s782
      %788 = dma.vmem_to_hbm [thread:$0]  %s781, 512, %s783, [#allocation5], 128, 128, 8
    $region67: #{sparql_parser_loss.5} parent=1 // pred_fallthru
      _
    // Predicated region
    $region68: #{sparql_parser_loss.5} parent=1 // pred_check
      _
    $region69: #{sparql_parser_loss.5} parent=1 // pred_check_branch
      %790 = sbr.rel (0) target = $region71
    $region70: #{sparql_parser_loss.5} parent=1 // pred_region
      _
    $region71: #{sparql_parser_loss.5} parent=1 // pred_fallthru
      _
    // Predicated region
    $region72: #{sparql_parser_loss.5} parent=1 // pred_check
      _
    $region73: #{sparql_parser_loss.5} parent=1 // pred_check_branch
      %792 = sbr.rel (0) target = $region75
    $region74: #{sparql_parser_loss.5} parent=1 // pred_region
      %794 = dma.done [#allocation5], 512
    $region75: #{sparql_parser_loss.5} parent=1 // pred_fallthru
      _
    %795 = vsyncpa [#allocation5], 1

// kernel: sparql_parser_loss.7
$region0: #{sparql_parser_loss.7}
  #allocation0 [shape = 'u32[]', space=smem, size = 0x4, offset = 0x4, fixed_abs, tag = 'smem constant byte address 0x4 - core index']
  #allocation1 [shape = 'u32[72,128]{1,0:T(1,128)}', space=vmem, size = 0x9000, scoped, tag = 'internal scratch']
  #allocation2 [shape = 'bf16[16,1024]{1,0:T(8,128)(2,1)}', space=vmem, size = 0x8000, scoped, tag = 'scratch operand']
  #allocation3 [shape = 'f32[16,1]{1,0:T(8,128)}', space=vmem, size = 0x2000, scoped, tag = 'scratch operand']
  #allocation4 [shape = 'f32[16,1]{1,0:T(8,128)}', space=vmem, size = 0x2000, scoped, tag = 'scratch operand']
  #allocation5 [shape = 'f32[16,1]{1,0:T(8,128)}', space=vmem, size = 0x2000, scoped, tag = 'scratch operand']
  %s0 = inlined_call_operand.vmem [shape: bf16[16,32], index: 0, kind: input, shape index: {}]
  %s1 = inlined_call_operand.vmem [shape: s32[16,1], index: 1, kind: input, shape index: {}]
  %s2 = inlined_call_operand.vmem [shape: bf16[32,1024], index: 2, kind: input, shape index: {}]
  %s3 = inlined_call_operand.vmem [shape: f32[1,1024], index: 3, kind: input, shape index: {}]
  %s4 = inlined_call_operand.vmem [shape: bf16[1024,128], index: 4, kind: input, shape index: {}]
  %s5 = inlined_call_operand.vmem [shape: f32[1,128], index: 5, kind: input, shape index: {}]
  %s6 = inlined_call_operand.vmem [shape: f32[1,128], index: 6, kind: output, shape index: {}]
  %s7 = sld [smem:[#allocation0]]
  $region42: #{sparql_parser_loss.7} parent=0
    _
  %s9 = ssub.s32 1, %s7
  %s10 = scalar_select 0, %s9, %s7
  // Predicated region
  $region2: #{sparql_parser_loss.7} parent=0 // pred_check
    _
  $region3: #{sparql_parser_loss.7} parent=0 // pred_check_branch
    %12 = sbr.rel (0) target = $region5
  $region4: #{sparql_parser_loss.7} parent=0 // pred_region
    _
  $region5: #{sparql_parser_loss.7} parent=0 // pred_fallthru
    _
  // Predicated region
  $region6: #{sparql_parser_loss.7} parent=0 // pred_check
    _
  $region7: #{sparql_parser_loss.7} parent=0 // pred_check_branch
    %14 = sbr.rel (0) target = $region9
  $region8: #{sparql_parser_loss.7} parent=0 // pred_region
    _
  $region9: #{sparql_parser_loss.7} parent=0 // pred_fallthru
    _
  // Predicated region
  $region10: #{sparql_parser_loss.7} parent=0 // pred_check
    _
  $region11: #{sparql_parser_loss.7} parent=0 // pred_check_branch
    %16 = sbr.rel (0) target = $region13
  $region12: #{sparql_parser_loss.7} parent=0 // pred_region
    _
  $region13: #{sparql_parser_loss.7} parent=0 // pred_fallthru
    _
  // Predicated region
  $region14: #{sparql_parser_loss.7} parent=0 // pred_check
    _
  $region15: #{sparql_parser_loss.7} parent=0 // pred_check_branch
    %18 = sbr.rel (0) target = $region17
  $region16: #{sparql_parser_loss.7} parent=0 // pred_region
    _
  $region17: #{sparql_parser_loss.7} parent=0 // pred_fallthru
    _
  // Predicated region
  $region18: #{sparql_parser_loss.7} parent=0 // pred_check
    _
  $region19: #{sparql_parser_loss.7} parent=0 // pred_check_branch
    %20 = sbr.rel (0) target = $region21
  $region20: #{sparql_parser_loss.7} parent=0 // pred_region
    _
  $region21: #{sparql_parser_loss.7} parent=0 // pred_fallthru
    _
  // Predicated region
  $region22: #{sparql_parser_loss.7} parent=0 // pred_check
    _
  $region23: #{sparql_parser_loss.7} parent=0 // pred_check_branch
    %22 = sbr.rel (0) target = $region25
  $region24: #{sparql_parser_loss.7} parent=0 // pred_region
    _
  $region25: #{sparql_parser_loss.7} parent=0 // pred_fallthru
    _
  %p24 = scmp.eq.s32.totalorder 0, 0
  // Predicated region
  $region26: #{sparql_parser_loss.7} parent=0 // pred_check
    %p25 = pneg %p24
  $region27: #{sparql_parser_loss.7} parent=0 // pred_check_branch
    %27 = sbr.rel (%p25) target = $region29
  $region28: #{sparql_parser_loss.7} parent=0 // pred_region
    %v28 = vld [vmem:[%s0] sm:$0xf]
    %v29 = vld [vmem:[%s0 + $0x4] sm:$0xf]
    %v30 = vld [vmem:[%s2] sm:$0xff]
    %v31 = vld [vmem:[%s2 + $0x8] sm:$0xff]
    %v32 = vld [vmem:[%s2 + $0x10] sm:$0xff]
    %v33 = vld [vmem:[%s2 + $0x18] sm:$0xff]
    %v34 = vld [vmem:[%s2 + $0x20] sm:$0xff]
    %v35 = vld [vmem:[%s2 + $0x28] sm:$0xff]
    %v36 = vld [vmem:[%s2 + $0x30] sm:$0xff]
    %v37 = vld [vmem:[%s2 + $0x38] sm:$0xff]
    %v38 = vld [vmem:[%s2 + $0x40] sm:$0xff]
    %v39 = vld [vmem:[%s2 + $0x48] sm:$0xff]
    %v40 = vld [vmem:[%s2 + $0x50] sm:$0xff]
    %v41 = vld [vmem:[%s2 + $0x58] sm:$0xff]
    %v42 = vld [vmem:[%s2 + $0x60] sm:$0xff]
    %v43 = vld [vmem:[%s2 + $0x68] sm:$0xff]
    %v44 = vld [vmem:[%s2 + $0x70] sm:$0xff]
    %v45 = vld [vmem:[%s2 + $0x78] sm:$0xff]
    %v46 = vld [vmem:[%s3] sm:$0xff]
    %v48 = vperm.slane %v46, 0
    %v49 = vperm.slane %v46, 1
    %v50 = vperm.slane %v46, 2
    %v51 = vperm.slane %v46, 3
    %v52 = vperm.slane %v46, 4
    %v53 = vperm.slane %v46, 5
    %v54 = vperm.slane %v46, 6
    %v55 = vperm.slane %v46, 7
    %v66 = vunpack.c.l.b16 %v28
    %v67 = vunpack.c.l.b16 %v29
    %v68 = vpack.c.b16 %v67, %v66
    %v85 = vunpack.c.l.b16 %v30
    %v86 = vunpack.c.h.b16 %v30
    %v87 = vunpack.c.l.b16 %v31
    %v88 = vunpack.c.h.b16 %v31
    %v89 = vunpack.c.l.b16 %v32
    %v90 = vunpack.c.h.b16 %v32
    %v91 = vunpack.c.l.b16 %v33
    %v92 = vunpack.c.h.b16 %v33
    %v93 = vunpack.c.l.b16 %v34
    %v94 = vunpack.c.h.b16 %v34
    %v95 = vunpack.c.l.b16 %v35
    %v96 = vunpack.c.h.b16 %v35
    %v97 = vunpack.c.l.b16 %v36
    %v98 = vunpack.c.h.b16 %v36
    %v99 = vunpack.c.l.b16 %v37
    %v100 = vunpack.c.h.b16 %v37
    %v101 = vunpack.c.l.b16 %v38
    %v102 = vunpack.c.h.b16 %v38
    %v103 = vunpack.c.l.b16 %v39
    %v104 = vunpack.c.h.b16 %v39
    %v105 = vunpack.c.l.b16 %v40
    %v106 = vunpack.c.h.b16 %v40
    %v107 = vunpack.c.l.b16 %v41
    %v108 = vunpack.c.h.b16 %v41
    %v109 = vunpack.c.l.b16 %v42
    %v110 = vunpack.c.h.b16 %v42
    %v111 = vunpack.c.l.b16 %v43
    %v112 = vunpack.c.h.b16 %v43
    %v113 = vunpack.c.l.b16 %v44
    %v114 = vunpack.c.h.b16 %v44
    %v115 = vunpack.c.l.b16 %v45
    %v116 = vunpack.c.h.b16 %v45
    %v117 = vpack.c.b16 %v93, %v85
    %v118 = vpack.c.b16 %v94, %v86
    %v119 = vpack.c.b16 %v95, %v87
    %v120 = vpack.c.b16 %v96, %v88
    %v121 = vpack.c.b16 %v97, %v89
    %v122 = vpack.c.b16 %v98, %v90
    %v123 = vpack.c.b16 %v99, %v91
    %v124 = vpack.c.b16 %v100, %v92
    %v125 = vpack.c.b16 %v109, %v101
    %v126 = vpack.c.b16 %v110, %v102
    %v127 = vpack.c.b16 %v111, %v103
    %v128 = vpack.c.b16 %v112, %v104
    %v129 = vpack.c.b16 %v113, %v105
    %v130 = vpack.c.b16 %v114, %v106
    %v131 = vpack.c.b16 %v115, %v107
    %v132 = vpack.c.b16 %v116, %v108
    %vm149 = vcmask 261120
    %v151 = vsel %vm149, %v68, 0
    %153 = vmatpush.bf16.msra.mxu0 0
    %154 = vmatpush.bf16.msra.mxu0 0
    %155 = vmatpush.bf16.msra.mxu0 0
    %156 = vmatpush.bf16.msra.mxu0 0
    %157 = vmatpush.bf16.msra.mxu0 0
    %158 = vmatpush.bf16.msra.mxu0 0
    %159 = vmatpush.bf16.msra.mxu0 %v125
    %160 = vmatpush.bf16.msra.mxu0 %v117
    %161 = vmatmul.bf16.gmra.mxu0 %v151
    %v162 = vpop.f32.mrf.mxu0
    %v163 = vadd.f32 %v48, %v162
    %v164 = vpop.f32.mrf.mxu0
    %v165 = vadd.f32 %v48, %v164
    %166 = vdwg.mxu0
    %167 = vmatpush.bf16.msra.mxu0 0
    %168 = vmatpush.bf16.msra.mxu0 0
    %169 = vmatpush.bf16.msra.mxu0 0
    %170 = vmatpush.bf16.msra.mxu0 0
    %171 = vmatpush.bf16.msra.mxu0 0
    %172 = vmatpush.bf16.msra.mxu0 0
    %173 = vmatpush.bf16.msra.mxu0 %v126
    %174 = vmatpush.bf16.msra.mxu0 %v118
    %175 = vmatmul.bf16.gmra.mxu0 %v151
    %v176 = vpop.f32.mrf.mxu0
    %v177 = vadd.f32 %v49, %v176
    %v178 = vpop.f32.mrf.mxu0
    %v179 = vadd.f32 %v49, %v178
    %180 = vdwg.mxu0
    %181 = vmatpush.bf16.msra.mxu0 0
    %182 = vmatpush.bf16.msra.mxu0 0
    %183 = vmatpush.bf16.msra.mxu0 0
    %184 = vmatpush.bf16.msra.mxu0 0
    %185 = vmatpush.bf16.msra.mxu0 0
    %186 = vmatpush.bf16.msra.mxu0 0
    %187 = vmatpush.bf16.msra.mxu0 %v127
    %188 = vmatpush.bf16.msra.mxu0 %v119
    %189 = vmatmul.bf16.gmra.mxu0 %v151
    %v190 = vpop.f32.mrf.mxu0
    %v191 = vadd.f32 %v50, %v190
    %v192 = vpop.f32.mrf.mxu0
    %v193 = vadd.f32 %v50, %v192
    %194 = vdwg.mxu0
    %195 = vmatpush.bf16.msra.mxu0 0
    %196 = vmatpush.bf16.msra.mxu0 0
    %197 = vmatpush.bf16.msra.mxu0 0
    %198 = vmatpush.bf16.msra.mxu0 0
    %199 = vmatpush.bf16.msra.mxu0 0
    %200 = vmatpush.bf16.msra.mxu0 0
    %201 = vmatpush.bf16.msra.mxu0 %v128
    %202 = vmatpush.bf16.msra.mxu0 %v120
    %203 = vmatmul.bf16.gmra.mxu0 %v151
    %v204 = vpop.f32.mrf.mxu0
    %v205 = vadd.f32 %v51, %v204
    %v206 = vpop.f32.mrf.mxu0
    %v207 = vadd.f32 %v51, %v206
    %208 = vdwg.mxu0
    %209 = vmatpush.bf16.msra.mxu0 0
    %210 = vmatpush.bf16.msra.mxu0 0
    %211 = vmatpush.bf16.msra.mxu0 0
    %212 = vmatpush.bf16.msra.mxu0 0
    %213 = vmatpush.bf16.msra.mxu0 0
    %214 = vmatpush.bf16.msra.mxu0 0
    %215 = vmatpush.bf16.msra.mxu0 %v129
    %216 = vmatpush.bf16.msra.mxu0 %v121
    %217 = vmatmul.bf16.gmra.mxu0 %v151
    %v218 = vpop.f32.mrf.mxu0
    %v219 = vadd.f32 %v52, %v218
    %v220 = vpop.f32.mrf.mxu0
    %v221 = vadd.f32 %v52, %v220
    %222 = vdwg.mxu0
    %223 = vmatpush.bf16.msra.mxu0 0
    %224 = vmatpush.bf16.msra.mxu0 0
    %225 = vmatpush.bf16.msra.mxu0 0
    %226 = vmatpush.bf16.msra.mxu0 0
    %227 = vmatpush.bf16.msra.mxu0 0
    %228 = vmatpush.bf16.msra.mxu0 0
    %229 = vmatpush.bf16.msra.mxu0 %v130
    %230 = vmatpush.bf16.msra.mxu0 %v122
    %231 = vmatmul.bf16.gmra.mxu0 %v151
    %v232 = vpop.f32.mrf.mxu0
    %v233 = vadd.f32 %v53, %v232
    %v234 = vpop.f32.mrf.mxu0
    %v235 = vadd.f32 %v53, %v234
    %236 = vdwg.mxu0
    %237 = vmatpush.bf16.msra.mxu0 0
    %238 = vmatpush.bf16.msra.mxu0 0
    %239 = vmatpush.bf16.msra.mxu0 0
    %240 = vmatpush.bf16.msra.mxu0 0
    %241 = vmatpush.bf16.msra.mxu0 0
    %242 = vmatpush.bf16.msra.mxu0 0
    %243 = vmatpush.bf16.msra.mxu0 %v131
    %244 = vmatpush.bf16.msra.mxu0 %v123
    %245 = vmatmul.bf16.gmra.mxu0 %v151
    %v246 = vpop.f32.mrf.mxu0
    %v247 = vadd.f32 %v54, %v246
    %v248 = vpop.f32.mrf.mxu0
    %v249 = vadd.f32 %v54, %v248
    %250 = vdwg.mxu0
    %251 = vmatpush.bf16.msra.mxu0 0
    %252 = vmatpush.bf16.msra.mxu0 0
    %253 = vmatpush.bf16.msra.mxu0 0
    %254 = vmatpush.bf16.msra.mxu0 0
    %255 = vmatpush.bf16.msra.mxu0 0
    %256 = vmatpush.bf16.msra.mxu0 0
    %257 = vmatpush.bf16.msra.mxu0 %v132
    %258 = vmatpush.bf16.msra.mxu0 %v124
    %259 = vmatmul.bf16.gmra.mxu0 %v151
    %v260 = vpop.f32.mrf.mxu0
    %v261 = vadd.f32 %v55, %v260
    %v262 = vpop.f32.mrf.mxu0
    %v263 = vadd.f32 %v55, %v262
    %264 = vdwg.mxu0
    %v265 = vmax.f32 %v163, 0.0
    %v266 = vmax.f32 %v177, 0.0
    %v267 = vmax.f32 %v191, 0.0
    %v268 = vmax.f32 %v205, 0.0
    %v269 = vmax.f32 %v219, 0.0
    %v270 = vmax.f32 %v233, 0.0
    %v271 = vmax.f32 %v247, 0.0
    %v272 = vmax.f32 %v261, 0.0
    %v273 = vmax.f32 %v165, 0.0
    %v274 = vmax.f32 %v179, 0.0
    %v275 = vmax.f32 %v193, 0.0
    %v276 = vmax.f32 %v207, 0.0
    %v277 = vmax.f32 %v221, 0.0
    %v278 = vmax.f32 %v235, 0.0
    %v279 = vmax.f32 %v249, 0.0
    %v280 = vmax.f32 %v263, 0.0
    %v281 = vpack.c.bf16 %v266, %v265
    %v282 = vpack.c.bf16 %v268, %v267
    %v283 = vpack.c.bf16 %v270, %v269
    %v284 = vpack.c.bf16 %v272, %v271
    %v285 = vpack.c.bf16 %v274, %v273
    %v286 = vpack.c.bf16 %v276, %v275
    %v287 = vpack.c.bf16 %v278, %v277
    %v288 = vpack.c.bf16 %v280, %v279
    %289 = vst [vmem:[#allocation2] sm:$0xff] %v281
    %290 = vst [vmem:[#allocation2 + $0x8] sm:$0xff] %v282
    %291 = vst [vmem:[#allocation2 + $0x10] sm:$0xff] %v283
    %292 = vst [vmem:[#allocation2 + $0x18] sm:$0xff] %v284
    %293 = vst [vmem:[#allocation2 + $0x20] sm:$0xff] %v285
    %294 = vst [vmem:[#allocation2 + $0x28] sm:$0xff] %v286
    %295 = vst [vmem:[#allocation2 + $0x30] sm:$0xff] %v287
    %296 = vst [vmem:[#allocation2 + $0x38] sm:$0xff] %v288
    %vm297 = vcmask 7168
    %298 = vst.msk [vmem:[#allocation3] sm:$0xff] %vm297, -1e+30
    %299 = vst.msk [vmem:[#allocation3 + $0x8] sm:$0xff] %vm297, -1e+30
    %300 = vst.msk [vmem:[#allocation4] sm:$0xff] %vm297, 0.0
    %301 = vst.msk [vmem:[#allocation4 + $0x8] sm:$0xff] %vm297, 0.0
    %302 = vst.msk [vmem:[#allocation5] sm:$0xff] %vm297, 0.0
    %303 = vst.msk [vmem:[#allocation5 + $0x8] sm:$0xff] %vm297, 0.0
  $region29: #{sparql_parser_loss.7} parent=0 // pred_fallthru
    _
  %v304 = vld [vmem:[#allocation2] sm:$0xff]
  %v305 = vld [vmem:[#allocation2 + $0x8] sm:$0xff]
  %v306 = vld [vmem:[#allocation2 + $0x10] sm:$0xff]
  %v307 = vld [vmem:[#allocation2 + $0x18] sm:$0xff]
  %v308 = vld [vmem:[#allocation2 + $0x20] sm:$0xff]
  %v309 = vld [vmem:[#allocation2 + $0x28] sm:$0xff]
  %v310 = vld [vmem:[#allocation2 + $0x30] sm:$0xff]
  %v311 = vld [vmem:[#allocation2 + $0x38] sm:$0xff]
  %v312 = vld [vmem:[%s4] sm:$0xf]
  %v313 = vld [vmem:[%s4 + $0x4] sm:$0xf]
  %v314 = vld [vmem:[%s4 + $0x8] sm:$0xf]
  %v315 = vld [vmem:[%s4 + $0xc] sm:$0xf]
  %v316 = vld [vmem:[%s4 + $0x10] sm:$0xf]
  %v317 = vld [vmem:[%s4 + $0x14] sm:$0xf]
  %v318 = vld [vmem:[%s4 + $0x18] sm:$0xf]
  %v319 = vld [vmem:[%s4 + $0x1c] sm:$0xf]
  %v320 = vld [vmem:[%s4 + $0x20] sm:$0xf]
  %v321 = vld [vmem:[%s4 + $0x24] sm:$0xf]
  %v322 = vld [vmem:[%s4 + $0x28] sm:$0xf]
  %v323 = vld [vmem:[%s4 + $0x2c] sm:$0xf]
  %v324 = vld [vmem:[%s4 + $0x30] sm:$0xf]
  %v325 = vld [vmem:[%s4 + $0x34] sm:$0xf]
  %v326 = vld [vmem:[%s4 + $0x38] sm:$0xf]
  %v327 = vld [vmem:[%s4 + $0x3c] sm:$0xf]
  %v328 = vld [vmem:[%s4 + $0x40] sm:$0xf]
  %v329 = vld [vmem:[%s4 + $0x44] sm:$0xf]
  %v330 = vld [vmem:[%s4 + $0x48] sm:$0xf]
  %v331 = vld [vmem:[%s4 + $0x4c] sm:$0xf]
  %v332 = vld [vmem:[%s4 + $0x50] sm:$0xf]
  %v333 = vld [vmem:[%s4 + $0x54] sm:$0xf]
  %v334 = vld [vmem:[%s4 + $0x58] sm:$0xf]
  %v335 = vld [vmem:[%s4 + $0x5c] sm:$0xf]
  %v336 = vld [vmem:[%s4 + $0x60] sm:$0xf]
  %v337 = vld [vmem:[%s4 + $0x64] sm:$0xf]
  %v338 = vld [vmem:[%s4 + $0x68] sm:$0xf]
  %v339 = vld [vmem:[%s4 + $0x6c] sm:$0xf]
  %v340 = vld [vmem:[%s4 + $0x70] sm:$0xf]
  %v341 = vld [vmem:[%s4 + $0x74] sm:$0xf]
  %v342 = vld [vmem:[%s4 + $0x78] sm:$0xf]
  %v343 = vld [vmem:[%s4 + $0x7c] sm:$0xf]
  %v344 = vld [vmem:[%s4 + $0x80] sm:$0xf]
  %v345 = vld [vmem:[%s4 + $0x84] sm:$0xf]
  %v346 = vld [vmem:[%s4 + $0x88] sm:$0xf]
  %v347 = vld [vmem:[%s4 + $0x8c] sm:$0xf]
  %v348 = vld [vmem:[%s4 + $0x90] sm:$0xf]
  %v349 = vld [vmem:[%s4 + $0x94] sm:$0xf]
  %v350 = vld [vmem:[%s4 + $0x98] sm:$0xf]
  %v351 = vld [vmem:[%s4 + $0x9c] sm:$0xf]
  %v352 = vld [vmem:[%s4 + $0xa0] sm:$0xf]
  %v353 = vld [vmem:[%s4 + $0xa4] sm:$0xf]
  %v354 = vld [vmem:[%s4 + $0xa8] sm:$0xf]
  %v355 = vld [vmem:[%s4 + $0xac] sm:$0xf]
  %v356 = vld [vmem:[%s4 + $0xb0] sm:$0xf]
  %v357 = vld [vmem:[%s4 + $0xb4] sm:$0xf]
  %v358 = vld [vmem:[%s4 + $0xb8] sm:$0xf]
  %v359 = vld [vmem:[%s4 + $0xbc] sm:$0xf]
  %v360 = vld [vmem:[%s4 + $0xc0] sm:$0xf]
  %v361 = vld [vmem:[%s4 + $0xc4] sm:$0xf]
  %v362 = vld [vmem:[%s4 + $0xc8] sm:$0xf]
  %v363 = vld [vmem:[%s4 + $0xcc] sm:$0xf]
  %v364 = vld [vmem:[%s4 + $0xd0] sm:$0xf]
  %v365 = vld [vmem:[%s4 + $0xd4] sm:$0xf]
  %v366 = vld [vmem:[%s4 + $0xd8] sm:$0xf]
  %v367 = vld [vmem:[%s4 + $0xdc] sm:$0xf]
  %v368 = vld [vmem:[%s4 + $0xe0] sm:$0xf]
  %v369 = vld [vmem:[%s4 + $0xe4] sm:$0xf]
  %v370 = vld [vmem:[%s4 + $0xe8] sm:$0xf]
  %v371 = vld [vmem:[%s4 + $0xec] sm:$0xf]
  %v372 = vld [vmem:[%s4 + $0xf0] sm:$0xf]
  %v373 = vld [vmem:[%s4 + $0xf4] sm:$0xf]
  %v374 = vld [vmem:[%s4 + $0xf8] sm:$0xf]
  %v375 = vld [vmem:[%s4 + $0xfc] sm:$0xf]
  %v376 = vld [vmem:[%s4 + $0x100] sm:$0xf]
  %v377 = vld [vmem:[%s4 + $0x104] sm:$0xf]
  %v378 = vld [vmem:[%s4 + $0x108] sm:$0xf]
  %v379 = vld [vmem:[%s4 + $0x10c] sm:$0xf]
  %v380 = vld [vmem:[%s4 + $0x110] sm:$0xf]
  %v381 = vld [vmem:[%s4 + $0x114] sm:$0xf]
  %v382 = vld [vmem:[%s4 + $0x118] sm:$0xf]
  %v383 = vld [vmem:[%s4 + $0x11c] sm:$0xf]
  %v384 = vld [vmem:[%s4 + $0x120] sm:$0xf]
  %v385 = vld [vmem:[%s4 + $0x124] sm:$0xf]
  %v386 = vld [vmem:[%s4 + $0x128] sm:$0xf]
  %v387 = vld [vmem:[%s4 + $0x12c] sm:$0xf]
  %v388 = vld [vmem:[%s4 + $0x130] sm:$0xf]
  %v389 = vld [vmem:[%s4 + $0x134] sm:$0xf]
  %v390 = vld [vmem:[%s4 + $0x138] sm:$0xf]
  %v391 = vld [vmem:[%s4 + $0x13c] sm:$0xf]
  %v392 = vld [vmem:[%s4 + $0x140] sm:$0xf]
  %v393 = vld [vmem:[%s4 + $0x144] sm:$0xf]
  %v394 = vld [vmem:[%s4 + $0x148] sm:$0xf]
  %v395 = vld [vmem:[%s4 + $0x14c] sm:$0xf]
  %v396 = vld [vmem:[%s4 + $0x150] sm:$0xf]
  %v397 = vld [vmem:[%s4 + $0x154] sm:$0xf]
  %v398 = vld [vmem:[%s4 + $0x158] sm:$0xf]
  %v399 = vld [vmem:[%s4 + $0x15c] sm:$0xf]
  %v400 = vld [vmem:[%s4 + $0x160] sm:$0xf]
  %v401 = vld [vmem:[%s4 + $0x164] sm:$0xf]
  %v402 = vld [vmem:[%s4 + $0x168] sm:$0xf]
  %v403 = vld [vmem:[%s4 + $0x16c] sm:$0xf]
  %v404 = vld [vmem:[%s4 + $0x170] sm:$0xf]
  %v405 = vld [vmem:[%s4 + $0x174] sm:$0xf]
  %v406 = vld [vmem:[%s4 + $0x178] sm:$0xf]
  %v407 = vld [vmem:[%s4 + $0x17c] sm:$0xf]
  %v408 = vld [vmem:[%s4 + $0x180] sm:$0xf]
  %v409 = vld [vmem:[%s4 + $0x184] sm:$0xf]
  %v410 = vld [vmem:[%s4 + $0x188] sm:$0xf]
  %v411 = vld [vmem:[%s4 + $0x18c] sm:$0xf]
  %v412 = vld [vmem:[%s4 + $0x190] sm:$0xf]
  %v413 = vld [vmem:[%s4 + $0x194] sm:$0xf]
  %v414 = vld [vmem:[%s4 + $0x198] sm:$0xf]
  %v415 = vld [vmem:[%s4 + $0x19c] sm:$0xf]
  %v416 = vld [vmem:[%s4 + $0x1a0] sm:$0xf]
  %v417 = vld [vmem:[%s4 + $0x1a4] sm:$0xf]
  %v418 = vld [vmem:[%s4 + $0x1a8] sm:$0xf]
  %v419 = vld [vmem:[%s4 + $0x1ac] sm:$0xf]
  %v420 = vld [vmem:[%s4 + $0x1b0] sm:$0xf]
  %v421 = vld [vmem:[%s4 + $0x1b4] sm:$0xf]
  %v422 = vld [vmem:[%s4 + $0x1b8] sm:$0xf]
  %v423 = vld [vmem:[%s4 + $0x1bc] sm:$0xf]
  %v424 = vld [vmem:[%s4 + $0x1c0] sm:$0xf]
  %v425 = vld [vmem:[%s4 + $0x1c4] sm:$0xf]
  %v426 = vld [vmem:[%s4 + $0x1c8] sm:$0xf]
  %v427 = vld [vmem:[%s4 + $0x1cc] sm:$0xf]
  %v428 = vld [vmem:[%s4 + $0x1d0] sm:$0xf]
  %v429 = vld [vmem:[%s4 + $0x1d4] sm:$0xf]
  %v430 = vld [vmem:[%s4 + $0x1d8] sm:$0xf]
  %v431 = vld [vmem:[%s4 + $0x1dc] sm:$0xf]
  %v432 = vld [vmem:[%s4 + $0x1e0] sm:$0xf]
  %v433 = vld [vmem:[%s4 + $0x1e4] sm:$0xf]
  %v434 = vld [vmem:[%s4 + $0x1e8] sm:$0xf]
  %v435 = vld [vmem:[%s4 + $0x1ec] sm:$0xf]
  %v436 = vld [vmem:[%s4 + $0x1f0] sm:$0xf]
  %v437 = vld [vmem:[%s4 + $0x1f4] sm:$0xf]
  %v438 = vld [vmem:[%s4 + $0x1f8] sm:$0xf]
  %v439 = vld [vmem:[%s4 + $0x1fc] sm:$0xf]
  %v440 = vld [vmem:[%s5] sm:$0x1]
  %v442 = vperm.slane %v440, 0
  %v452 = vunpack.c.l.b16 %v304
  %v453 = vunpack.c.h.b16 %v304
  %v454 = vunpack.c.l.b16 %v305
  %v455 = vunpack.c.h.b16 %v305
  %v456 = vunpack.c.l.b16 %v306
  %v457 = vunpack.c.h.b16 %v306
  %v458 = vunpack.c.l.b16 %v307
  %v459 = vunpack.c.h.b16 %v307
  %v460 = vunpack.c.l.b16 %v308
  %v461 = vunpack.c.h.b16 %v308
  %v462 = vunpack.c.l.b16 %v309
  %v463 = vunpack.c.h.b16 %v309
  %v464 = vunpack.c.l.b16 %v310
  %v465 = vunpack.c.h.b16 %v310
  %v466 = vunpack.c.l.b16 %v311
  %v467 = vunpack.c.h.b16 %v311
  %v468 = vpack.c.b16 %v460, %v452
  %v469 = vpack.c.b16 %v461, %v453
  %v470 = vpack.c.b16 %v462, %v454
  %v471 = vpack.c.b16 %v463, %v455
  %v472 = vpack.c.b16 %v464, %v456
  %v473 = vpack.c.b16 %v465, %v457
  %v474 = vpack.c.b16 %v466, %v458
  %v475 = vpack.c.b16 %v467, %v459
  %v612 = vunpack.c.l.b16 %v312
  %v613 = vunpack.c.l.b16 %v313
  %v614 = vunpack.c.l.b16 %v314
  %v615 = vunpack.c.l.b16 %v315
  %v616 = vunpack.c.l.b16 %v316
  %v617 = vunpack.c.l.b16 %v317
  %v618 = vunpack.c.l.b16 %v318
  %v619 = vunpack.c.l.b16 %v319
  %v620 = vunpack.c.l.b16 %v320
  %v621 = vunpack.c.l.b16 %v321
  %v622 = vunpack.c.l.b16 %v322
  %v623 = vunpack.c.l.b16 %v323
  %v624 = vunpack.c.l.b16 %v324
  %v625 = vunpack.c.l.b16 %v325
  %v626 = vunpack.c.l.b16 %v326
  %v627 = vunpack.c.l.b16 %v327
  %v628 = vunpack.c.l.b16 %v328
  %v629 = vunpack.c.l.b16 %v329
  %v630 = vunpack.c.l.b16 %v330
  %v631 = vunpack.c.l.b16 %v331
  %v632 = vunpack.c.l.b16 %v332
  %v633 = vunpack.c.l.b16 %v333
  %v634 = vunpack.c.l.b16 %v334
  %v635 = vunpack.c.l.b16 %v335
  %v636 = vunpack.c.l.b16 %v336
  %v637 = vunpack.c.l.b16 %v337
  %v638 = vunpack.c.l.b16 %v338
  %v639 = vunpack.c.l.b16 %v339
  %v640 = vunpack.c.l.b16 %v340
  %v641 = vunpack.c.l.b16 %v341
  %v642 = vunpack.c.l.b16 %v342
  %v643 = vunpack.c.l.b16 %v343
  %v644 = vunpack.c.l.b16 %v344
  %v645 = vunpack.c.l.b16 %v345
  %v646 = vunpack.c.l.b16 %v346
  %v647 = vunpack.c.l.b16 %v347
  %v648 = vunpack.c.l.b16 %v348
  %v649 = vunpack.c.l.b16 %v349
  %v650 = vunpack.c.l.b16 %v350
  %v651 = vunpack.c.l.b16 %v351
  %v652 = vunpack.c.l.b16 %v352
  %v653 = vunpack.c.l.b16 %v353
  %v654 = vunpack.c.l.b16 %v354
  %v655 = vunpack.c.l.b16 %v355
  %v656 = vunpack.c.l.b16 %v356
  %v657 = vunpack.c.l.b16 %v357
  %v658 = vunpack.c.l.b16 %v358
  %v659 = vunpack.c.l.b16 %v359
  %v660 = vunpack.c.l.b16 %v360
  %v661 = vunpack.c.l.b16 %v361
  %v662 = vunpack.c.l.b16 %v362
  %v663 = vunpack.c.l.b16 %v363
  %v664 = vunpack.c.l.b16 %v364
  %v665 = vunpack.c.l.b16 %v365
  %v666 = vunpack.c.l.b16 %v366
  %v667 = vunpack.c.l.b16 %v367
  %v668 = vunpack.c.l.b16 %v368
  %v669 = vunpack.c.l.b16 %v369
  %v670 = vunpack.c.l.b16 %v370
  %v671 = vunpack.c.l.b16 %v371
  %v672 = vunpack.c.l.b16 %v372
  %v673 = vunpack.c.l.b16 %v373
  %v674 = vunpack.c.l.b16 %v374
  %v675 = vunpack.c.l.b16 %v375
  %v676 = vunpack.c.l.b16 %v376
  %v677 = vunpack.c.l.b16 %v377
  %v678 = vunpack.c.l.b16 %v378
  %v679 = vunpack.c.l.b16 %v379
  %v680 = vunpack.c.l.b16 %v380
  %v681 = vunpack.c.l.b16 %v381
  %v682 = vunpack.c.l.b16 %v382
  %v683 = vunpack.c.l.b16 %v383
  %v684 = vunpack.c.l.b16 %v384
  %v685 = vunpack.c.l.b16 %v385
  %v686 = vunpack.c.l.b16 %v386
  %v687 = vunpack.c.l.b16 %v387
  %v688 = vunpack.c.l.b16 %v388
  %v689 = vunpack.c.l.b16 %v389
  %v690 = vunpack.c.l.b16 %v390
  %v691 = vunpack.c.l.b16 %v391
  %v692 = vunpack.c.l.b16 %v392
  %v693 = vunpack.c.l.b16 %v393
  %v694 = vunpack.c.l.b16 %v394
  %v695 = vunpack.c.l.b16 %v395
  %v696 = vunpack.c.l.b16 %v396
  %v697 = vunpack.c.l.b16 %v397
  %v698 = vunpack.c.l.b16 %v398
  %v699 = vunpack.c.l.b16 %v399
  %v700 = vunpack.c.l.b16 %v400
  %v701 = vunpack.c.l.b16 %v401
  %v702 = vunpack.c.l.b16 %v402
  %v703 = vunpack.c.l.b16 %v403
  %v704 = vunpack.c.l.b16 %v404
  %v705 = vunpack.c.l.b16 %v405
  %v706 = vunpack.c.l.b16 %v406
  %v707 = vunpack.c.l.b16 %v407
  %v708 = vunpack.c.l.b16 %v408
  %v709 = vunpack.c.l.b16 %v409
  %v710 = vunpack.c.l.b16 %v410
  %v711 = vunpack.c.l.b16 %v411
  %v712 = vunpack.c.l.b16 %v412
  %v713 = vunpack.c.l.b16 %v413
  %v714 = vunpack.c.l.b16 %v414
  %v715 = vunpack.c.l.b16 %v415
  %v716 = vunpack.c.l.b16 %v416
  %v717 = vunpack.c.l.b16 %v417
  %v718 = vunpack.c.l.b16 %v418
  %v719 = vunpack.c.l.b16 %v419
  %v720 = vunpack.c.l.b16 %v420
  %v721 = vunpack.c.l.b16 %v421
  %v722 = vunpack.c.l.b16 %v422
  %v723 = vunpack.c.l.b16 %v423
  %v724 = vunpack.c.l.b16 %v424
  %v725 = vunpack.c.l.b16 %v425
  %v726 = vunpack.c.l.b16 %v426
  %v727 = vunpack.c.l.b16 %v427
  %v728 = vunpack.c.l.b16 %v428
  %v729 = vunpack.c.l.b16 %v429
  %v730 = vunpack.c.l.b16 %v430
  %v731 = vunpack.c.l.b16 %v431
  %v732 = vunpack.c.l.b16 %v432
  %v733 = vunpack.c.l.b16 %v433
  %v734 = vunpack.c.l.b16 %v434
  %v735 = vunpack.c.l.b16 %v435
  %v736 = vunpack.c.l.b16 %v436
  %v737 = vunpack.c.l.b16 %v437
  %v738 = vunpack.c.l.b16 %v438
  %v739 = vunpack.c.l.b16 %v439
  %v740 = vpack.c.b16 %v613, %v612
  %v741 = vpack.c.b16 %v615, %v614
  %v742 = vpack.c.b16 %v617, %v616
  %v743 = vpack.c.b16 %v619, %v618
  %v744 = vpack.c.b16 %v621, %v620
  %v745 = vpack.c.b16 %v623, %v622
  %v746 = vpack.c.b16 %v625, %v624
  %v747 = vpack.c.b16 %v627, %v626
  %v748 = vpack.c.b16 %v629, %v628
  %v749 = vpack.c.b16 %v631, %v630
  %v750 = vpack.c.b16 %v633, %v632
  %v751 = vpack.c.b16 %v635, %v634
  %v752 = vpack.c.b16 %v637, %v636
  %v753 = vpack.c.b16 %v639, %v638
  %v754 = vpack.c.b16 %v641, %v640
  %v755 = vpack.c.b16 %v643, %v642
  %v756 = vpack.c.b16 %v645, %v644
  %v757 = vpack.c.b16 %v647, %v646
  %v758 = vpack.c.b16 %v649, %v648
  %v759 = vpack.c.b16 %v651, %v650
  %v760 = vpack.c.b16 %v653, %v652
  %v761 = vpack.c.b16 %v655, %v654
  %v762 = vpack.c.b16 %v657, %v656
  %v763 = vpack.c.b16 %v659, %v658
  %v764 = vpack.c.b16 %v661, %v660
  %v765 = vpack.c.b16 %v663, %v662
  %v766 = vpack.c.b16 %v665, %v664
  %v767 = vpack.c.b16 %v667, %v666
  %v768 = vpack.c.b16 %v669, %v668
  %v769 = vpack.c.b16 %v671, %v670
  %v770 = vpack.c.b16 %v673, %v672
  %v771 = vpack.c.b16 %v675, %v674
  %v772 = vpack.c.b16 %v677, %v676
  %v773 = vpack.c.b16 %v679, %v678
  %v774 = vpack.c.b16 %v681, %v680
  %v775 = vpack.c.b16 %v683, %v682
  %v776 = vpack.c.b16 %v685, %v684
  %v777 = vpack.c.b16 %v687, %v686
  %v778 = vpack.c.b16 %v689, %v688
  %v779 = vpack.c.b16 %v691, %v690
  %v780 = vpack.c.b16 %v693, %v692
  %v781 = vpack.c.b16 %v695, %v694
  %v782 = vpack.c.b16 %v697, %v696
  %v783 = vpack.c.b16 %v699, %v698
  %v784 = vpack.c.b16 %v701, %v700
  %v785 = vpack.c.b16 %v703, %v702
  %v786 = vpack.c.b16 %v705, %v704
  %v787 = vpack.c.b16 %v707, %v706
  %v788 = vpack.c.b16 %v709, %v708
  %v789 = vpack.c.b16 %v711, %v710
  %v790 = vpack.c.b16 %v713, %v712
  %v791 = vpack.c.b16 %v715, %v714
  %v792 = vpack.c.b16 %v717, %v716
  %v793 = vpack.c.b16 %v719, %v718
  %v794 = vpack.c.b16 %v721, %v720
  %v795 = vpack.c.b16 %v723, %v722
  %v796 = vpack.c.b16 %v725, %v724
  %v797 = vpack.c.b16 %v727, %v726
  %v798 = vpack.c.b16 %v729, %v728
  %v799 = vpack.c.b16 %v731, %v730
  %v800 = vpack.c.b16 %v733, %v732
  %v801 = vpack.c.b16 %v735, %v734
  %v802 = vpack.c.b16 %v737, %v736
  %v803 = vpack.c.b16 %v739, %v738
  %868 = vmatpush.bf16.msra.mxu0 %v747
  %869 = vmatpush.bf16.msra.mxu0 %v746
  %870 = vmatpush.bf16.msra.mxu0 %v745
  %871 = vmatpush.bf16.msra.mxu0 %v744
  %872 = vmatpush.bf16.msra.mxu0 %v743
  %873 = vmatpush.bf16.msra.mxu0 %v742
  %874 = vmatpush.bf16.msra.mxu0 %v741
  %875 = vmatpush.bf16.msra.mxu0 %v740
  %876 = vmatmul.bf16.gmra.mxu0 %v468
  %v877 = vpop.f32.mrf.mxu0
  %v878 = vadd.f32 %v442, %v877
  %v879 = vpop.f32.mrf.mxu0
  %v880 = vadd.f32 %v442, %v879
  %881 = vdwg.mxu0
  %882 = vmatpush.bf16.msra.mxu0 %v755
  %883 = vmatpush.bf16.msra.mxu0 %v754
  %884 = vmatpush.bf16.msra.mxu0 %v753
  %885 = vmatpush.bf16.msra.mxu0 %v752
  %886 = vmatpush.bf16.msra.mxu0 %v751
  %887 = vmatpush.bf16.msra.mxu0 %v750
  %888 = vmatpush.bf16.msra.mxu0 %v749
  %889 = vmatpush.bf16.msra.mxu0 %v748
  %890 = vmatmul.bf16.gmra.mxu0 %v469
  %v891 = vpop.f32.mrf.mxu0
  %v892 = vadd.f32 %v878, %v891
  %v893 = vpop.f32.mrf.mxu0
  %v894 = vadd.f32 %v880, %v893
  %895 = vdwg.mxu0
  %896 = vmatpush.bf16.msra.mxu0 %v763
  %897 = vmatpush.bf16.msra.mxu0 %v762
  %898 = vmatpush.bf16.msra.mxu0 %v761
  %899 = vmatpush.bf16.msra.mxu0 %v760
  %900 = vmatpush.bf16.msra.mxu0 %v759
  %901 = vmatpush.bf16.msra.mxu0 %v758
  %902 = vmatpush.bf16.msra.mxu0 %v757
  %903 = vmatpush.bf16.msra.mxu0 %v756
  %904 = vmatmul.bf16.gmra.mxu0 %v470
  %v905 = vpop.f32.mrf.mxu0
  %v906 = vadd.f32 %v892, %v905
  %v907 = vpop.f32.mrf.mxu0
  %v908 = vadd.f32 %v894, %v907
  %909 = vdwg.mxu0
  %910 = vmatpush.bf16.msra.mxu0 %v771
  %911 = vmatpush.bf16.msra.mxu0 %v770
  %912 = vmatpush.bf16.msra.mxu0 %v769
  %913 = vmatpush.bf16.msra.mxu0 %v768
  %914 = vmatpush.bf16.msra.mxu0 %v767
  %915 = vmatpush.bf16.msra.mxu0 %v766
  %916 = vmatpush.bf16.msra.mxu0 %v765
  %917 = vmatpush.bf16.msra.mxu0 %v764
  %918 = vmatmul.bf16.gmra.mxu0 %v471
  %v919 = vpop.f32.mrf.mxu0
  %v920 = vadd.f32 %v906, %v919
  %v921 = vpop.f32.mrf.mxu0
  %v922 = vadd.f32 %v908, %v921
  %923 = vdwg.mxu0
  %924 = vmatpush.bf16.msra.mxu0 %v779
  %925 = vmatpush.bf16.msra.mxu0 %v778
  %926 = vmatpush.bf16.msra.mxu0 %v777
  %927 = vmatpush.bf16.msra.mxu0 %v776
  %928 = vmatpush.bf16.msra.mxu0 %v775
  %929 = vmatpush.bf16.msra.mxu0 %v774
  %930 = vmatpush.bf16.msra.mxu0 %v773
  %931 = vmatpush.bf16.msra.mxu0 %v772
  %932 = vmatmul.bf16.gmra.mxu0 %v472
  %v933 = vpop.f32.mrf.mxu0
  %v934 = vadd.f32 %v920, %v933
  %v935 = vpop.f32.mrf.mxu0
  %v936 = vadd.f32 %v922, %v935
  %937 = vdwg.mxu0
  %938 = vmatpush.bf16.msra.mxu0 %v787
  %939 = vmatpush.bf16.msra.mxu0 %v786
  %940 = vmatpush.bf16.msra.mxu0 %v785
  %941 = vmatpush.bf16.msra.mxu0 %v784
  %942 = vmatpush.bf16.msra.mxu0 %v783
  %943 = vmatpush.bf16.msra.mxu0 %v782
  %944 = vmatpush.bf16.msra.mxu0 %v781
  %945 = vmatpush.bf16.msra.mxu0 %v780
  %946 = vmatmul.bf16.gmra.mxu0 %v473
  %v947 = vpop.f32.mrf.mxu0
  %v948 = vadd.f32 %v934, %v947
  %v949 = vpop.f32.mrf.mxu0
  %v950 = vadd.f32 %v936, %v949
  %951 = vdwg.mxu0
  %952 = vmatpush.bf16.msra.mxu0 %v795
  %953 = vmatpush.bf16.msra.mxu0 %v794
  %954 = vmatpush.bf16.msra.mxu0 %v793
  %955 = vmatpush.bf16.msra.mxu0 %v792
  %956 = vmatpush.bf16.msra.mxu0 %v791
  %957 = vmatpush.bf16.msra.mxu0 %v790
  %958 = vmatpush.bf16.msra.mxu0 %v789
  %959 = vmatpush.bf16.msra.mxu0 %v788
  %960 = vmatmul.bf16.gmra.mxu0 %v474
  %v961 = vpop.f32.mrf.mxu0
  %v962 = vadd.f32 %v948, %v961
  %v963 = vpop.f32.mrf.mxu0
  %v964 = vadd.f32 %v950, %v963
  %965 = vdwg.mxu0
  %966 = vmatpush.bf16.msra.mxu0 %v803
  %967 = vmatpush.bf16.msra.mxu0 %v802
  %968 = vmatpush.bf16.msra.mxu0 %v801
  %969 = vmatpush.bf16.msra.mxu0 %v800
  %970 = vmatpush.bf16.msra.mxu0 %v799
  %971 = vmatpush.bf16.msra.mxu0 %v798
  %972 = vmatpush.bf16.msra.mxu0 %v797
  %973 = vmatpush.bf16.msra.mxu0 %v796
  %974 = vmatmul.bf16.gmra.mxu0 %v475
  %v975 = vpop.f32.mrf.mxu0
  %v976 = vadd.f32 %v962, %v975
  %v977 = vpop.f32.mrf.mxu0
  %v978 = vadd.f32 %v964, %v977
  %979 = vdwg.mxu0
  %v980 = vlaneseq
  %v981 = vand.u32 %v980, 127
  %s982 = smul.u32 0, 128
  %v983 = vstv %s982
  %v984 = vadd.s32 %v981, %v983
  %vm985 = vcmp.lt.s32.totalorder %v984, 40
  %v986 = vsel %vm985, %v976, -1e+30
  %v987 = vsel %vm985, %v978, -1e+30
  %v988 = vld [vmem:[#allocation3] sm:$0xff]
  %v989 = vld [vmem:[#allocation3 + $0x8] sm:$0xff]
  %990 = vmax.xlane.f32.xlu0 %v986
  %v991 = vpop.xlane.xlu0 %990
  %992 = vmax.xlane.f32.xlu0 %v987
  %v993 = vpop.xlane.xlu0 %992
  %v994 = vmax.f32 %v988, %v991
  %v995 = vmax.f32 %v989, %v993
  %997 = vset.pattern.permute.xlu0 0
  %998 = vperm.xlu0 %997, %v994
  %v999 = vpop.permute.xlu0 %998
  %1002 = vset.pattern.permute.xlu0 0
  %1003 = vperm.xlu0 %1002, %v995
  %v1004 = vpop.permute.xlu0 %1003
  %v1006 = vsub.f32 %v986, %v999
  %v1007 = vsub.f32 %v987, %v1004
  %v1008 = vmul.f32 %v1006, 1.442695
  %v1009 = vpow.pop %v1008
  %v1010 = vmul.f32 %v1007, 1.442695
  %v1011 = vpow.pop %v1010
  %v1012 = vld [vmem:[#allocation4] sm:$0xff]
  %v1013 = vld [vmem:[#allocation4 + $0x8] sm:$0xff]
  %v1014 = vsub.f32 %v988, %v994
  %v1015 = vsub.f32 %v989, %v995
  %v1016 = vmul.f32 %v1014, 1.442695
  %v1017 = vpow.pop %v1016
  %v1018 = vmul.f32 %v1015, 1.442695
  %v1019 = vpow.pop %v1018
  %v1020 = vmul.f32 %v1012, %v1017
  %v1021 = vmul.f32 %v1013, %v1019
  %1022 = vadd.xlane.f32.xlu0 %v1009
  %v1023 = vpop.xlane.xlu0 %1022
  %1024 = vadd.xlane.f32.xlu0 %v1011
  %v1025 = vpop.xlane.xlu0 %1024
  %v1026 = vadd.f32 %v1020, %v1023
  %v1027 = vadd.f32 %v1021, %v1025
  %vm1028 = vcmask 7168
  %1029 = vst.msk [vmem:[#allocation4] sm:$0xff] %vm1028, %v1026
  %1030 = vst.msk [vmem:[#allocation4 + $0x8] sm:$0xff] %vm1028, %v1027
  %1031 = vst.msk [vmem:[#allocation3] sm:$0xff] %vm1028, %v994
  %1032 = vst.msk [vmem:[#allocation3 + $0x8] sm:$0xff] %vm1028, %v995
  %v1033 = vld [vmem:[#allocation5] sm:$0xff]
  %v1034 = vld [vmem:[#allocation5 + $0x8] sm:$0xff]
  %v1035 = vld [vmem:[%s1] sm:$0xff]
  %v1036 = vld [vmem:[%s1 + $0x8] sm:$0xff]
  %1037 = vset.pattern.permute.xlu0 0
  %1038 = vperm.xlu0 %1037, %v1035
  %v1039 = vpop.permute.xlu0 %1038
  %1040 = vset.pattern.permute.xlu0 0
  %1041 = vperm.xlu0 %1040, %v1036
  %v1042 = vpop.permute.xlu0 %1041
  %vm1043 = vcmp.eq.s32.totalorder %v984, %v1039
  %vm1044 = vcmp.eq.s32.totalorder %v984, %v1042
  %v1045 = vsel %vm1043, %v986, 0.0
  %v1046 = vsel %vm1044, %v987, 0.0
  %1047 = vadd.xlane.f32.xlu0 %v1045
  %v1048 = vpop.xlane.xlu0 %1047
  %1049 = vadd.xlane.f32.xlu0 %v1046
  %v1050 = vpop.xlane.xlu0 %1049
  %v1051 = vadd.f32 %v1033, %v1048
  %v1052 = vadd.f32 %v1034, %v1050
  %1053 = vst.msk [vmem:[#allocation5] sm:$0xff] %vm1028, %v1051
  %1054 = vst.msk [vmem:[#allocation5 + $0x8] sm:$0xff] %vm1028, %v1052
  // Predicated region
  $region30: #{sparql_parser_loss.7} parent=0 // pred_check
    %p1055 = pneg %p24
  $region31: #{sparql_parser_loss.7} parent=0 // pred_check_branch
    %1057 = sbr.rel (%p1055) target = $region33
  $region32: #{sparql_parser_loss.7} parent=0 // pred_region
    %v1058 = vlaneseq
    %v1059 = vshrl.u32 %v1058, 7
    %v1060 = vadd.s32 %v1059, 8
    %s1061 = smul.u32 0, 16
    %v1062 = vstv %s1061
    %v1063 = vadd.s32 %v1059, %v1062
    %v1064 = vadd.s32 %v1060, %v1062
    %v1065 = vld [vmem:[#allocation3] sm:$0xff]
    %v1066 = vld [vmem:[#allocation3 + $0x8] sm:$0xff]
    %v1067 = vld [vmem:[#allocation4] sm:$0xff]
    %v1068 = vld [vmem:[#allocation4 + $0x8] sm:$0xff]
    %v1069 = vlog2.pop %v1067
    %v1070 = vmul.f32 %v1069, 0.6931472
    %v1071 = vlog2.pop %v1068
    %v1072 = vmul.f32 %v1071, 0.6931472
    %v1073 = vadd.f32 %v1065, %v1070
    %v1074 = vadd.f32 %v1066, %v1072
    %vm1075 = vcmp.lt.s32.totalorder %v1063, 14
    %vm1076 = vcmp.lt.s32.totalorder %v1064, 14
    %v1077 = vld [vmem:[#allocation5] sm:$0xff]
    %v1078 = vld [vmem:[#allocation5 + $0x8] sm:$0xff]
    %v1079 = vsub.f32 %v1073, %v1077
    %v1080 = vsub.f32 %v1074, %v1078
    %v1081 = vsel %vm1075, %v1079, 0.0
    %v1082 = vsel %vm1076, %v1080, 0.0
    %v1083 = vsel %vm1028, %v1081, 0.0
    %v1084 = vsel %vm1028, %v1082, 0.0
    %v1085 = vadd.f32 %v1083, %v1084
    %v1086 = vrot.slane %v1085, 4
    %v1087 = vadd.f32 %v1085, %v1086
    %v1088 = vrot.slane %v1087, 2
    %v1089 = vadd.f32 %v1087, %v1088
    %v1090 = vrot.slane %v1089, 1
    %v1091 = vadd.f32 %v1089, %v1090
    %1093 = vset.pattern.permute.xlu0 0
    %1094 = vperm.xlu0 %1093, %v1091
    %v1095 = vpop.permute.xlu0 %1094
    %v1097 = vadd.f32 %v1095, 0.0
    %1098 = vst [vmem:[%s6] sm:$0x1] %v1097
  $region33: #{sparql_parser_loss.7} parent=0 // pred_fallthru
    _
  // Predicated region
  $region34: #{sparql_parser_loss.7} parent=0 // pred_check
    _
  $region35: #{sparql_parser_loss.7} parent=0 // pred_check_branch
    %1100 = sbr.rel (0) target = $region37
  $region36: #{sparql_parser_loss.7} parent=0 // pred_region
    _
  $region37: #{sparql_parser_loss.7} parent=0 // pred_fallthru
    _
  // Predicated region
  $region38: #{sparql_parser_loss.7} parent=0 // pred_check
    _
  $region39: #{sparql_parser_loss.7} parent=0 // pred_check_branch
    %1102 = sbr.rel (0) target = $region41
  $region40: #{sparql_parser_loss.7} parent=0 // pred_region
    _
  $region41: #{sparql_parser_loss.7} parent=0 // pred_fallthru
    _

</llo_original>
